<compile_context>
chip_gen: v5e
topology: v5e:2x2
jax: 0.10.0
libtpu: 0.0.40
codegen_flags: <defaults>
</compile_context>

<pallas_src>
import functools
import math

import jax
import jax.numpy as jnp
from jax.experimental import pallas as pl
from jax.experimental.pallas import tpu as pltpu


# --------------------------------------------------------------------------- #
# Fused per-block kernel.  One grid step == one image.
#   alpha_ref (2,)  SMEM : PReLU slopes [a1, a2]
#   edge_ref  (2,HW) i32 : row 0 = w-index, row 1 = h-index of each flattened pixel
#   x_ref     (C, HW)    : block input, channel-major, lane dim = H*W (f32 or bf16)
#   w1_ref    (C, C)     : Conv2d(C,C,1) weight
#   wbig_ref  (4C, 4C)   : transposed-conv parity decomposition, batched over parities
#   wout_ref  (4Co, 8C)  : [W3|W4] batched over the 4 output parities
#   o_ref     (4Co, HW)  : output parities (ee, eo, oe, oo), bf16
#   buf_ref   (8C, HW)   : VMEM staging slab for the batched dots
# --------------------------------------------------------------------------- #
def _residual_block_kernel(alpha_ref, edge_ref, x_ref, w1_ref, wbig_ref, wout_ref,
                           o_ref, buf_ref, *, H, W, C):
    HW = H * W
    f32 = jnp.float32
    a1 = alpha_ref[0]
    a2 = alpha_ref[1]

    x = x_ref[...].astype(f32)                       # (C, HW)

    idx = edge_ref[...]                              # (2, HW) int32
    w_first = idx[0:1, :] == 0
    w_last = idx[0:1, :] == (W - 1)
    h_first = idx[1:2, :] == 0
    h_last = idx[1:2, :] == (H - 1)

    def prelu(v, a):
        return jnp.where(v > 0, v, a * v)

    def roll_lanes(v, k):
        """result[:, m] = v[:, (m + k) % HW]  (k may be negative, static)."""
        k = k % HW
        if k == 0:
            return v
        if HW % 128 == 0:
            # pltpu.roll follows np.roll semantics: out[m] = in[(m - shift) % HW]
            return pltpu.roll(v, HW - k, axis=1)
        # Fallback for lane dims that are not a multiple of 128.
        return jnp.concatenate([v[:, k:], v[:, :k]], axis=1)

    def mm(w, a):
        return jnp.dot(w, a, preferred_element_type=f32)

    # ---- top branch: 1x1 conv + PReLU, then ConvTranspose2d parity decomposition ----
    y = prelu(mm(w1_ref[...], x), a1)                             # (C, HW)
    # Shifted copies of y (zero beyond the image edge: transposed-conv semantics).
    buf_ref[0:C, :] = y
    buf_ref[C:2 * C, :] = jnp.where(w_last, 0.0, roll_lanes(y, 1))          # y[h, w+1]
    buf_ref[2 * C:3 * C, :] = jnp.where(h_last, 0.0, roll_lanes(y, W))      # y[h+1, w]
    buf_ref[3 * C:4 * C, :] = jnp.where(jnp.logical_or(w_last, h_last),
                                        0.0, roll_lanes(y, W + 1))          # y[h+1, w+1]
    # One batched MXU dot for all four output parities of the transposed conv.
    t = prelu(mm(wbig_ref[...], buf_ref[0:4 * C, :]), a2)         # (4C, HW)
    buf_ref[0:4 * C, :] = t

    # ---- bot branch: bilinear 2x (align_corners=False), clamped shifts --------------
    x_hm = jnp.where(h_first, x, roll_lanes(x, -W))               # x[clamp(h-1), w]
    x_hp = jnp.where(h_last, x, roll_lanes(x, W))                 # x[clamp(h+1), w]

    def wm(v):  # clamped w-1 shift
        return jnp.where(w_first, v, roll_lanes(v, -1))

    def wp(v):  # clamped w+1 shift
        return jnp.where(w_last, v, roll_lanes(v, 1))

    x_wm, x_wp = wm(x), wp(x)
    buf_ref[4 * C:5 * C, :] = 0.5625 * x + 0.1875 * x_hm + 0.1875 * x_wm + 0.0625 * wm(x_hm)
    buf_ref[5 * C:6 * C, :] = 0.5625 * x + 0.1875 * x_hm + 0.1875 * x_wp + 0.0625 * wp(x_hm)
    buf_ref[6 * C:7 * C, :] = 0.5625 * x + 0.1875 * x_hp + 0.1875 * x_wm + 0.0625 * wm(x_hp)
    buf_ref[7 * C:8 * C, :] = 0.5625 * x + 0.1875 * x_hp + 0.1875 * x_wp + 0.0625 * wp(x_hp)

    # ---- W3 on top-parities, W4 on bot-parities, residual add: one batched dot ------
    o = mm(wout_ref[...], buf_ref[...])                           # (4Co, HW)
    o_ref[...] = o.astype(o_ref.dtype)


# ------------------------------ wrapper glue -------------------------------- #
def _pack_params(p):
    """Pack PyTorch-layout weights into the batched matrices used by the kernel."""
    w1 = p["W1"].astype(jnp.float32)                 # (C, C)
    wt = p["Wt"].astype(jnp.float32)                 # (Cin, Cout, 3, 3)
    w3 = p["W3"].astype(jnp.float32)                 # (Co, C)
    w4 = p["W4"].astype(jnp.float32)                 # (Co, C)
    c = w1.shape[0]
    co = w3.shape[0]

    def tr(kh, kw):                                  # -> (Cout, Cin)
        return wt[:, :, kh, kw].T

    z = jnp.zeros((c, c), jnp.float32)
    # ConvTranspose2d(3, stride=2, pad=1, output_padding=1) parity decomposition:
    #   out[2h  ,2w  ] = Wt[1,1]^T y[h,w]
    #   out[2h  ,2w+1] = Wt[1,2]^T y[h,w] + Wt[1,0]^T y[h,w+1]
    #   out[2h+1,2w  ] = Wt[2,1]^T y[h,w] + Wt[0,1]^T y[h+1,w]
    #   out[2h+1,2w+1] = Wt[2,2]^T y[h,w] + Wt[2,0]^T y[h,w+1]
    #                  + Wt[0,2]^T y[h+1,w] + Wt[0,0]^T y[h+1,w+1]
    # Column blocks: [y, y_r, y_d, y_rd]; row blocks: parities [00, 01, 10, 11].
    wbig = jnp.block([
        [tr(1, 1), z,        z,        z],
        [tr(1, 2), tr(1, 0), z,        z],
        [tr(2, 1), z,        tr(0, 1), z],
        [tr(2, 2), tr(2, 0), tr(0, 2), tr(0, 0)],
    ])

    zo = jnp.zeros((co, c), jnp.float32)
    rows = []
    for q in range(4):  # o_p = W3 @ t_p + W4 @ u_p, columns [t00..t11, u00..u11]
        rows.append([w3 if r == q else zo for r in range(4)]
                    + [w4 if r == q else zo for r in range(4)])
    wout = jnp.block(rows)                           # (4Co, 8C)

    alphas = jnp.stack([p["a1"], p["a2"]]).astype(jnp.float32)
    return alphas, w1, wbig, wout


def residual_upsample(x, p):
    """One ResidualUpSample block.  x: (N, C, H, W) -> (N, C//2, 2H, 2W) (bf16)."""
    n, c, h, w = x.shape
    co = c // 2
    hw = h * w

    alphas, w1, wbig, wout = _pack_params(p)
    # Per-pixel (w, h) indices used for in-kernel edge masks (tiny: 2*HW int32).
    wi = jnp.broadcast_to(jnp.arange(w, dtype=jnp.int32)[None, :], (h, w)).reshape(1, hw)
    hi = jnp.broadcast_to(jnp.arange(h, dtype=jnp.int32)[:, None], (h, w)).reshape(1, hw)
    edge = jnp.concatenate([wi, hi], axis=0)         # (2, HW)

    x_flat = x.reshape(n, c, hw)                     # contiguous, no data movement

    out = pl.pallas_call(
        functools.partial(_residual_block_kernel, H=h, W=w, C=c),
        out_shape=jax.ShapeDtypeStruct((n, 4 * co, hw), jnp.bfloat16),
        grid=(n,),
        in_specs=[
            pl.BlockSpec(memory_space=pltpu.MemorySpace.SMEM),     # PReLU slopes
            pl.BlockSpec((2, hw), lambda i: (0, 0)),               # edge indices
            pl.BlockSpec((None, c, hw), lambda i: (i, 0, 0)),      # x (one image)
            pl.BlockSpec((c, c), lambda i: (0, 0)),                # W1
            pl.BlockSpec((4 * c, 4 * c), lambda i: (0, 0)),        # Wbig
            pl.BlockSpec((4 * co, 8 * c), lambda i: (0, 0)),       # Wout
        ],
        out_specs=pl.BlockSpec((None, 4 * co, hw), lambda i: (i, 0, 0)),
        scratch_shapes=[pltpu.VMEM((8 * c, hw), jnp.float32)],
        compiler_params=pltpu.CompilerParams(
            dimension_semantics=("parallel",)),
    )(alphas, edge, x_flat, w1, wbig, wout)

    # Interleave the four output parities: (N, 2(a), 2(b), Co, H, W) -> (N, Co, 2H, 2W).
    o = out.reshape(n, 2, 2, co, h, w)
    return jnp.transpose(o, (0, 3, 4, 1, 5, 2)).reshape(n, co, 2 * h, 2 * w)


def upsample_forward(x, params_list):
    for p in params_list:
        x = residual_upsample(x, p)
    return x.astype(jnp.float32)


# --------------------------- plain-JAX reference (NCHW) --------------------- #
def _prelu(v, a):
    return jnp.where(v > 0, v, a * v)


def _conv1x1_ref(x, w):  # x: (N, C, H, W), w: (Cout, Cin)
    return jnp.einsum("oc,nchw->nohw", w, x, precision=jax.lax.Precision.HIGHEST)


def _conv_transpose_ref(x, wt):
    """ConvTranspose2d(k=3, stride=2, padding=1, output_padding=1, bias=False)."""
    rhs = jnp.transpose(jnp.flip(wt, axis=(2, 3)), (1, 0, 2, 3))  # (Cout, Cin, kh, kw)
    return jax.lax.conv_general_dilated(
        x, rhs, window_strides=(1, 1), padding=[(1, 2), (1, 2)],
        lhs_dilation=(2, 2), dimension_numbers=("NCHW", "OIHW", "NCHW"),
        precision=jax.lax.Precision.HIGHEST)


def _bilinear_up2_ref(x):
    """nn.Upsample(scale_factor=2, mode='bilinear', align_corners=False), NCHW."""
    n, c, h, w = x.shape

    def up(z, axis, size):
        lo = jnp.maximum(jnp.arange(size) - 1, 0)
        hi = jnp.minimum(jnp.arange(size) + 1, size - 1)
        even = 0.25 * jnp.take(z, lo, axis=axis) + 0.75 * z
        odd = 0.75 * z + 0.25 * jnp.take(z, hi, axis=axis)
        return even, odd

    eh, oh = up(x, 2, h)
    zh = jnp.stack([eh, oh], axis=3).reshape(n, c, 2 * h, w)
    ew, ow = up(zh, 3, w)
    return jnp.stack([ew, ow], axis=4).reshape(n, c, 2 * h, 2 * w)


def residual_upsample_ref(x, p):
    y = _prelu(_conv1x1_ref(x, p["W1"]), p["a1"])
    y = _prelu(_conv_transpose_ref(y, p["Wt"]), p["a2"])
    top = _conv1x1_ref(y, p["W3"])
    bot = _conv1x1_ref(_bilinear_up2_ref(x), p["W4"])
    return top + bot


def upsample_ref(x, params_list):
    for p in params_list:
        x = residual_upsample_ref(x, p)
    return x


# ------------------------------- parameters --------------------------------- #
def init_residual_params(key, c):
    """Synthetic parameters with PyTorch layouts (bias=False, as in the module)."""
    k1, k2, k3, k4 = jax.random.split(key, 4)
    co = c // 2
    return dict(
        W1=jax.random.normal(k1, (c, c), jnp.float32) * 0.1,        # Conv2d(C,C,1)   (Cout,Cin)
        a1=jnp.float32(0.25),                                        # nn.PReLU() default slope
        Wt=jax.random.normal(k2, (c, c, 3, 3), jnp.float32) * 0.1,   # ConvTranspose2d (Cin,Cout,kh,kw)
        a2=jnp.float32(0.25),
        W3=jax.random.normal(k3, (co, c), jnp.float32) * 0.1,        # Conv2d(C,C//2,1) (Cout,Cin)
        W4=jax.random.normal(k4, (co, c), jnp.float32) * 0.1,        # Conv2d(C,C//2,1) (Cout,Cin)
    )


if __name__ == "__main__":
    key = jax.random.PRNGKey(0)
    kx, kp = jax.random.split(key)

    n, c, h, w = 2, 8, 16, 16          # NCHW, as the PyTorch module expects
    scale_factor = 4
    n_blocks = int(math.log2(scale_factor))   # UpSample stacks log2(scale) ResidualUpSample blocks

    x = jax.random.normal(kx, (n, c, h, w), jnp.float32)

    params_list = []
    keys = jax.random.split(kp, n_blocks)
    ci = c
    for i in range(n_blocks):
        params_list.append(init_residual_params(keys[i], ci))
        ci //= 2                       # channels halve each block

    out = jax.block_until_ready(jax.jit(upsample_forward)(x, params_list))
    ref = jax.block_until_ready(jax.jit(upsample_ref)(x, params_list))

    expected = (n, c // (2 ** n_blocks), h * scale_factor, w * scale_factor)
    assert out.shape == expected, (out.shape, expected)
    assert jnp.all(jnp.isfinite(out))
    # Tolerance covers bf16 activation storage between blocks plus MXU-vs-HIGHEST
    # accumulation differences; real structural bugs produce O(1) errors.
    err = float(jnp.max(jnp.abs(out - ref)))
    assert jnp.allclose(out, ref, rtol=3e-2, atol=1.5e-2), err
    print("KERNEL_OK")
</pallas_src>

<mosaic_0001>
module attributes {stable_mosaic.version = 11 : i64} {
  func.func @_residual_block_kernel(%arg0: i32, %arg1: memref<2xf32, #tpu.memory_space<smem>>, %arg2: memref<2x256xi32, #tpu.memory_space<vmem>>, %arg3: memref<1x8x256xf32, #tpu.memory_space<vmem>>, %arg4: memref<8x8xf32, #tpu.memory_space<vmem>>, %arg5: memref<32x32xf32, #tpu.memory_space<vmem>>, %arg6: memref<16x64xf32, #tpu.memory_space<vmem>>, %arg7: memref<1x16x256xbf16, #tpu.memory_space<vmem>>, %arg8: memref<64x256xf32, #tpu.memory_space<vmem>>) attributes {dimension_semantics = [#tpu.dimension_semantics<parallel>], iteration_bounds = array<i64: 2>, scalar_prefetch = 0 : i64, scratch_operands = 1 : i64, tpu.core_type = #tpu.core_type<tc>, window_params = [{transform_indices = @transform_0, window_bounds = array<i64: 2>}, {pipeline_mode = #tpu.pipeline_mode<synchronous>, transform_indices = @transform_1, window_bounds = array<i64: 2, 256>}, {transform_indices = @transform_2, window_bounds = array<i64: 1, 8, 256>}, {pipeline_mode = #tpu.pipeline_mode<synchronous>, transform_indices = @transform_3, window_bounds = array<i64: 8, 8>}, {pipeline_mode = #tpu.pipeline_mode<synchronous>, transform_indices = @transform_4, window_bounds = array<i64: 32, 32>}, {pipeline_mode = #tpu.pipeline_mode<synchronous>, transform_indices = @transform_5, window_bounds = array<i64: 16, 64>}, {transform_indices = @transform_6, window_bounds = array<i64: 1, 16, 256>}]} {
    %c0 = arith.constant 0 : index
    %0 = memref.load %arg1[%c0] : memref<2xf32, #tpu.memory_space<smem>>
    %c1 = arith.constant 1 : index
    %1 = memref.load %arg1[%c1] : memref<2xf32, #tpu.memory_space<smem>>
    %c0_0 = arith.constant 0 : index
    %c0_1 = arith.constant 0 : index
    %c0_2 = arith.constant 0 : index
    %2 = vector.load %arg3[%c0_0, %c0_1, %c0_2] : memref<1x8x256xf32, #tpu.memory_space<vmem>>, vector<1x8x256xf32>
    %3 = vector.shape_cast %2 : vector<1x8x256xf32> to vector<8x256xf32>
    %c0_3 = arith.constant 0 : index
    %c0_4 = arith.constant 0 : index
    %4 = vector.load %arg2[%c0_3, %c0_4] : memref<2x256xi32, #tpu.memory_space<vmem>>, vector<2x256xi32>
    %5 = vector.extract_strided_slice %4 {offsets = [0, 0], sizes = [1, 256], strides = [1, 1]} : vector<2x256xi32> to vector<1x256xi32>
    %c0_i32 = arith.constant 0 : i32
    %6 = vector.broadcast %c0_i32 : i32 to vector<1x256xi32>
    %7 = arith.cmpi eq, %5, %6 : vector<1x256xi32>
    %8 = vector.extract_strided_slice %4 {offsets = [0, 0], sizes = [1, 256], strides = [1, 1]} : vector<2x256xi32> to vector<1x256xi32>
    %c15_i32 = arith.constant 15 : i32
    %9 = vector.broadcast %c15_i32 : i32 to vector<1x256xi32>
    %10 = arith.cmpi eq, %8, %9 : vector<1x256xi32>
    %11 = vector.extract_strided_slice %4 {offsets = [1, 0], sizes = [1, 256], strides = [1, 1]} : vector<2x256xi32> to vector<1x256xi32>
    %c0_i32_5 = arith.constant 0 : i32
    %12 = vector.broadcast %c0_i32_5 : i32 to vector<1x256xi32>
    %13 = arith.cmpi eq, %11, %12 : vector<1x256xi32>
    %14 = vector.extract_strided_slice %4 {offsets = [1, 0], sizes = [1, 256], strides = [1, 1]} : vector<2x256xi32> to vector<1x256xi32>
    %c15_i32_6 = arith.constant 15 : i32
    %15 = vector.broadcast %c15_i32_6 : i32 to vector<1x256xi32>
    %16 = arith.cmpi eq, %14, %15 : vector<1x256xi32>
    %c0_7 = arith.constant 0 : index
    %c0_8 = arith.constant 0 : index
    %17 = vector.load %arg4[%c0_7, %c0_8] : memref<8x8xf32, #tpu.memory_space<vmem>>, vector<8x8xf32>
    %cst = arith.constant dense<0.000000e+00> : vector<8x256xf32>
    %18 = tpu.matmul %17, %3, %cst {dimension_numbers = #tpu.dot_dimension_numbers<[1], [0], [0], [1], [0, 0, 1, 1], [], []>} : vector<8x8xf32>, vector<8x256xf32>, vector<8x256xf32> -> vector<8x256xf32>
    %cst_9 = arith.constant 0.000000e+00 : f32
    %19 = vector.broadcast %cst_9 : f32 to vector<8x256xf32>
    %20 = arith.cmpf ogt, %18, %19 : vector<8x256xf32>
    %21 = vector.broadcast %0 : f32 to vector<8x256xf32>
    %22 = arith.mulf %21, %18 : vector<8x256xf32>
    %23 = arith.select %20, %18, %22 : vector<8x256xi1>, vector<8x256xf32>
    %c0_10 = arith.constant 0 : index
    %c0_11 = arith.constant 0 : index
    %24 = vector.load %arg8[%c0_10, %c0_11] : memref<64x256xf32, #tpu.memory_space<vmem>>, vector<8x256xf32>
    tpu.vector_store %arg8[%c0_10, %c0_11], %23 {strides = array<i32>} : memref<64x256xf32, #tpu.memory_space<vmem>>, vector<8x256xf32>,
    %c255_i32 = arith.constant 255 : i32
    %25 = tpu.dynamic_rotate %23 by %c255_i32 dim 1 : vector<8x256xf32>, i32 -> vector<8x256xf32>
    %cst_12 = arith.constant 0.000000e+00 : f32
    %26 = vector.shape_cast %10 : vector<1x256xi1> to vector<1x256xi1>
    %27 = vector.broadcast %26 : vector<1x256xi1> to vector<8x256xi1>
    %28 = vector.broadcast %cst_12 : f32 to vector<8x256xf32>
    %29 = arith.select %27, %28, %25 : vector<8x256xi1>, vector<8x256xf32>
    %c8 = arith.constant 8 : index
    %c0_13 = arith.constant 0 : index
    %30 = vector.load %arg8[%c8, %c0_13] : memref<64x256xf32, #tpu.memory_space<vmem>>, vector<8x256xf32>
    tpu.vector_store %arg8[%c8, %c0_13], %29 {strides = array<i32>} : memref<64x256xf32, #tpu.memory_space<vmem>>, vector<8x256xf32>,
    %c240_i32 = arith.constant 240 : i32
    %31 = tpu.dynamic_rotate %23 by %c240_i32 dim 1 : vector<8x256xf32>, i32 -> vector<8x256xf32>
    %cst_14 = arith.constant 0.000000e+00 : f32
    %32 = vector.shape_cast %16 : vector<1x256xi1> to vector<1x256xi1>
    %33 = vector.broadcast %32 : vector<1x256xi1> to vector<8x256xi1>
    %34 = vector.broadcast %cst_14 : f32 to vector<8x256xf32>
    %35 = arith.select %33, %34, %31 : vector<8x256xi1>, vector<8x256xf32>
    %c16 = arith.constant 16 : index
    %c0_15 = arith.constant 0 : index
    %36 = vector.load %arg8[%c16, %c0_15] : memref<64x256xf32, #tpu.memory_space<vmem>>, vector<8x256xf32>
    tpu.vector_store %arg8[%c16, %c0_15], %35 {strides = array<i32>} : memref<64x256xf32, #tpu.memory_space<vmem>>, vector<8x256xf32>,
    %37 = arith.ori %10, %16 : vector<1x256xi1>
    %c239_i32 = arith.constant 239 : i32
    %38 = tpu.dynamic_rotate %23 by %c239_i32 dim 1 : vector<8x256xf32>, i32 -> vector<8x256xf32>
    %cst_16 = arith.constant 0.000000e+00 : f32
    %39 = vector.shape_cast %37 : vector<1x256xi1> to vector<1x256xi1>
    %40 = vector.broadcast %39 : vector<1x256xi1> to vector<8x256xi1>
    %41 = vector.broadcast %cst_16 : f32 to vector<8x256xf32>
    %42 = arith.select %40, %41, %38 : vector<8x256xi1>, vector<8x256xf32>
    %c24 = arith.constant 24 : index
    %c0_17 = arith.constant 0 : index
    %43 = vector.load %arg8[%c24, %c0_17] : memref<64x256xf32, #tpu.memory_space<vmem>>, vector<8x256xf32>
    tpu.vector_store %arg8[%c24, %c0_17], %42 {strides = array<i32>} : memref<64x256xf32, #tpu.memory_space<vmem>>, vector<8x256xf32>,
    %c0_18 = arith.constant 0 : index
    %c0_19 = arith.constant 0 : index
    %44 = vector.load %arg5[%c0_18, %c0_19] : memref<32x32xf32, #tpu.memory_space<vmem>>, vector<32x32xf32>
    %c0_20 = arith.constant 0 : index
    %c0_21 = arith.constant 0 : index
    %45 = vector.load %arg8[%c0_20, %c0_21] : memref<64x256xf32, #tpu.memory_space<vmem>>, vector<32x256xf32>
    %cst_22 = arith.constant dense<0.000000e+00> : vector<32x256xf32>
    %46 = tpu.matmul %44, %45, %cst_22 {dimension_numbers = #tpu.dot_dimension_numbers<[1], [0], [0], [1], [0, 0, 1, 1], [], []>} : vector<32x32xf32>, vector<32x256xf32>, vector<32x256xf32> -> vector<32x256xf32>
    %cst_23 = arith.constant 0.000000e+00 : f32
    %47 = vector.broadcast %cst_23 : f32 to vector<32x256xf32>
    %48 = arith.cmpf ogt, %46, %47 : vector<32x256xf32>
    %49 = vector.broadcast %1 : f32 to vector<32x256xf32>
    %50 = arith.mulf %49, %46 : vector<32x256xf32>
    %51 = arith.select %48, %46, %50 : vector<32x256xi1>, vector<32x256xf32>
    %c0_24 = arith.constant 0 : index
    %c0_25 = arith.constant 0 : index
    %52 = vector.load %arg8[%c0_24, %c0_25] : memref<64x256xf32, #tpu.memory_space<vmem>>, vector<32x256xf32>
    tpu.vector_store %arg8[%c0_24, %c0_25], %51 {strides = array<i32>} : memref<64x256xf32, #tpu.memory_space<vmem>>, vector<32x256xf32>,
    %c16_i32 = arith.constant 16 : i32
    %53 = tpu.dynamic_rotate %3 by %c16_i32 dim 1 : vector<8x256xf32>, i32 -> vector<8x256xf32>
    %54 = vector.shape_cast %13 : vector<1x256xi1> to vector<1x256xi1>
    %55 = vector.broadcast %54 : vector<1x256xi1> to vector<8x256xi1>
    %56 = arith.select %55, %3, %53 : vector<8x256xi1>, vector<8x256xf32>
    %c240_i32_26 = arith.constant 240 : i32
    %57 = tpu.dynamic_rotate %3 by %c240_i32_26 dim 1 : vector<8x256xf32>, i32 -> vector<8x256xf32>
    %58 = vector.shape_cast %16 : vector<1x256xi1> to vector<1x256xi1>
    %59 = vector.broadcast %58 : vector<1x256xi1> to vector<8x256xi1>
    %60 = arith.select %59, %3, %57 : vector<8x256xi1>, vector<8x256xf32>
    %c1_i32 = arith.constant 1 : i32
    %61 = tpu.dynamic_rotate %3 by %c1_i32 dim 1 : vector<8x256xf32>, i32 -> vector<8x256xf32>
    %62 = vector.shape_cast %7 : vector<1x256xi1> to vector<1x256xi1>
    %63 = vector.broadcast %62 : vector<1x256xi1> to vector<8x256xi1>
    %64 = arith.select %63, %3, %61 : vector<8x256xi1>, vector<8x256xf32>
    %c255_i32_27 = arith.constant 255 : i32
    %65 = tpu.dynamic_rotate %3 by %c255_i32_27 dim 1 : vector<8x256xf32>, i32 -> vector<8x256xf32>
    %66 = vector.shape_cast %10 : vector<1x256xi1> to vector<1x256xi1>
    %67 = vector.broadcast %66 : vector<1x256xi1> to vector<8x256xi1>
    %68 = arith.select %67, %3, %65 : vector<8x256xi1>, vector<8x256xf32>
    %cst_28 = arith.constant 5.625000e-01 : f32
    %69 = vector.broadcast %cst_28 : f32 to vector<8x256xf32>
    %70 = arith.mulf %69, %3 : vector<8x256xf32>
    %cst_29 = arith.constant 1.875000e-01 : f32
    %71 = vector.broadcast %cst_29 : f32 to vector<8x256xf32>
    %72 = arith.mulf %71, %56 : vector<8x256xf32>
    %73 = arith.addf %70, %72 : vector<8x256xf32>
    %cst_30 = arith.constant 1.875000e-01 : f32
    %74 = vector.broadcast %cst_30 : f32 to vector<8x256xf32>
    %75 = arith.mulf %74, %64 : vector<8x256xf32>
    %76 = arith.addf %73, %75 : vector<8x256xf32>
    %c1_i32_31 = arith.constant 1 : i32
    %77 = tpu.dynamic_rotate %56 by %c1_i32_31 dim 1 : vector<8x256xf32>, i32 -> vector<8x256xf32>
    %78 = vector.shape_cast %7 : vector<1x256xi1> to vector<1x256xi1>
    %79 = vector.broadcast %78 : vector<1x256xi1> to vector<8x256xi1>
    %80 = arith.select %79, %56, %77 : vector<8x256xi1>, vector<8x256xf32>
    %cst_32 = arith.constant 6.250000e-02 : f32
    %81 = vector.broadcast %cst_32 : f32 to vector<8x256xf32>
    %82 = arith.mulf %81, %80 : vector<8x256xf32>
    %83 = arith.addf %76, %82 : vector<8x256xf32>
    %c32 = arith.constant 32 : index
    %c0_33 = arith.constant 0 : index
    %84 = vector.load %arg8[%c32, %c0_33] : memref<64x256xf32, #tpu.memory_space<vmem>>, vector<8x256xf32>
    tpu.vector_store %arg8[%c32, %c0_33], %83 {strides = array<i32>} : memref<64x256xf32, #tpu.memory_space<vmem>>, vector<8x256xf32>,
    %cst_34 = arith.constant 5.625000e-01 : f32
    %85 = vector.broadcast %cst_34 : f32 to vector<8x256xf32>
    %86 = arith.mulf %85, %3 : vector<8x256xf32>
    %cst_35 = arith.constant 1.875000e-01 : f32
    %87 = vector.broadcast %cst_35 : f32 to vector<8x256xf32>
    %88 = arith.mulf %87, %56 : vector<8x256xf32>
    %89 = arith.addf %86, %88 : vector<8x256xf32>
    %cst_36 = arith.constant 1.875000e-01 : f32
    %90 = vector.broadcast %cst_36 : f32 to vector<8x256xf32>
    %91 = arith.mulf %90, %68 : vector<8x256xf32>
    %92 = arith.addf %89, %91 : vector<8x256xf32>
    %c255_i32_37 = arith.constant 255 : i32
    %93 = tpu.dynamic_rotate %56 by %c255_i32_37 dim 1 : vector<8x256xf32>, i32 -> vector<8x256xf32>
    %94 = vector.shape_cast %10 : vector<1x256xi1> to vector<1x256xi1>
    %95 = vector.broadcast %94 : vector<1x256xi1> to vector<8x256xi1>
    %96 = arith.select %95, %56, %93 : vector<8x256xi1>, vector<8x256xf32>
    %cst_38 = arith.constant 6.250000e-02 : f32
    %97 = vector.broadcast %cst_38 : f32 to vector<8x256xf32>
    %98 = arith.mulf %97, %96 : vector<8x256xf32>
    %99 = arith.addf %92, %98 : vector<8x256xf32>
    %c40 = arith.constant 40 : index
    %c0_39 = arith.constant 0 : index
    %100 = vector.load %arg8[%c40, %c0_39] : memref<64x256xf32, #tpu.memory_space<vmem>>, vector<8x256xf32>
    tpu.vector_store %arg8[%c40, %c0_39], %99 {strides = array<i32>} : memref<64x256xf32, #tpu.memory_space<vmem>>, vector<8x256xf32>,
    %cst_40 = arith.constant 5.625000e-01 : f32
    %101 = vector.broadcast %cst_40 : f32 to vector<8x256xf32>
    %102 = arith.mulf %101, %3 : vector<8x256xf32>
    %cst_41 = arith.constant 1.875000e-01 : f32
    %103 = vector.broadcast %cst_41 : f32 to vector<8x256xf32>
    %104 = arith.mulf %103, %60 : vector<8x256xf32>
    %105 = arith.addf %102, %104 : vector<8x256xf32>
    %cst_42 = arith.constant 1.875000e-01 : f32
    %106 = vector.broadcast %cst_42 : f32 to vector<8x256xf32>
    %107 = arith.mulf %106, %64 : vector<8x256xf32>
    %108 = arith.addf %105, %107 : vector<8x256xf32>
    %c1_i32_43 = arith.constant 1 : i32
    %109 = tpu.dynamic_rotate %60 by %c1_i32_43 dim 1 : vector<8x256xf32>, i32 -> vector<8x256xf32>
    %110 = vector.shape_cast %7 : vector<1x256xi1> to vector<1x256xi1>
    %111 = vector.broadcast %110 : vector<1x256xi1> to vector<8x256xi1>
    %112 = arith.select %111, %60, %109 : vector<8x256xi1>, vector<8x256xf32>
    %cst_44 = arith.constant 6.250000e-02 : f32
    %113 = vector.broadcast %cst_44 : f32 to vector<8x256xf32>
    %114 = arith.mulf %113, %112 : vector<8x256xf32>
    %115 = arith.addf %108, %114 : vector<8x256xf32>
    %c48 = arith.constant 48 : index
    %c0_45 = arith.constant 0 : index
    %116 = vector.load %arg8[%c48, %c0_45] : memref<64x256xf32, #tpu.memory_space<vmem>>, vector<8x256xf32>
    tpu.vector_store %arg8[%c48, %c0_45], %115 {strides = array<i32>} : memref<64x256xf32, #tpu.memory_space<vmem>>, vector<8x256xf32>,
    %cst_46 = arith.constant 5.625000e-01 : f32
    %117 = vector.broadcast %cst_46 : f32 to vector<8x256xf32>
    %118 = arith.mulf %117, %3 : vector<8x256xf32>
    %cst_47 = arith.constant 1.875000e-01 : f32
    %119 = vector.broadcast %cst_47 : f32 to vector<8x256xf32>
    %120 = arith.mulf %119, %60 : vector<8x256xf32>
    %121 = arith.addf %118, %120 : vector<8x256xf32>
    %cst_48 = arith.constant 1.875000e-01 : f32
    %122 = vector.broadcast %cst_48 : f32 to vector<8x256xf32>
    %123 = arith.mulf %122, %68 : vector<8x256xf32>
    %124 = arith.addf %121, %123 : vector<8x256xf32>
    %c255_i32_49 = arith.constant 255 : i32
    %125 = tpu.dynamic_rotate %60 by %c255_i32_49 dim 1 : vector<8x256xf32>, i32 -> vector<8x256xf32>
    %126 = vector.shape_cast %10 : vector<1x256xi1> to vector<1x256xi1>
    %127 = vector.broadcast %126 : vector<1x256xi1> to vector<8x256xi1>
    %128 = arith.select %127, %60, %125 : vector<8x256xi1>, vector<8x256xf32>
    %cst_50 = arith.constant 6.250000e-02 : f32
    %129 = vector.broadcast %cst_50 : f32 to vector<8x256xf32>
    %130 = arith.mulf %129, %128 : vector<8x256xf32>
    %131 = arith.addf %124, %130 : vector<8x256xf32>
    %c56 = arith.constant 56 : index
    %c0_51 = arith.constant 0 : index
    %132 = vector.load %arg8[%c56, %c0_51] : memref<64x256xf32, #tpu.memory_space<vmem>>, vector<8x256xf32>
    tpu.vector_store %arg8[%c56, %c0_51], %131 {strides = array<i32>} : memref<64x256xf32, #tpu.memory_space<vmem>>, vector<8x256xf32>,
    %c0_52 = arith.constant 0 : index
    %c0_53 = arith.constant 0 : index
    %133 = vector.load %arg6[%c0_52, %c0_53] : memref<16x64xf32, #tpu.memory_space<vmem>>, vector<16x64xf32>
    %c0_54 = arith.constant 0 : index
    %c0_55 = arith.constant 0 : index
    %134 = vector.load %arg8[%c0_54, %c0_55] : memref<64x256xf32, #tpu.memory_space<vmem>>, vector<64x256xf32>
    %cst_56 = arith.constant dense<0.000000e+00> : vector<16x256xf32>
    %135 = tpu.matmul %133, %134, %cst_56 {dimension_numbers = #tpu.dot_dimension_numbers<[1], [0], [0], [1], [0, 0, 1, 1], [], []>} : vector<16x64xf32>, vector<64x256xf32>, vector<16x256xf32> -> vector<16x256xf32>
    %136 = arith.truncf %135 : vector<16x256xf32> to vector<16x256xbf16>
    %c0_57 = arith.constant 0 : index
    %c0_58 = arith.constant 0 : index
    %c0_59 = arith.constant 0 : index
    %137 = vector.load %arg7[%c0_57, %c0_58, %c0_59] : memref<1x16x256xbf16, #tpu.memory_space<vmem>>, vector<1x16x256xbf16>
    %138 = vector.shape_cast %137 : vector<1x16x256xbf16> to vector<16x256xbf16>
    %139 = vector.shape_cast %136 : vector<16x256xbf16> to vector<1x16x256xbf16>
    tpu.vector_store %arg7[%c0_57, %c0_58, %c0_59], %139 {strides = array<i32>} : memref<1x16x256xbf16, #tpu.memory_space<vmem>>, vector<1x16x256xbf16>,
    return
  }
  func.func @transform_0(%arg0: i32) -> i32 {
    %c0_i32 = arith.constant 0 : i32
    %c0_i32_0 = arith.constant 0 : i32
    return %c0_i32 : i32
  }
  func.func @transform_1(%arg0: i32) -> (i32, i32) {
    %c0_i32 = arith.constant 0 : i32
    %c0_i32_0 = arith.constant 0 : i32
    %c0_i32_1 = arith.constant 0 : i32
    return %c0_i32, %c0_i32_0 : i32, i32
  }
  func.func @transform_2(%arg0: i32) -> (i32, i32, i32) {
    %c0_i32 = arith.constant 0 : i32
    %c0_i32_0 = arith.constant 0 : i32
    %c0_i32_1 = arith.constant 0 : i32
    return %arg0, %c0_i32, %c0_i32_0 : i32, i32, i32
  }
  func.func @transform_3(%arg0: i32) -> (i32, i32) {
    %c0_i32 = arith.constant 0 : i32
    %c0_i32_0 = arith.constant 0 : i32
    %c0_i32_1 = arith.constant 0 : i32
    return %c0_i32, %c0_i32_0 : i32, i32
  }
  func.func @transform_4(%arg0: i32) -> (i32, i32) {
    %c0_i32 = arith.constant 0 : i32
    %c0_i32_0 = arith.constant 0 : i32
    %c0_i32_1 = arith.constant 0 : i32
    return %c0_i32, %c0_i32_0 : i32, i32
  }
  func.func @transform_5(%arg0: i32) -> (i32, i32) {
    %c0_i32 = arith.constant 0 : i32
    %c0_i32_0 = arith.constant 0 : i32
    %c0_i32_1 = arith.constant 0 : i32
    return %c0_i32, %c0_i32_0 : i32, i32
  }
  func.func @transform_6(%arg0: i32) -> (i32, i32, i32) {
    %c0_i32 = arith.constant 0 : i32
    %c0_i32_0 = arith.constant 0 : i32
    %c0_i32_1 = arith.constant 0 : i32
    return %arg0, %c0_i32, %c0_i32_0 : i32, i32, i32
  }
}

module attributes {stable_mosaic.version = 11 : i64} {
  func.func @_residual_block_kernel(%arg0: i32, %arg1: memref<2xf32, #tpu.memory_space<smem>>, %arg2: memref<2x1024xi32, #tpu.memory_space<vmem>>, %arg3: memref<1x4x1024xbf16, #tpu.memory_space<vmem>>, %arg4: memref<4x4xf32, #tpu.memory_space<vmem>>, %arg5: memref<16x16xf32, #tpu.memory_space<vmem>>, %arg6: memref<8x32xf32, #tpu.memory_space<vmem>>, %arg7: memref<1x8x1024xbf16, #tpu.memory_space<vmem>>, %arg8: memref<32x1024xf32, #tpu.memory_space<vmem>>) attributes {dimension_semantics = [#tpu.dimension_semantics<parallel>], iteration_bounds = array<i64: 2>, scalar_prefetch = 0 : i64, scratch_operands = 1 : i64, tpu.core_type = #tpu.core_type<tc>, window_params = [{transform_indices = @transform_0, window_bounds = array<i64: 2>}, {pipeline_mode = #tpu.pipeline_mode<synchronous>, transform_indices = @transform_1, window_bounds = array<i64: 2, 1024>}, {transform_indices = @transform_2, window_bounds = array<i64: 1, 4, 1024>}, {pipeline_mode = #tpu.pipeline_mode<synchronous>, transform_indices = @transform_3, window_bounds = array<i64: 4, 4>}, {pipeline_mode = #tpu.pipeline_mode<synchronous>, transform_indices = @transform_4, window_bounds = array<i64: 16, 16>}, {pipeline_mode = #tpu.pipeline_mode<synchronous>, transform_indices = @transform_5, window_bounds = array<i64: 8, 32>}, {transform_indices = @transform_6, window_bounds = array<i64: 1, 8, 1024>}]} {
    %c0 = arith.constant 0 : index
    %0 = memref.load %arg1[%c0] : memref<2xf32, #tpu.memory_space<smem>>
    %c1 = arith.constant 1 : index
    %1 = memref.load %arg1[%c1] : memref<2xf32, #tpu.memory_space<smem>>
    %c0_0 = arith.constant 0 : index
    %c0_1 = arith.constant 0 : index
    %c0_2 = arith.constant 0 : index
    %2 = vector.load %arg3[%c0_0, %c0_1, %c0_2] : memref<1x4x1024xbf16, #tpu.memory_space<vmem>>, vector<1x4x1024xbf16>
    %3 = vector.shape_cast %2 : vector<1x4x1024xbf16> to vector<4x1024xbf16>
    %4 = arith.extf %3 : vector<4x1024xbf16> to vector<4x1024xf32>
    %c0_3 = arith.constant 0 : index
    %c0_4 = arith.constant 0 : index
    %5 = vector.load %arg2[%c0_3, %c0_4] : memref<2x1024xi32, #tpu.memory_space<vmem>>, vector<2x1024xi32>
    %6 = vector.extract_strided_slice %5 {offsets = [0, 0], sizes = [1, 1024], strides = [1, 1]} : vector<2x1024xi32> to vector<1x1024xi32>
    %c0_i32 = arith.constant 0 : i32
    %7 = vector.broadcast %c0_i32 : i32 to vector<1x1024xi32>
    %8 = arith.cmpi eq, %6, %7 : vector<1x1024xi32>
    %9 = vector.extract_strided_slice %5 {offsets = [0, 0], sizes = [1, 1024], strides = [1, 1]} : vector<2x1024xi32> to vector<1x1024xi32>
    %c31_i32 = arith.constant 31 : i32
    %10 = vector.broadcast %c31_i32 : i32 to vector<1x1024xi32>
    %11 = arith.cmpi eq, %9, %10 : vector<1x1024xi32>
    %12 = vector.extract_strided_slice %5 {offsets = [1, 0], sizes = [1, 1024], strides = [1, 1]} : vector<2x1024xi32> to vector<1x1024xi32>
    %c0_i32_5 = arith.constant 0 : i32
    %13 = vector.broadcast %c0_i32_5 : i32 to vector<1x1024xi32>
    %14 = arith.cmpi eq, %12, %13 : vector<1x1024xi32>
    %15 = vector.extract_strided_slice %5 {offsets = [1, 0], sizes = [1, 1024], strides = [1, 1]} : vector<2x1024xi32> to vector<1x1024xi32>
    %c31_i32_6 = arith.constant 31 : i32
    %16 = vector.broadcast %c31_i32_6 : i32 to vector<1x1024xi32>
    %17 = arith.cmpi eq, %15, %16 : vector<1x1024xi32>
    %c0_7 = arith.constant 0 : index
    %c0_8 = arith.constant 0 : index
    %18 = vector.load %arg4[%c0_7, %c0_8] : memref<4x4xf32, #tpu.memory_space<vmem>>, vector<4x4xf32>
    %cst = arith.constant dense<0.000000e+00> : vector<4x1024xf32>
    %19 = tpu.matmul %18, %4, %cst {dimension_numbers = #tpu.dot_dimension_numbers<[1], [0], [0], [1], [0, 0, 1, 1], [], []>} : vector<4x4xf32>, vector<4x1024xf32>, vector<4x1024xf32> -> vector<4x1024xf32>
    %cst_9 = arith.constant 0.000000e+00 : f32
    %20 = vector.broadcast %cst_9 : f32 to vector<4x1024xf32>
    %21 = arith.cmpf ogt, %19, %20 : vector<4x1024xf32>
    %22 = vector.broadcast %0 : f32 to vector<4x1024xf32>
    %23 = arith.mulf %22, %19 : vector<4x1024xf32>
    %24 = arith.select %21, %19, %23 : vector<4x1024xi1>, vector<4x1024xf32>
    %c0_10 = arith.constant 0 : index
    %c0_11 = arith.constant 0 : index
    %25 = vector.load %arg8[%c0_10, %c0_11] : memref<32x1024xf32, #tpu.memory_space<vmem>>, vector<4x1024xf32>
    tpu.vector_store %arg8[%c0_10, %c0_11], %24 {strides = array<i32>} : memref<32x1024xf32, #tpu.memory_space<vmem>>, vector<4x1024xf32>,
    %c1023_i32 = arith.constant 1023 : i32
    %26 = tpu.dynamic_rotate %24 by %c1023_i32 dim 1 : vector<4x1024xf32>, i32 -> vector<4x1024xf32>
    %cst_12 = arith.constant 0.000000e+00 : f32
    %27 = vector.shape_cast %11 : vector<1x1024xi1> to vector<1x1024xi1>
    %28 = vector.broadcast %27 : vector<1x1024xi1> to vector<4x1024xi1>
    %29 = vector.broadcast %cst_12 : f32 to vector<4x1024xf32>
    %30 = arith.select %28, %29, %26 : vector<4x1024xi1>, vector<4x1024xf32>
    %c4 = arith.constant 4 : index
    %c0_13 = arith.constant 0 : index
    %31 = vector.load %arg8[%c4, %c0_13] : memref<32x1024xf32, #tpu.memory_space<vmem>>, vector<4x1024xf32>
    tpu.vector_store %arg8[%c4, %c0_13], %30 {strides = array<i32>} : memref<32x1024xf32, #tpu.memory_space<vmem>>, vector<4x1024xf32>,
    %c992_i32 = arith.constant 992 : i32
    %32 = tpu.dynamic_rotate %24 by %c992_i32 dim 1 : vector<4x1024xf32>, i32 -> vector<4x1024xf32>
    %cst_14 = arith.constant 0.000000e+00 : f32
    %33 = vector.shape_cast %17 : vector<1x1024xi1> to vector<1x1024xi1>
    %34 = vector.broadcast %33 : vector<1x1024xi1> to vector<4x1024xi1>
    %35 = vector.broadcast %cst_14 : f32 to vector<4x1024xf32>
    %36 = arith.select %34, %35, %32 : vector<4x1024xi1>, vector<4x1024xf32>
    %c8 = arith.constant 8 : index
    %c0_15 = arith.constant 0 : index
    %37 = vector.load %arg8[%c8, %c0_15] : memref<32x1024xf32, #tpu.memory_space<vmem>>, vector<4x1024xf32>
    tpu.vector_store %arg8[%c8, %c0_15], %36 {strides = array<i32>} : memref<32x1024xf32, #tpu.memory_space<vmem>>, vector<4x1024xf32>,
    %38 = arith.ori %11, %17 : vector<1x1024xi1>
    %c991_i32 = arith.constant 991 : i32
    %39 = tpu.dynamic_rotate %24 by %c991_i32 dim 1 : vector<4x1024xf32>, i32 -> vector<4x1024xf32>
    %cst_16 = arith.constant 0.000000e+00 : f32
    %40 = vector.shape_cast %38 : vector<1x1024xi1> to vector<1x1024xi1>
    %41 = vector.broadcast %40 : vector<1x1024xi1> to vector<4x1024xi1>
    %42 = vector.broadcast %cst_16 : f32 to vector<4x1024xf32>
    %43 = arith.select %41, %42, %39 : vector<4x1024xi1>, vector<4x1024xf32>
    %c12 = arith.constant 12 : index
    %c0_17 = arith.constant 0 : index
    %44 = vector.load %arg8[%c12, %c0_17] : memref<32x1024xf32, #tpu.memory_space<vmem>>, vector<4x1024xf32>
    tpu.vector_store %arg8[%c12, %c0_17], %43 {strides = array<i32>} : memref<32x1024xf32, #tpu.memory_space<vmem>>, vector<4x1024xf32>,
    %c0_18 = arith.constant 0 : index
    %c0_19 = arith.constant 0 : index
    %45 = vector.load %arg5[%c0_18, %c0_19] : memref<16x16xf32, #tpu.memory_space<vmem>>, vector<16x16xf32>
    %c0_20 = arith.constant 0 : index
    %c0_21 = arith.constant 0 : index
    %46 = vector.load %arg8[%c0_20, %c0_21] : memref<32x1024xf32, #tpu.memory_space<vmem>>, vector<16x1024xf32>
    %cst_22 = arith.constant dense<0.000000e+00> : vector<16x1024xf32>
    %47 = tpu.matmul %45, %46, %cst_22 {dimension_numbers = #tpu.dot_dimension_numbers<[1], [0], [0], [1], [0, 0, 1, 1], [], []>} : vector<16x16xf32>, vector<16x1024xf32>, vector<16x1024xf32> -> vector<16x1024xf32>
    %cst_23 = arith.constant 0.000000e+00 : f32
    %48 = vector.broadcast %cst_23 : f32 to vector<16x1024xf32>
    %49 = arith.cmpf ogt, %47, %48 : vector<16x1024xf32>
    %50 = vector.broadcast %1 : f32 to vector<16x1024xf32>
    %51 = arith.mulf %50, %47 : vector<16x1024xf32>
    %52 = arith.select %49, %47, %51 : vector<16x1024xi1>, vector<16x1024xf32>
    %c0_24 = arith.constant 0 : index
    %c0_25 = arith.constant 0 : index
    %53 = vector.load %arg8[%c0_24, %c0_25] : memref<32x1024xf32, #tpu.memory_space<vmem>>, vector<16x1024xf32>
    tpu.vector_store %arg8[%c0_24, %c0_25], %52 {strides = array<i32>} : memref<32x1024xf32, #tpu.memory_space<vmem>>, vector<16x1024xf32>,
    %c32_i32 = arith.constant 32 : i32
    %54 = tpu.dynamic_rotate %4 by %c32_i32 dim 1 : vector<4x1024xf32>, i32 -> vector<4x1024xf32>
    %55 = vector.shape_cast %14 : vector<1x1024xi1> to vector<1x1024xi1>
    %56 = vector.broadcast %55 : vector<1x1024xi1> to vector<4x1024xi1>
    %57 = arith.select %56, %4, %54 : vector<4x1024xi1>, vector<4x1024xf32>
    %c992_i32_26 = arith.constant 992 : i32
    %58 = tpu.dynamic_rotate %4 by %c992_i32_26 dim 1 : vector<4x1024xf32>, i32 -> vector<4x1024xf32>
    %59 = vector.shape_cast %17 : vector<1x1024xi1> to vector<1x1024xi1>
    %60 = vector.broadcast %59 : vector<1x1024xi1> to vector<4x1024xi1>
    %61 = arith.select %60, %4, %58 : vector<4x1024xi1>, vector<4x1024xf32>
    %c1_i32 = arith.constant 1 : i32
    %62 = tpu.dynamic_rotate %4 by %c1_i32 dim 1 : vector<4x1024xf32>, i32 -> vector<4x1024xf32>
    %63 = vector.shape_cast %8 : vector<1x1024xi1> to vector<1x1024xi1>
    %64 = vector.broadcast %63 : vector<1x1024xi1> to vector<4x1024xi1>
    %65 = arith.select %64, %4, %62 : vector<4x1024xi1>, vector<4x1024xf32>
    %c1023_i32_27 = arith.constant 1023 : i32
    %66 = tpu.dynamic_rotate %4 by %c1023_i32_27 dim 1 : vector<4x1024xf32>, i32 -> vector<4x1024xf32>
    %67 = vector.shape_cast %11 : vector<1x1024xi1> to vector<1x1024xi1>
    %68 = vector.broadcast %67 : vector<1x1024xi1> to vector<4x1024xi1>
    %69 = arith.select %68, %4, %66 : vector<4x1024xi1>, vector<4x1024xf32>
    %cst_28 = arith.constant 5.625000e-01 : f32
    %70 = vector.broadcast %cst_28 : f32 to vector<4x1024xf32>
    %71 = arith.mulf %70, %4 : vector<4x1024xf32>
    %cst_29 = arith.constant 1.875000e-01 : f32
    %72 = vector.broadcast %cst_29 : f32 to vector<4x1024xf32>
    %73 = arith.mulf %72, %57 : vector<4x1024xf32>
    %74 = arith.addf %71, %73 : vector<4x1024xf32>
    %cst_30 = arith.constant 1.875000e-01 : f32
    %75 = vector.broadcast %cst_30 : f32 to vector<4x1024xf32>
    %76 = arith.mulf %75, %65 : vector<4x1024xf32>
    %77 = arith.addf %74, %76 : vector<4x1024xf32>
    %c1_i32_31 = arith.constant 1 : i32
    %78 = tpu.dynamic_rotate %57 by %c1_i32_31 dim 1 : vector<4x1024xf32>, i32 -> vector<4x1024xf32>
    %79 = vector.shape_cast %8 : vector<1x1024xi1> to vector<1x1024xi1>
    %80 = vector.broadcast %79 : vector<1x1024xi1> to vector<4x1024xi1>
    %81 = arith.select %80, %57, %78 : vector<4x1024xi1>, vector<4x1024xf32>
    %cst_32 = arith.constant 6.250000e-02 : f32
    %82 = vector.broadcast %cst_32 : f32 to vector<4x1024xf32>
    %83 = arith.mulf %82, %81 : vector<4x1024xf32>
    %84 = arith.addf %77, %83 : vector<4x1024xf32>
    %c16 = arith.constant 16 : index
    %c0_33 = arith.constant 0 : index
    %85 = vector.load %arg8[%c16, %c0_33] : memref<32x1024xf32, #tpu.memory_space<vmem>>, vector<4x1024xf32>
    tpu.vector_store %arg8[%c16, %c0_33], %84 {strides = array<i32>} : memref<32x1024xf32, #tpu.memory_space<vmem>>, vector<4x1024xf32>,
    %cst_34 = arith.constant 5.625000e-01 : f32
    %86 = vector.broadcast %cst_34 : f32 to vector<4x1024xf32>
    %87 = arith.mulf %86, %4 : vector<4x1024xf32>
    %cst_35 = arith.constant 1.875000e-01 : f32
    %88 = vector.broadcast %cst_35 : f32 to vector<4x1024xf32>
    %89 = arith.mulf %88, %57 : vector<4x1024xf32>
    %90 = arith.addf %87, %89 : vector<4x1024xf32>
    %cst_36 = arith.constant 1.875000e-01 : f32
    %91 = vector.broadcast %cst_36 : f32 to vector<4x1024xf32>
    %92 = arith.mulf %91, %69 : vector<4x1024xf32>
    %93 = arith.addf %90, %92 : vector<4x1024xf32>
    %c1023_i32_37 = arith.constant 1023 : i32
    %94 = tpu.dynamic_rotate %57 by %c1023_i32_37 dim 1 : vector<4x1024xf32>, i32 -> vector<4x1024xf32>
    %95 = vector.shape_cast %11 : vector<1x1024xi1> to vector<1x1024xi1>
    %96 = vector.broadcast %95 : vector<1x1024xi1> to vector<4x1024xi1>
    %97 = arith.select %96, %57, %94 : vector<4x1024xi1>, vector<4x1024xf32>
    %cst_38 = arith.constant 6.250000e-02 : f32
    %98 = vector.broadcast %cst_38 : f32 to vector<4x1024xf32>
    %99 = arith.mulf %98, %97 : vector<4x1024xf32>
    %100 = arith.addf %93, %99 : vector<4x1024xf32>
    %c20 = arith.constant 20 : index
    %c0_39 = arith.constant 0 : index
    %101 = vector.load %arg8[%c20, %c0_39] : memref<32x1024xf32, #tpu.memory_space<vmem>>, vector<4x1024xf32>
    tpu.vector_store %arg8[%c20, %c0_39], %100 {strides = array<i32>} : memref<32x1024xf32, #tpu.memory_space<vmem>>, vector<4x1024xf32>,
    %cst_40 = arith.constant 5.625000e-01 : f32
    %102 = vector.broadcast %cst_40 : f32 to vector<4x1024xf32>
    %103 = arith.mulf %102, %4 : vector<4x1024xf32>
    %cst_41 = arith.constant 1.875000e-01 : f32
    %104 = vector.broadcast %cst_41 : f32 to vector<4x1024xf32>
    %105 = arith.mulf %104, %61 : vector<4x1024xf32>
    %106 = arith.addf %103, %105 : vector<4x1024xf32>
    %cst_42 = arith.constant 1.875000e-01 : f32
    %107 = vector.broadcast %cst_42 : f32 to vector<4x1024xf32>
    %108 = arith.mulf %107, %65 : vector<4x1024xf32>
    %109 = arith.addf %106, %108 : vector<4x1024xf32>
    %c1_i32_43 = arith.constant 1 : i32
    %110 = tpu.dynamic_rotate %61 by %c1_i32_43 dim 1 : vector<4x1024xf32>, i32 -> vector<4x1024xf32>
    %111 = vector.shape_cast %8 : vector<1x1024xi1> to vector<1x1024xi1>
    %112 = vector.broadcast %111 : vector<1x1024xi1> to vector<4x1024xi1>
    %113 = arith.select %112, %61, %110 : vector<4x1024xi1>, vector<4x1024xf32>
    %cst_44 = arith.constant 6.250000e-02 : f32
    %114 = vector.broadcast %cst_44 : f32 to vector<4x1024xf32>
    %115 = arith.mulf %114, %113 : vector<4x1024xf32>
    %116 = arith.addf %109, %115 : vector<4x1024xf32>
    %c24 = arith.constant 24 : index
    %c0_45 = arith.constant 0 : index
    %117 = vector.load %arg8[%c24, %c0_45] : memref<32x1024xf32, #tpu.memory_space<vmem>>, vector<4x1024xf32>
    tpu.vector_store %arg8[%c24, %c0_45], %116 {strides = array<i32>} : memref<32x1024xf32, #tpu.memory_space<vmem>>, vector<4x1024xf32>,
    %cst_46 = arith.constant 5.625000e-01 : f32
    %118 = vector.broadcast %cst_46 : f32 to vector<4x1024xf32>
    %119 = arith.mulf %118, %4 : vector<4x1024xf32>
    %cst_47 = arith.constant 1.875000e-01 : f32
    %120 = vector.broadcast %cst_47 : f32 to vector<4x1024xf32>
    %121 = arith.mulf %120, %61 : vector<4x1024xf32>
    %122 = arith.addf %119, %121 : vector<4x1024xf32>
    %cst_48 = arith.constant 1.875000e-01 : f32
    %123 = vector.broadcast %cst_48 : f32 to vector<4x1024xf32>
    %124 = arith.mulf %123, %69 : vector<4x1024xf32>
    %125 = arith.addf %122, %124 : vector<4x1024xf32>
    %c1023_i32_49 = arith.constant 1023 : i32
    %126 = tpu.dynamic_rotate %61 by %c1023_i32_49 dim 1 : vector<4x1024xf32>, i32 -> vector<4x1024xf32>
    %127 = vector.shape_cast %11 : vector<1x1024xi1> to vector<1x1024xi1>
    %128 = vector.broadcast %127 : vector<1x1024xi1> to vector<4x1024xi1>
    %129 = arith.select %128, %61, %126 : vector<4x1024xi1>, vector<4x1024xf32>
    %cst_50 = arith.constant 6.250000e-02 : f32
    %130 = vector.broadcast %cst_50 : f32 to vector<4x1024xf32>
    %131 = arith.mulf %130, %129 : vector<4x1024xf32>
    %132 = arith.addf %125, %131 : vector<4x1024xf32>
    %c28 = arith.constant 28 : index
    %c0_51 = arith.constant 0 : index
    %133 = vector.load %arg8[%c28, %c0_51] : memref<32x1024xf32, #tpu.memory_space<vmem>>, vector<4x1024xf32>
    tpu.vector_store %arg8[%c28, %c0_51], %132 {strides = array<i32>} : memref<32x1024xf32, #tpu.memory_space<vmem>>, vector<4x1024xf32>,
    %c0_52 = arith.constant 0 : index
    %c0_53 = arith.constant 0 : index
    %134 = vector.load %arg6[%c0_52, %c0_53] : memref<8x32xf32, #tpu.memory_space<vmem>>, vector<8x32xf32>
    %c0_54 = arith.constant 0 : index
    %c0_55 = arith.constant 0 : index
    %135 = vector.load %arg8[%c0_54, %c0_55] : memref<32x1024xf32, #tpu.memory_space<vmem>>, vector<32x1024xf32>
    %cst_56 = arith.constant dense<0.000000e+00> : vector<8x1024xf32>
    %136 = tpu.matmul %134, %135, %cst_56 {dimension_numbers = #tpu.dot_dimension_numbers<[1], [0], [0], [1], [0, 0, 1, 1], [], []>} : vector<8x32xf32>, vector<32x1024xf32>, vector<8x1024xf32> -> vector<8x1024xf32>
    %137 = arith.truncf %136 : vector<8x1024xf32> to vector<8x1024xbf16>
    %c0_57 = arith.constant 0 : index
    %c0_58 = arith.constant 0 : index
    %c0_59 = arith.constant 0 : index
    %138 = vector.load %arg7[%c0_57, %c0_58, %c0_59] : memref<1x8x1024xbf16, #tpu.memory_space<vmem>>, vector<1x8x1024xbf16>
    %139 = vector.shape_cast %138 : vector<1x8x1024xbf16> to vector<8x1024xbf16>
    %140 = vector.shape_cast %137 : vector<8x1024xbf16> to vector<1x8x1024xbf16>
    tpu.vector_store %arg7[%c0_57, %c0_58, %c0_59], %140 {strides = array<i32>} : memref<1x8x1024xbf16, #tpu.memory_space<vmem>>, vector<1x8x1024xbf16>,
    return
  }
  func.func @transform_0(%arg0: i32) -> i32 {
    %c0_i32 = arith.constant 0 : i32
    %c0_i32_0 = arith.constant 0 : i32
    return %c0_i32 : i32
  }
  func.func @transform_1(%arg0: i32) -> (i32, i32) {
    %c0_i32 = arith.constant 0 : i32
    %c0_i32_0 = arith.constant 0 : i32
    %c0_i32_1 = arith.constant 0 : i32
    return %c0_i32, %c0_i32_0 : i32, i32
  }
  func.func @transform_2(%arg0: i32) -> (i32, i32, i32) {
    %c0_i32 = arith.constant 0 : i32
    %c0_i32_0 = arith.constant 0 : i32
    %c0_i32_1 = arith.constant 0 : i32
    return %arg0, %c0_i32, %c0_i32_0 : i32, i32, i32
  }
  func.func @transform_3(%arg0: i32) -> (i32, i32) {
    %c0_i32 = arith.constant 0 : i32
    %c0_i32_0 = arith.constant 0 : i32
    %c0_i32_1 = arith.constant 0 : i32
    return %c0_i32, %c0_i32_0 : i32, i32
  }
  func.func @transform_4(%arg0: i32) -> (i32, i32) {
    %c0_i32 = arith.constant 0 : i32
    %c0_i32_0 = arith.constant 0 : i32
    %c0_i32_1 = arith.constant 0 : i32
    return %c0_i32, %c0_i32_0 : i32, i32
  }
  func.func @transform_5(%arg0: i32) -> (i32, i32) {
    %c0_i32 = arith.constant 0 : i32
    %c0_i32_0 = arith.constant 0 : i32
    %c0_i32_1 = arith.constant 0 : i32
    return %c0_i32, %c0_i32_0 : i32, i32
  }
  func.func @transform_6(%arg0: i32) -> (i32, i32, i32) {
    %c0_i32 = arith.constant 0 : i32
    %c0_i32_0 = arith.constant 0 : i32
    %c0_i32_1 = arith.constant 0 : i32
    return %arg0, %c0_i32, %c0_i32_0 : i32, i32, i32
  }
}

</mosaic_0001>

<llo_original>
// kernel: upsample_forward.2
$region0: #{upsample_forward.2}
  #allocation0 [shape = 'u32[]', space=smem, size = 0x4, offset = 0x4, fixed_abs, tag = 'smem constant byte address 0x4 - core index']
  #allocation1 [shape = 'u32[72,128]{1,0:T(1,128)}', space=vmem, size = 0x9000, scoped, tag = 'internal scratch']
  #allocation2 [shape = 'f32[64,256]{1,0:T(8,128)}', space=vmem, size = 0x10000, scoped, tag = 'scratch operand']
  %s0 = inlined_call_operand.vmem [shape: f32[2], index: 0, kind: input, shape index: {}]
  %s1 = inlined_call_operand.vmem [shape: s32[2,256], index: 1, kind: input, shape index: {}]
  %s2 = inlined_call_operand.vmem [shape: f32[2,8,256], index: 2, kind: input, shape index: {}]
  %s3 = inlined_call_operand.hbm [shape: f32[8,8], index: 3, kind: input, shape index: {}]
  %s4 = inlined_call_operand.vmem [shape: f32[32,32], index: 4, kind: input, shape index: {}]
  %s5 = inlined_call_operand.vmem [shape: f32[16,64], index: 5, kind: input, shape index: {}]
  %s6 = inlined_call_operand.vmem [shape: bf16[2,16,256], index: 6, kind: output, shape index: {}]
  %s7 = sld [smem:[#allocation0]]
  $region65: #{upsample_forward.2} parent=0
    _
  %s9 = ssub.s32 1, %s7
  %s10 = scalar_select 0, %s9, %s7
  $region1: #{upsample_forward.2} parent=0
    #allocation3 [shape = 'u8[512]{0}', space=smem, size = 0x200, scoped, tag = 'input window, operand 0, single buffered']
    #allocation4 [shape = 's32[2]{0}', space=sflag, size = 0x8, scoped, tag = 'scoped memory for upsample_forward.2']
    #allocation5 [shape = 's32[2]{0}', space=sflag, size = 0x8, scoped, tag = 'scoped memory for upsample_forward.2']
    #allocation6 [shape = 'u8[4096]{0}', space=vmem, size = 0x1000, scoped, tag = 'input window, operand 3, single buffered']
    %11 = vsyncpa [#allocation5], 0
    %12 = vsyncpa [#allocation4], 0
    loop: start=0, step=1, limit=4
    $region2: #{upsample_forward.2} parent=1 // loop_pre_header
      _
    $region3: #{upsample_forward.2} parent=1 // loop_header
      %s14 = sphi 0, %s18
      %p15 = scmp.ge.s32.totalorder %s14, 4
      %s22 = sphi 0, %s22
      %s24 = sphi 0, %s22
      %s25 = sphi 0, %s24
      %s39 = sphi 0, %s25
      %s43 = sphi 0, %s43
      %s45 = sphi 0, %s43
      %s46 = sphi 0, %s45
      %s60 = sphi 0, %s46
      %s66 = sphi 0, %s68
      %s69 = sphi 0, %s66
      %s70 = sphi 0, %s69
      %s86 = sphi 0, %s70
      %s90 = sphi 0, %s90
      %s92 = sphi 0, %s90
      %s93 = sphi 0, %s92
      %s107 = sphi 0, %s93
      %s111 = sphi 0, %s111
      %s113 = sphi 0, %s111
      %s114 = sphi 0, %s113
      %s128 = sphi 0, %s114
      %s132 = sphi 0, %s132
      %s134 = sphi 0, %s132
      %s135 = sphi 0, %s134
      %s149 = sphi 0, %s135
      %s155 = sphi 0, %s157
      %s158 = sphi 0, %s155
      %s159 = sphi 0, %s158
      %s175 = sphi 0, %s159
    $region4: #{upsample_forward.2} parent=1 // loop_header_branch
      %17 = sbr.rel (%p15) target = $region8
    $region5: #{upsample_forward.2} parent=1 // loop_body
      %s19 = ssub.s32 %s14, 1
      %s20 = ssub.s32 %s14, 2
      %s21 = sadd.s32 %s14, 1
      %s23 = sadd.s32 %s22, 1
      %p26 = scmp.eq.s32.totalorder %s14, 1
      %p27 = scmp.ne.s32.totalorder %s22, %s24
      %p28 = scmp.eq.s32.totalorder %s14, 0
      %p29 = por %p27, %p28
      %p30 = scmp.ne.s32.totalorder %s22, %s24
      %p31 = scmp.eq.s32.totalorder %s19, 1
      %p32 = por %p30, %p31
      %p33 = scmp.ne.s32.totalorder %s24, %s25
      %p34 = scmp.eq.s32.totalorder %s19, 0
      %p35 = por %p33, %p34
      %p36 = scmp.ne.s32.totalorder %s24, %s25
      %p37 = scmp.eq.s32.totalorder %s20, 1
      %p38 = por %p36, %p37
      %p40 = scmp.ne.s32.totalorder %s25, %s39
      %p41 = scmp.eq.s32.totalorder %s20, 0
      %p42 = por %p40, %p41
      %s44 = sadd.s32 %s43, 1
      %p47 = scmp.eq.s32.totalorder %s14, 1
      %p48 = scmp.ne.s32.totalorder %s43, %s45
      %p49 = scmp.eq.s32.totalorder %s14, 0
      %p50 = por %p48, %p49
      %p51 = scmp.ne.s32.totalorder %s43, %s45
      %p52 = scmp.eq.s32.totalorder %s19, 1
      %p53 = por %p51, %p52
      %p54 = scmp.ne.s32.totalorder %s45, %s46
      %p55 = scmp.eq.s32.totalorder %s19, 0
      %p56 = por %p54, %p55
      %p57 = scmp.ne.s32.totalorder %s45, %s46
      %p58 = scmp.eq.s32.totalorder %s20, 1
      %p59 = por %p57, %p58
      %p61 = scmp.ne.s32.totalorder %s46, %s60
      %p62 = scmp.eq.s32.totalorder %s20, 0
      %p63 = por %p61, %p62
      %s64 = ssub.s32 %s14, %s21
      %p65 = scmp.eq.s32.totalorder %s64, 0
      %s67 = sadd.s32 %s66, 1
      %s68 = scalar_select %p65, %s66, %s67
      %p71 = pneg %p65
      %p72 = scmp.eq.s32.totalorder %s14, 1
      %p73 = por %p71, %p72
      %p74 = scmp.ne.s32.totalorder %s66, %s69
      %p75 = scmp.eq.s32.totalorder %s14, 0
      %p76 = por %p74, %p75
      %p77 = scmp.ne.s32.totalorder %s66, %s69
      %p78 = scmp.eq.s32.totalorder %s19, 1
      %p79 = por %p77, %p78
      %p80 = scmp.ne.s32.totalorder %s69, %s70
      %p81 = scmp.eq.s32.totalorder %s19, 0
      %p82 = por %p80, %p81
      %p83 = scmp.ne.s32.totalorder %s69, %s70
      %p84 = scmp.eq.s32.totalorder %s20, 1
      %p85 = por %p83, %p84
      %p87 = scmp.ne.s32.totalorder %s70, %s86
      %p88 = scmp.eq.s32.totalorder %s20, 0
      %p89 = por %p87, %p88
      %s91 = sadd.s32 %s90, 1
      %p94 = scmp.eq.s32.totalorder %s14, 1
      %p95 = scmp.ne.s32.totalorder %s90, %s92
      %p96 = scmp.eq.s32.totalorder %s14, 0
      %p97 = por %p95, %p96
      %p98 = scmp.ne.s32.totalorder %s90, %s92
      %p99 = scmp.eq.s32.totalorder %s19, 1
      %p100 = por %p98, %p99
      %p101 = scmp.ne.s32.totalorder %s92, %s93
      %p102 = scmp.eq.s32.totalorder %s19, 0
      %p103 = por %p101, %p102
      %p104 = scmp.ne.s32.totalorder %s92, %s93
      %p105 = scmp.eq.s32.totalorder %s20, 1
      %p106 = por %p104, %p105
      %p108 = scmp.ne.s32.totalorder %s93, %s107
      %p109 = scmp.eq.s32.totalorder %s20, 0
      %p110 = por %p108, %p109
      %s112 = sadd.s32 %s111, 1
      %p115 = scmp.eq.s32.totalorder %s14, 1
      %p116 = scmp.ne.s32.totalorder %s111, %s113
      %p117 = scmp.eq.s32.totalorder %s14, 0
      %p118 = por %p116, %p117
      %p119 = scmp.ne.s32.totalorder %s111, %s113
      %p120 = scmp.eq.s32.totalorder %s19, 1
      %p121 = por %p119, %p120
      %p122 = scmp.ne.s32.totalorder %s113, %s114
      %p123 = scmp.eq.s32.totalorder %s19, 0
      %p124 = por %p122, %p123
      %p125 = scmp.ne.s32.totalorder %s113, %s114
      %p126 = scmp.eq.s32.totalorder %s20, 1
      %p127 = por %p125, %p126
      %p129 = scmp.ne.s32.totalorder %s114, %s128
      %p130 = scmp.eq.s32.totalorder %s20, 0
      %p131 = por %p129, %p130
      %s133 = sadd.s32 %s132, 1
      %p136 = scmp.eq.s32.totalorder %s14, 1
      %p137 = scmp.ne.s32.totalorder %s132, %s134
      %p138 = scmp.eq.s32.totalorder %s14, 0
      %p139 = por %p137, %p138
      %p140 = scmp.ne.s32.totalorder %s132, %s134
      %p141 = scmp.eq.s32.totalorder %s19, 1
      %p142 = por %p140, %p141
      %p143 = scmp.ne.s32.totalorder %s134, %s135
      %p144 = scmp.eq.s32.totalorder %s19, 0
      %p145 = por %p143, %p144
      %p146 = scmp.ne.s32.totalorder %s134, %s135
      %p147 = scmp.eq.s32.totalorder %s20, 1
      %p148 = por %p146, %p147
      %p150 = scmp.ne.s32.totalorder %s135, %s149
      %p151 = scmp.eq.s32.totalorder %s20, 0
      %p152 = por %p150, %p151
      %s153 = ssub.s32 %s14, %s21
      %p154 = scmp.eq.s32.totalorder %s153, 0
      %s156 = sadd.s32 %s155, 1
      %s157 = scalar_select %p154, %s155, %s156
      %p160 = pneg %p154
      %p161 = scmp.eq.s32.totalorder %s14, 1
      %p162 = por %p160, %p161
      %p163 = scmp.ne.s32.totalorder %s155, %s158
      %p164 = scmp.eq.s32.totalorder %s14, 0
      %p165 = por %p163, %p164
      %p166 = scmp.ne.s32.totalorder %s155, %s158
      %p167 = scmp.eq.s32.totalorder %s19, 1
      %p168 = por %p166, %p167
      %p169 = scmp.ne.s32.totalorder %s158, %s159
      %p170 = scmp.eq.s32.totalorder %s19, 0
      %p171 = por %p169, %p170
      %p172 = scmp.ne.s32.totalorder %s158, %s159
      %p173 = scmp.eq.s32.totalorder %s20, 1
      %p174 = por %p172, %p173
      %p176 = scmp.ne.s32.totalorder %s159, %s175
      %p177 = scmp.eq.s32.totalorder %s20, 0
      %p178 = por %p176, %p177
      %p179 = scmp.le.s32.totalorder 1, %s14
      %p180 = scmp.lt.s32.totalorder %s14, 3
      %p181 = pnand %p179, %p180
      %p182 = pneg %p181
      // Predicated region
      $region9: #{upsample_forward.2} parent=5 // pred_check
        _
      $region10: #{upsample_forward.2} parent=5 // pred_check_branch
        %184 = sbr.rel (%p181) target = $region12
      $region11: #{upsample_forward.2} parent=5 // pred_region
        %s185 = ssub.s32 %s14, 1
        // Predicated region
        $region13: #{upsample_forward.2} parent=11 // pred_check
          %p186 = pneg %p35
        $region14: #{upsample_forward.2} parent=11 // pred_check_branch
          %188 = sbr.rel (%p186) target = $region16
        $region15: #{upsample_forward.2} parent=11 // pred_region
          %190 = vsyncadd [#allocation5], 0
          %s192 = sshll.u32 %s0, 4
          %s193 = int_to_ptr.vmem [resolvable:$true] %s192
          %195 = dma.vmem_to_smem %s193, 16, [#allocation3], [#allocation5]
        $region16: #{upsample_forward.2} parent=11 // pred_fallthru
          _
        // Predicated region
        $region17: #{upsample_forward.2} parent=11 // pred_check
          %p196 = pneg %p56
        $region18: #{upsample_forward.2} parent=11 // pred_check_branch
          %198 = sbr.rel (%p196) target = $region20
        $region19: #{upsample_forward.2} parent=11 // pred_region
          _
        $region20: #{upsample_forward.2} parent=11 // pred_fallthru
          _
        // Predicated region
        $region21: #{upsample_forward.2} parent=11 // pred_check
          %p199 = pneg %p103
        $region22: #{upsample_forward.2} parent=11 // pred_check_branch
          %201 = sbr.rel (%p199) target = $region24
        $region23: #{upsample_forward.2} parent=11 // pred_region
          %203 = vsyncadd [#allocation4], 0
          %s205 = sshll.u32 %s3, 4
          %s206 = int_to_ptr.hbm [resolvable:$true] %s205
          %s207 = sshll.u32 [#allocation6], 4
          %s208 = int_to_ptr.vmem [resolvable:$true] %s207
          %210 = dma.hbm_to_vmem [thread:$0]  %s206, 128, %s208, [#allocation4]
        $region24: #{upsample_forward.2} parent=11 // pred_fallthru
          _
        // Predicated region
        $region25: #{upsample_forward.2} parent=11 // pred_check
          %p211 = pneg %p124
        $region26: #{upsample_forward.2} parent=11 // pred_check_branch
          %213 = sbr.rel (%p211) target = $region28
        $region27: #{upsample_forward.2} parent=11 // pred_region
          _
        $region28: #{upsample_forward.2} parent=11 // pred_fallthru
          _
        // Predicated region
        $region29: #{upsample_forward.2} parent=11 // pred_check
          %p214 = pneg %p145
        $region30: #{upsample_forward.2} parent=11 // pred_check_branch
          %216 = sbr.rel (%p214) target = $region32
        $region31: #{upsample_forward.2} parent=11 // pred_region
          _
        $region32: #{upsample_forward.2} parent=11 // pred_fallthru
          _
      $region12: #{upsample_forward.2} parent=5 // pred_fallthru
        _
      %p217 = scmp.lt.s32.totalorder %s14, 2
      // Predicated region
      $region33: #{upsample_forward.2} parent=5 // pred_check
        %p218 = pneg %p217
      $region34: #{upsample_forward.2} parent=5 // pred_check_branch
        %220 = sbr.rel (%p218) target = $region36
      $region35: #{upsample_forward.2} parent=5 // pred_region
        // Predicated region
        $region37: #{upsample_forward.2} parent=35 // pred_check
          %p221 = pneg %p76
        $region38: #{upsample_forward.2} parent=35 // pred_check_branch
          %223 = sbr.rel (%p221) target = $region40
        $region39: #{upsample_forward.2} parent=35 // pred_region
          %p224 = scmp.lt.s32.totalorder %s14, 1
          %s225 = scalar_select %p224, %s14, 1
          %s226 = smul.addr %s225, 2
          %s227 = smul.addr %s226, 8
          %s228 = scalar_lea.vmem %s2, %s227
        $region40: #{upsample_forward.2} parent=35 // pred_fallthru
          _
      $region36: #{upsample_forward.2} parent=5 // pred_fallthru
        _
      %p229 = scmp.le.s32.totalorder 1, %s14
      %p230 = scmp.lt.s32.totalorder %s14, 3
      %p231 = pnand %p229, %p230
      %p232 = pneg %p231
      // Predicated region
      $region41: #{upsample_forward.2} parent=5 // pred_check
        _
      $region42: #{upsample_forward.2} parent=5 // pred_check_branch
        %234 = sbr.rel (%p231) target = $region44
      $region43: #{upsample_forward.2} parent=5 // pred_region
        %s235 = ssub.s32 %s14, 1
        // Predicated region
        $region45: #{upsample_forward.2} parent=43 // pred_check
          %p236 = pneg %p35
        $region46: #{upsample_forward.2} parent=43 // pred_check_branch
          %238 = sbr.rel (%p236) target = $region48
        $region47: #{upsample_forward.2} parent=43 // pred_region
          %240 = dma.done [#allocation5], 16
        $region48: #{upsample_forward.2} parent=43 // pred_fallthru
          _
        // Predicated region
        $region49: #{upsample_forward.2} parent=43 // pred_check
          %p241 = pneg %p103
        $region50: #{upsample_forward.2} parent=43 // pred_check_branch
          %243 = sbr.rel (%p241) target = $region52
        $region51: #{upsample_forward.2} parent=43 // pred_region
          %245 = dma.done [#allocation4], 128
        $region52: #{upsample_forward.2} parent=43 // pred_fallthru
          _
        %246 = sfence
        %p247 = pneg %p35
        %p248 = pneg %p32
        %p249 = pneg %p56
        %p250 = pneg %p53
        %p251 = scmp.lt.s32.totalorder %s19, 1
        %s252 = scalar_select %p251, %s19, 1
        %s253 = smul.addr %s252, 2
        %s254 = smul.addr %s253, 8
        %s255 = scalar_lea.vmem %s2, %s254
        %p256 = pneg %p82
        %p257 = pneg %p79
        %p258 = pneg %p103
        %p259 = pneg %p100
        %p260 = pneg %p124
        %p261 = pneg %p121
        %p262 = pneg %p145
        %p263 = pneg %p142
        %p264 = pneg %p171
        %p265 = pneg %p168
        %p266 = scmp.lt.s32.totalorder %s19, 1
        %s267 = scalar_select %p266, %s19, 1
        %s268 = smul.addr %s267, 4
        %s269 = smul.addr %s268, 4
        %s270 = scalar_lea.vmem %s6, %s269
        %p271 = scmp.lt.s32.totalorder %s19, 1
        %s272 = scalar_select %p271, %s19, 1
        %s273 = smul.addr %s272, 2
        %s274 = smul.addr %s273, 8
        %s275 = scalar_lea.vmem %s2, %s274
        %p276 = scmp.lt.s32.totalorder %s19, 1
        %s277 = scalar_select %p276, %s19, 1
        %s278 = smul.addr %s277, 4
        %s279 = smul.addr %s278, 4
        %s280 = scalar_lea.vmem %s6, %s279
        %s281 = sld [smem:[#allocation3]]
        %s282 = sld [smem:[#allocation3 + $0x1]]
        %v283 = vld [vmem:[%s275] sm:$0xff]
        %v284 = vld [vmem:[%s275 + $0x8] sm:$0xff]
        %v285 = vld [vmem:[%s1] sm:$0xf]
        %vm286 = vcmp.eq.s32.totalorder %v285, 0
        %vm287 = vcmp.eq.s32.totalorder %v285, 15
        %v288 = vld [vmem:[#allocation6] sm:$0xff]
        %vm289 = vcmask 64512
        %v291 = vsel %vm289, %v288, 0
        %293 = vmatpush.msra.mxu0 0.0
        %294 = vmatpush.msra.mxu0 0.0
        %295 = vmatpush.msra.mxu0 0.0
        %296 = vmatpush.msra.mxu0 0.0
        %297 = vmatpush.msra.mxu0 0.0
        %298 = vmatpush.msra.mxu0 0.0
        %299 = vmatpush.msra.mxu0 0.0
        %300 = vmatpush.msra.mxu0 0.0
        %301 = vmatpush.msra.mxu0 0.0
        %302 = vmatpush.msra.mxu0 0.0
        %303 = vmatpush.msra.mxu0 0.0
        %304 = vmatpush.msra.mxu0 0.0
        %305 = vmatpush.msra.mxu0 0.0
        %306 = vmatpush.msra.mxu0 0.0
        %307 = vmatpush.msra.mxu0 0.0
        %308 = vmatpush.msra.mxu0 %v283
        %309 = vmatmul.f32.gmra.mxu0 %v291
        %v310 = vpop.f32.mrf.mxu0
        %v311 = vadd.f32 0.0, %v310
        %312 = vdwg.mxu0
        %313 = vmatpush.msra.mxu0 0.0
        %314 = vmatpush.msra.mxu0 0.0
        %315 = vmatpush.msra.mxu0 0.0
        %316 = vmatpush.msra.mxu0 0.0
        %317 = vmatpush.msra.mxu0 0.0
        %318 = vmatpush.msra.mxu0 0.0
        %319 = vmatpush.msra.mxu0 0.0
        %320 = vmatpush.msra.mxu0 0.0
        %321 = vmatpush.msra.mxu0 0.0
        %322 = vmatpush.msra.mxu0 0.0
        %323 = vmatpush.msra.mxu0 0.0
        %324 = vmatpush.msra.mxu0 0.0
        %325 = vmatpush.msra.mxu0 0.0
        %326 = vmatpush.msra.mxu0 0.0
        %327 = vmatpush.msra.mxu0 0.0
        %328 = vmatpush.msra.mxu0 %v284
        %329 = vmatmul.f32.gmra.mxu0 %v291
        %v330 = vpop.f32.mrf.mxu0
        %v331 = vadd.f32 0.0, %v330
        %332 = vdwg.mxu0
        %vm333 = vcmp.gt.f32.partialorder %v311, 0.0
        %vm334 = vcmp.gt.f32.partialorder %v331, 0.0
        %v335 = vstv %s281
        %v336 = vmul.f32 %v335, %v311
        %v337 = vmul.f32 %v335, %v331
        %v338 = vsel %vm333, %v311, %v336
        %v339 = vsel %vm334, %v331, %v337
        %340 = vst [vmem:[#allocation2] sm:$0xff] %v338
        %341 = vst [vmem:[#allocation2 + $0x8] sm:$0xff] %v339
        %342 = vrot.lane.b32.xlu0 %v338, 127
        %v343 = vpop.permute.xlu0 %342
        %344 = vrot.lane.b32.xlu0 %v339, 127
        %v345 = vpop.permute.xlu0 %344
        %v346 = vlaneseq
        %v347 = vand.u32 %v346, 127
        %vm348 = vcmp.lt.s32.totalorder %v347, 127
        %v349 = vsel %vm348, %v343, %v345
        %v350 = vsel %vm348, %v345, %v343
        %v351 = vsel %vm287, 1, 0
        %v352 = vperm.slane %v351, 0
        %v353 = vperm.slane %v351, 2
        %v354 = vperm.slane %v352, 0
        %v355 = vperm.slane %v353, 0
        %vm356 = vcmp.eq.s32.totalorder %v354, 1
        %vm357 = vcmp.eq.s32.totalorder %v355, 1
        %v358 = vsel %vm356, 0.0, %v349
        %v359 = vsel %vm357, 0.0, %v350
        %360 = vst [vmem:[#allocation2 + $0x10] sm:$0xff] %v358
        %361 = vst [vmem:[#allocation2 + $0x18] sm:$0xff] %v359
        %362 = vrot.lane.b32.xlu0 %v338, 112
        %v363 = vpop.permute.xlu0 %362
        %364 = vrot.lane.b32.xlu0 %v339, 112
        %v365 = vpop.permute.xlu0 %364
        %vm366 = vcmp.lt.s32.totalorder %v347, 112
        %v367 = vsel %vm366, %v363, %v365
        %v368 = vsel %vm366, %v365, %v363
        %v369 = vperm.slane %v351, 1
        %v370 = vperm.slane %v351, 3
        %v371 = vperm.slane %v369, 1
        %v372 = vperm.slane %v370, 1
        %vm373 = vcmp.eq.s32.totalorder %v371, 1
        %vm374 = vcmp.eq.s32.totalorder %v372, 1
        %v375 = vsel %vm373, 0.0, %v367
        %v376 = vsel %vm374, 0.0, %v368
        %377 = vst [vmem:[#allocation2 + $0x20] sm:$0xff] %v375
        %378 = vst [vmem:[#allocation2 + $0x28] sm:$0xff] %v376
        %v379 = vrot.slane %v351, 7
        %v380 = vrot.slane %v379, 2
        %vm381 = vcmp.ne.s32.totalorder %v380, 0
        %vm382 = vmor %vm287, %vm381
        %383 = vrot.lane.b32.xlu0 %v338, 111
        %v384 = vpop.permute.xlu0 %383
        %385 = vrot.lane.b32.xlu0 %v339, 111
        %v386 = vpop.permute.xlu0 %385
        %vm387 = vcmp.lt.s32.totalorder %v347, 111
        %v388 = vsel %vm387, %v384, %v386
        %v389 = vsel %vm387, %v386, %v384
        %v390 = vsel %vm382, 1, 0
        %v391 = vperm.slane %v390, 0
        %v392 = vperm.slane %v390, 2
        %v393 = vperm.slane %v391, 0
        %v394 = vperm.slane %v392, 0
        %vm395 = vcmp.eq.s32.totalorder %v393, 1
        %vm396 = vcmp.eq.s32.totalorder %v394, 1
        %v397 = vsel %vm395, 0.0, %v388
        %v398 = vsel %vm396, 0.0, %v389
        %399 = vst [vmem:[#allocation2 + $0x30] sm:$0xff] %v397
        %400 = vst [vmem:[#allocation2 + $0x38] sm:$0xff] %v398
        %v401 = vld [vmem:[%s4] sm:$0xff]
        %v402 = vld [vmem:[%s4 + $0x8] sm:$0xff]
        %v403 = vld [vmem:[%s4 + $0x10] sm:$0xff]
        %v404 = vld [vmem:[%s4 + $0x18] sm:$0xff]
        %v405 = vld [vmem:[#allocation2] sm:$0xff]
        %v406 = vld [vmem:[#allocation2 + $0x8] sm:$0xff]
        %v407 = vld [vmem:[#allocation2 + $0x10] sm:$0xff]
        %v408 = vld [vmem:[#allocation2 + $0x18] sm:$0xff]
        %v409 = vld [vmem:[#allocation2 + $0x20] sm:$0xff]
        %v410 = vld [vmem:[#allocation2 + $0x28] sm:$0xff]
        %v411 = vld [vmem:[#allocation2 + $0x30] sm:$0xff]
        %v412 = vld [vmem:[#allocation2 + $0x38] sm:$0xff]
        %vm413 = vcmask 261120
        %v415 = vsel %vm413, %v401, 0
        %v418 = vsel %vm413, %v402, 0
        %v421 = vsel %vm413, %v403, 0
        %v424 = vsel %vm413, %v404, 0
        %426 = vmatpush.msra.mxu0 0.0
        %427 = vmatpush.msra.mxu0 0.0
        %428 = vmatpush.msra.mxu0 0.0
        %429 = vmatpush.msra.mxu0 0.0
        %430 = vmatpush.msra.mxu0 0.0
        %431 = vmatpush.msra.mxu0 0.0
        %432 = vmatpush.msra.mxu0 0.0
        %433 = vmatpush.msra.mxu0 0.0
        %434 = vmatpush.msra.mxu0 0.0
        %435 = vmatpush.msra.mxu0 0.0
        %436 = vmatpush.msra.mxu0 0.0
        %437 = vmatpush.msra.mxu0 0.0
        %438 = vmatpush.msra.mxu0 %v411
        %439 = vmatpush.msra.mxu0 %v409
        %440 = vmatpush.msra.mxu0 %v407
        %441 = vmatpush.msra.mxu0 %v405
        %442 = vmatmul.f32.gmra.mxu0 %v415
        %v443 = vpop.f32.mrf.mxu0
        %v444 = vadd.f32 0.0, %v443
        %445 = vmatmul.f32.gmra.mxu0 %v418
        %v446 = vpop.f32.mrf.mxu0
        %v447 = vadd.f32 0.0, %v446
        %448 = vmatmul.f32.gmra.mxu0 %v421
        %v449 = vpop.f32.mrf.mxu0
        %v450 = vadd.f32 0.0, %v449
        %451 = vmatmul.f32.gmra.mxu0 %v424
        %v452 = vpop.f32.mrf.mxu0
        %v453 = vadd.f32 0.0, %v452
        %454 = vdwg.mxu0
        %455 = vmatpush.msra.mxu0 0.0
        %456 = vmatpush.msra.mxu0 0.0
        %457 = vmatpush.msra.mxu0 0.0
        %458 = vmatpush.msra.mxu0 0.0
        %459 = vmatpush.msra.mxu0 0.0
        %460 = vmatpush.msra.mxu0 0.0
        %461 = vmatpush.msra.mxu0 0.0
        %462 = vmatpush.msra.mxu0 0.0
        %463 = vmatpush.msra.mxu0 0.0
        %464 = vmatpush.msra.mxu0 0.0
        %465 = vmatpush.msra.mxu0 0.0
        %466 = vmatpush.msra.mxu0 0.0
        %467 = vmatpush.msra.mxu0 %v412
        %468 = vmatpush.msra.mxu0 %v410
        %469 = vmatpush.msra.mxu0 %v408
        %470 = vmatpush.msra.mxu0 %v406
        %471 = vmatmul.f32.gmra.mxu0 %v415
        %v472 = vpop.f32.mrf.mxu0
        %v473 = vadd.f32 0.0, %v472
        %474 = vmatmul.f32.gmra.mxu0 %v418
        %v475 = vpop.f32.mrf.mxu0
        %v476 = vadd.f32 0.0, %v475
        %477 = vmatmul.f32.gmra.mxu0 %v421
        %v478 = vpop.f32.mrf.mxu0
        %v479 = vadd.f32 0.0, %v478
        %480 = vmatmul.f32.gmra.mxu0 %v424
        %v481 = vpop.f32.mrf.mxu0
        %v482 = vadd.f32 0.0, %v481
        %483 = vdwg.mxu0
        %vm484 = vcmp.gt.f32.partialorder %v444, 0.0
        %vm485 = vcmp.gt.f32.partialorder %v473, 0.0
        %vm486 = vcmp.gt.f32.partialorder %v447, 0.0
        %vm487 = vcmp.gt.f32.partialorder %v476, 0.0
        %vm488 = vcmp.gt.f32.partialorder %v450, 0.0
        %vm489 = vcmp.gt.f32.partialorder %v479, 0.0
        %vm490 = vcmp.gt.f32.partialorder %v453, 0.0
        %vm491 = vcmp.gt.f32.partialorder %v482, 0.0
        %v492 = vstv %s282
        %v493 = vmul.f32 %v492, %v444
        %v494 = vmul.f32 %v492, %v473
        %v495 = vmul.f32 %v492, %v447
        %v496 = vmul.f32 %v492, %v476
        %v497 = vmul.f32 %v492, %v450
        %v498 = vmul.f32 %v492, %v479
        %v499 = vmul.f32 %v492, %v453
        %v500 = vmul.f32 %v492, %v482
        %v501 = vsel %vm484, %v444, %v493
        %v502 = vsel %vm485, %v473, %v494
        %v503 = vsel %vm486, %v447, %v495
        %v504 = vsel %vm487, %v476, %v496
        %v505 = vsel %vm488, %v450, %v497
        %v506 = vsel %vm489, %v479, %v498
        %v507 = vsel %vm490, %v453, %v499
        %v508 = vsel %vm491, %v482, %v500
        %509 = vst [vmem:[#allocation2] sm:$0xff] %v501
        %510 = vst [vmem:[#allocation2 + $0x8] sm:$0xff] %v502
        %511 = vst [vmem:[#allocation2 + $0x10] sm:$0xff] %v503
        %512 = vst [vmem:[#allocation2 + $0x18] sm:$0xff] %v504
        %513 = vst [vmem:[#allocation2 + $0x20] sm:$0xff] %v505
        %514 = vst [vmem:[#allocation2 + $0x28] sm:$0xff] %v506
        %515 = vst [vmem:[#allocation2 + $0x30] sm:$0xff] %v507
        %516 = vst [vmem:[#allocation2 + $0x38] sm:$0xff] %v508
        %517 = vrot.lane.b32.xlu0 %v283, 16
        %v518 = vpop.permute.xlu0 %517
        %519 = vrot.lane.b32.xlu0 %v284, 16
        %v520 = vpop.permute.xlu0 %519
        %vm521 = vcmp.lt.s32.totalorder %v347, 16
        %v522 = vsel %vm521, %v518, %v520
        %v523 = vsel %vm521, %v520, %v518
        %v524 = vsel %vm286, 1, 0
        %v525 = vperm.slane %v524, 1
        %v526 = vperm.slane %v524, 3
        %v527 = vperm.slane %v525, 1
        %v528 = vperm.slane %v526, 1
        %vm529 = vcmp.eq.s32.totalorder %v527, 1
        %vm530 = vcmp.eq.s32.totalorder %v528, 1
        %v531 = vsel %vm529, %v283, %v523
        %v532 = vsel %vm530, %v284, %v522
        %533 = vrot.lane.b32.xlu0 %v283, 112
        %v534 = vpop.permute.xlu0 %533
        %535 = vrot.lane.b32.xlu0 %v284, 112
        %v536 = vpop.permute.xlu0 %535
        %v537 = vsel %vm366, %v534, %v536
        %v538 = vsel %vm366, %v536, %v534
        %v539 = vsel %vm373, %v283, %v537
        %v540 = vsel %vm374, %v284, %v538
        %541 = vrot.lane.b32.xlu0 %v283, 1
        %v542 = vpop.permute.xlu0 %541
        %543 = vrot.lane.b32.xlu0 %v284, 1
        %v544 = vpop.permute.xlu0 %543
        %vm545 = vcmp.lt.s32.totalorder %v347, 1
        %v546 = vsel %vm545, %v542, %v544
        %v547 = vsel %vm545, %v544, %v542
        %v548 = vperm.slane %v524, 0
        %v549 = vperm.slane %v524, 2
        %v550 = vperm.slane %v548, 0
        %v551 = vperm.slane %v549, 0
        %vm552 = vcmp.eq.s32.totalorder %v550, 1
        %vm553 = vcmp.eq.s32.totalorder %v551, 1
        %v554 = vsel %vm552, %v283, %v547
        %v555 = vsel %vm553, %v284, %v546
        %556 = vrot.lane.b32.xlu0 %v283, 127
        %v557 = vpop.permute.xlu0 %556
        %558 = vrot.lane.b32.xlu0 %v284, 127
        %v559 = vpop.permute.xlu0 %558
        %v560 = vsel %vm348, %v557, %v559
        %v561 = vsel %vm348, %v559, %v557
        %v562 = vsel %vm356, %v283, %v560
        %v563 = vsel %vm357, %v284, %v561
        %v564 = vmul.f32 %v283, 0.5625
        %v565 = vmul.f32 %v284, 0.5625
        %v566 = vmul.f32 %v531, 0.1875
        %v567 = vmul.f32 %v532, 0.1875
        %v568 = vadd.f32 %v564, %v566
        %v569 = vadd.f32 %v565, %v567
        %v570 = vmul.f32 %v554, 0.1875
        %v571 = vmul.f32 %v555, 0.1875
        %v572 = vadd.f32 %v568, %v570
        %v573 = vadd.f32 %v569, %v571
        %574 = vrot.lane.b32.xlu0 %v531, 1
        %v575 = vpop.permute.xlu0 %574
        %576 = vrot.lane.b32.xlu0 %v532, 1
        %v577 = vpop.permute.xlu0 %576
        %v578 = vsel %vm545, %v575, %v577
        %v579 = vsel %vm545, %v577, %v575
        %v580 = vsel %vm552, %v531, %v579
        %v581 = vsel %vm553, %v532, %v578
        %v582 = vmul.f32 %v580, 0.0625
        %v583 = vmul.f32 %v581, 0.0625
        %v584 = vadd.f32 %v572, %v582
        %v585 = vadd.f32 %v573, %v583
        %586 = vst [vmem:[#allocation2 + $0x40] sm:$0xff] %v584
        %587 = vst [vmem:[#allocation2 + $0x48] sm:$0xff] %v585
        %v588 = vmul.f32 %v562, 0.1875
        %v589 = vmul.f32 %v563, 0.1875
        %v590 = vadd.f32 %v568, %v588
        %v591 = vadd.f32 %v569, %v589
        %592 = vrot.lane.b32.xlu0 %v531, 127
        %v593 = vpop.permute.xlu0 %592
        %594 = vrot.lane.b32.xlu0 %v532, 127
        %v595 = vpop.permute.xlu0 %594
        %v596 = vsel %vm348, %v593, %v595
        %v597 = vsel %vm348, %v595, %v593
        %v598 = vsel %vm356, %v531, %v596
        %v599 = vsel %vm357, %v532, %v597
        %v600 = vmul.f32 %v598, 0.0625
        %v601 = vmul.f32 %v599, 0.0625
        %v602 = vadd.f32 %v590, %v600
        %v603 = vadd.f32 %v591, %v601
        %604 = vst [vmem:[#allocation2 + $0x50] sm:$0xff] %v602
        %605 = vst [vmem:[#allocation2 + $0x58] sm:$0xff] %v603
        %v606 = vmul.f32 %v539, 0.1875
        %v607 = vmul.f32 %v540, 0.1875
        %v608 = vadd.f32 %v564, %v606
        %v609 = vadd.f32 %v565, %v607
        %v610 = vadd.f32 %v608, %v570
        %v611 = vadd.f32 %v609, %v571
        %612 = vrot.lane.b32.xlu0 %v539, 1
        %v613 = vpop.permute.xlu0 %612
        %614 = vrot.lane.b32.xlu0 %v540, 1
        %v615 = vpop.permute.xlu0 %614
        %v616 = vsel %vm545, %v613, %v615
        %v617 = vsel %vm545, %v615, %v613
        %v618 = vsel %vm552, %v539, %v617
        %v619 = vsel %vm553, %v540, %v616
        %v620 = vmul.f32 %v618, 0.0625
        %v621 = vmul.f32 %v619, 0.0625
        %v622 = vadd.f32 %v610, %v620
        %v623 = vadd.f32 %v611, %v621
        %624 = vst [vmem:[#allocation2 + $0x60] sm:$0xff] %v622
        %625 = vst [vmem:[#allocation2 + $0x68] sm:$0xff] %v623
        %v626 = vadd.f32 %v608, %v588
        %v627 = vadd.f32 %v609, %v589
        %628 = vrot.lane.b32.xlu0 %v539, 127
        %v629 = vpop.permute.xlu0 %628
        %630 = vrot.lane.b32.xlu0 %v540, 127
        %v631 = vpop.permute.xlu0 %630
        %v632 = vsel %vm348, %v629, %v631
        %v633 = vsel %vm348, %v631, %v629
        %v634 = vsel %vm356, %v539, %v632
        %v635 = vsel %vm357, %v540, %v633
        %v636 = vmul.f32 %v634, 0.0625
        %v637 = vmul.f32 %v635, 0.0625
        %v638 = vadd.f32 %v626, %v636
        %v639 = vadd.f32 %v627, %v637
        %640 = vst [vmem:[#allocation2 + $0x70] sm:$0xff] %v638
        %641 = vst [vmem:[#allocation2 + $0x78] sm:$0xff] %v639
        %v642 = vld [vmem:[%s5] sm:$0xff]
        %v643 = vld [vmem:[%s5 + $0x8] sm:$0xff]
        %v644 = vld [vmem:[#allocation2] sm:$0xff]
        %v645 = vld [vmem:[#allocation2 + $0x8] sm:$0xff]
        %v646 = vld [vmem:[#allocation2 + $0x10] sm:$0xff]
        %v647 = vld [vmem:[#allocation2 + $0x18] sm:$0xff]
        %v648 = vld [vmem:[#allocation2 + $0x20] sm:$0xff]
        %v649 = vld [vmem:[#allocation2 + $0x28] sm:$0xff]
        %v650 = vld [vmem:[#allocation2 + $0x30] sm:$0xff]
        %v651 = vld [vmem:[#allocation2 + $0x38] sm:$0xff]
        %v652 = vld [vmem:[#allocation2 + $0x40] sm:$0xff]
        %v653 = vld [vmem:[#allocation2 + $0x48] sm:$0xff]
        %v654 = vld [vmem:[#allocation2 + $0x50] sm:$0xff]
        %v655 = vld [vmem:[#allocation2 + $0x58] sm:$0xff]
        %v656 = vld [vmem:[#allocation2 + $0x60] sm:$0xff]
        %v657 = vld [vmem:[#allocation2 + $0x68] sm:$0xff]
        %v658 = vld [vmem:[#allocation2 + $0x70] sm:$0xff]
        %v659 = vld [vmem:[#allocation2 + $0x78] sm:$0xff]
        %vm660 = vcmask 523264
        %v662 = vsel %vm660, %v642, 0
        %v665 = vsel %vm660, %v643, 0
        %667 = vmatpush.msra.mxu0 0.0
        %668 = vmatpush.msra.mxu0 0.0
        %669 = vmatpush.msra.mxu0 0.0
        %670 = vmatpush.msra.mxu0 0.0
        %671 = vmatpush.msra.mxu0 0.0
        %672 = vmatpush.msra.mxu0 0.0
        %673 = vmatpush.msra.mxu0 0.0
        %674 = vmatpush.msra.mxu0 0.0
        %675 = vmatpush.msra.mxu0 %v658
        %676 = vmatpush.msra.mxu0 %v656
        %677 = vmatpush.msra.mxu0 %v654
        %678 = vmatpush.msra.mxu0 %v652
        %679 = vmatpush.msra.mxu0 %v650
        %680 = vmatpush.msra.mxu0 %v648
        %681 = vmatpush.msra.mxu0 %v646
        %682 = vmatpush.msra.mxu0 %v644
        %683 = vmatmul.f32.gmra.mxu0 %v662
        %v684 = vpop.f32.mrf.mxu0
        %v685 = vadd.f32 0.0, %v684
        %686 = vmatmul.f32.gmra.mxu0 %v665
        %v687 = vpop.f32.mrf.mxu0
        %v688 = vadd.f32 0.0, %v687
        %689 = vdwg.mxu0
        %690 = vmatpush.msra.mxu0 0.0
        %691 = vmatpush.msra.mxu0 0.0
        %692 = vmatpush.msra.mxu0 0.0
        %693 = vmatpush.msra.mxu0 0.0
        %694 = vmatpush.msra.mxu0 0.0
        %695 = vmatpush.msra.mxu0 0.0
        %696 = vmatpush.msra.mxu0 0.0
        %697 = vmatpush.msra.mxu0 0.0
        %698 = vmatpush.msra.mxu0 %v659
        %699 = vmatpush.msra.mxu0 %v657
        %700 = vmatpush.msra.mxu0 %v655
        %701 = vmatpush.msra.mxu0 %v653
        %702 = vmatpush.msra.mxu0 %v651
        %703 = vmatpush.msra.mxu0 %v649
        %704 = vmatpush.msra.mxu0 %v647
        %705 = vmatpush.msra.mxu0 %v645
        %706 = vmatmul.f32.gmra.mxu0 %v662
        %v707 = vpop.f32.mrf.mxu0
        %v708 = vadd.f32 0.0, %v707
        %709 = vmatmul.f32.gmra.mxu0 %v665
        %v710 = vpop.f32.mrf.mxu0
        %v711 = vadd.f32 0.0, %v710
        %712 = vdwg.mxu0
        %v713 = vpack.c.bf16 %v708, %v685
        %v714 = vpack.c.bf16 %v711, %v688
        %715 = vst [vmem:[%s280] sm:$0xff] %v713
        %716 = vst [vmem:[%s280 + $0x8] sm:$0xff] %v714
        %p717 = scmp.lt.s32.totalorder %s19, 1
        %s718 = scalar_select %p717, %s19, 1
        %s719 = smul.addr %s718, 4
        %s720 = smul.addr %s719, 4
        %s721 = scalar_lea.vmem %s6, %s720
        // Predicated region
        $region53: #{upsample_forward.2} parent=43 // pred_check
          %p722 = pneg %p168
        $region54: #{upsample_forward.2} parent=43 // pred_check_branch
          %724 = sbr.rel (%p722) target = $region56
        $region55: #{upsample_forward.2} parent=43 // pred_region
          _
        $region56: #{upsample_forward.2} parent=43 // pred_fallthru
          _
      $region44: #{upsample_forward.2} parent=5 // pred_fallthru
        _
      %p725 = scmp.le.s32.totalorder 2, %s14
      // Predicated region
      $region57: #{upsample_forward.2} parent=5 // pred_check
        %p726 = pneg %p725
      $region58: #{upsample_forward.2} parent=5 // pred_check_branch
        %728 = sbr.rel (%p726) target = $region60
      $region59: #{upsample_forward.2} parent=5 // pred_region
        %s729 = ssub.s32 %s14, 2
        // Predicated region
        $region61: #{upsample_forward.2} parent=59 // pred_check
          %p730 = pneg %p174
        $region62: #{upsample_forward.2} parent=59 // pred_check_branch
          %732 = sbr.rel (%p730) target = $region64
        $region63: #{upsample_forward.2} parent=59 // pred_region
          %p733 = scmp.lt.s32.totalorder %s20, 1
          %s734 = scalar_select %p733, %s20, 1
          %s735 = smul.addr %s734, 4
          %s736 = smul.addr %s735, 4
          %s737 = scalar_lea.vmem %s6, %s736
        $region64: #{upsample_forward.2} parent=59 // pred_fallthru
          _
      $region60: #{upsample_forward.2} parent=5 // pred_fallthru
        _
    $region6: #{upsample_forward.2} parent=1 // loop_footer
      %s18 = sadd.s32 1, %s14
    $region7: #{upsample_forward.2} parent=1 // loop_footer_branch
      %13 = sbr.rel target = $region3
    $region8: #{upsample_forward.2} parent=1 // loop_exit
      _
    %738 = vsyncpa [#allocation4], 1
    %s739 = scalar_lea.sflag [#allocation4], 1
    %740 = vsyncpa %s739, 1
    %741 = vsyncpa [#allocation5], 1
    %s742 = scalar_lea.sflag [#allocation5], 1
    %743 = vsyncpa %s742, 1

// kernel: upsample_forward.3
$region0: #{upsample_forward.3}
  #allocation0 [shape = 'u32[]', space=smem, size = 0x4, offset = 0x4, fixed_abs, tag = 'smem constant byte address 0x4 - core index']
  #allocation1 [shape = 'u32[72,128]{1,0:T(1,128)}', space=vmem, size = 0x9000, scoped, tag = 'internal scratch']
  #allocation2 [shape = 'f32[32,1024]{1,0:T(8,128)}', space=vmem, size = 0x20000, scoped, tag = 'scratch operand']
  %s0 = inlined_call_operand.vmem [shape: f32[2], index: 0, kind: input, shape index: {}]
  %s1 = inlined_call_operand.vmem [shape: s32[2,1024], index: 1, kind: input, shape index: {}]
  %s2 = inlined_call_operand.vmem [shape: bf16[2,4,1024], index: 2, kind: input, shape index: {}]
  %s3 = inlined_call_operand.hbm [shape: f32[4,4], index: 3, kind: input, shape index: {}]
  %s4 = inlined_call_operand.vmem [shape: f32[16,16], index: 4, kind: input, shape index: {}]
  %s5 = inlined_call_operand.vmem [shape: f32[8,32], index: 5, kind: input, shape index: {}]
  %s6 = inlined_call_operand.vmem [shape: bf16[2,8,1024], index: 6, kind: output, shape index: {}]
  %s7 = sld [smem:[#allocation0]]
  $region65: #{upsample_forward.3} parent=0
    _
  %s9 = ssub.s32 1, %s7
  %s10 = scalar_select 0, %s9, %s7
  $region1: #{upsample_forward.3} parent=0
    #allocation3 [shape = 'u8[512]{0}', space=smem, size = 0x200, scoped, tag = 'input window, operand 0, single buffered']
    #allocation4 [shape = 's32[2]{0}', space=sflag, size = 0x8, scoped, tag = 'scoped memory for upsample_forward.3']
    #allocation5 [shape = 's32[2]{0}', space=sflag, size = 0x8, scoped, tag = 'scoped memory for upsample_forward.3']
    #allocation6 [shape = 'u8[2048]{0}', space=vmem, size = 0x800, scoped, tag = 'input window, operand 3, single buffered']
    %11 = vsyncpa [#allocation5], 0
    %12 = vsyncpa [#allocation4], 0
    loop: start=0, step=1, limit=4
    $region2: #{upsample_forward.3} parent=1 // loop_pre_header
      _
    $region3: #{upsample_forward.3} parent=1 // loop_header
      %s14 = sphi 0, %s18
      %p15 = scmp.ge.s32.totalorder %s14, 4
      %s22 = sphi 0, %s22
      %s24 = sphi 0, %s22
      %s25 = sphi 0, %s24
      %s39 = sphi 0, %s25
      %s43 = sphi 0, %s43
      %s45 = sphi 0, %s43
      %s46 = sphi 0, %s45
      %s60 = sphi 0, %s46
      %s66 = sphi 0, %s68
      %s69 = sphi 0, %s66
      %s70 = sphi 0, %s69
      %s86 = sphi 0, %s70
      %s90 = sphi 0, %s90
      %s92 = sphi 0, %s90
      %s93 = sphi 0, %s92
      %s107 = sphi 0, %s93
      %s111 = sphi 0, %s111
      %s113 = sphi 0, %s111
      %s114 = sphi 0, %s113
      %s128 = sphi 0, %s114
      %s132 = sphi 0, %s132
      %s134 = sphi 0, %s132
      %s135 = sphi 0, %s134
      %s149 = sphi 0, %s135
      %s155 = sphi 0, %s157
      %s158 = sphi 0, %s155
      %s159 = sphi 0, %s158
      %s175 = sphi 0, %s159
    $region4: #{upsample_forward.3} parent=1 // loop_header_branch
      %17 = sbr.rel (%p15) target = $region8
    $region5: #{upsample_forward.3} parent=1 // loop_body
      %s19 = ssub.s32 %s14, 1
      %s20 = ssub.s32 %s14, 2
      %s21 = sadd.s32 %s14, 1
      %s23 = sadd.s32 %s22, 1
      %p26 = scmp.eq.s32.totalorder %s14, 1
      %p27 = scmp.ne.s32.totalorder %s22, %s24
      %p28 = scmp.eq.s32.totalorder %s14, 0
      %p29 = por %p27, %p28
      %p30 = scmp.ne.s32.totalorder %s22, %s24
      %p31 = scmp.eq.s32.totalorder %s19, 1
      %p32 = por %p30, %p31
      %p33 = scmp.ne.s32.totalorder %s24, %s25
      %p34 = scmp.eq.s32.totalorder %s19, 0
      %p35 = por %p33, %p34
      %p36 = scmp.ne.s32.totalorder %s24, %s25
      %p37 = scmp.eq.s32.totalorder %s20, 1
      %p38 = por %p36, %p37
      %p40 = scmp.ne.s32.totalorder %s25, %s39
      %p41 = scmp.eq.s32.totalorder %s20, 0
      %p42 = por %p40, %p41
      %s44 = sadd.s32 %s43, 1
      %p47 = scmp.eq.s32.totalorder %s14, 1
      %p48 = scmp.ne.s32.totalorder %s43, %s45
      %p49 = scmp.eq.s32.totalorder %s14, 0
      %p50 = por %p48, %p49
      %p51 = scmp.ne.s32.totalorder %s43, %s45
      %p52 = scmp.eq.s32.totalorder %s19, 1
      %p53 = por %p51, %p52
      %p54 = scmp.ne.s32.totalorder %s45, %s46
      %p55 = scmp.eq.s32.totalorder %s19, 0
      %p56 = por %p54, %p55
      %p57 = scmp.ne.s32.totalorder %s45, %s46
      %p58 = scmp.eq.s32.totalorder %s20, 1
      %p59 = por %p57, %p58
      %p61 = scmp.ne.s32.totalorder %s46, %s60
      %p62 = scmp.eq.s32.totalorder %s20, 0
      %p63 = por %p61, %p62
      %s64 = ssub.s32 %s14, %s21
      %p65 = scmp.eq.s32.totalorder %s64, 0
      %s67 = sadd.s32 %s66, 1
      %s68 = scalar_select %p65, %s66, %s67
      %p71 = pneg %p65
      %p72 = scmp.eq.s32.totalorder %s14, 1
      %p73 = por %p71, %p72
      %p74 = scmp.ne.s32.totalorder %s66, %s69
      %p75 = scmp.eq.s32.totalorder %s14, 0
      %p76 = por %p74, %p75
      %p77 = scmp.ne.s32.totalorder %s66, %s69
      %p78 = scmp.eq.s32.totalorder %s19, 1
      %p79 = por %p77, %p78
      %p80 = scmp.ne.s32.totalorder %s69, %s70
      %p81 = scmp.eq.s32.totalorder %s19, 0
      %p82 = por %p80, %p81
      %p83 = scmp.ne.s32.totalorder %s69, %s70
      %p84 = scmp.eq.s32.totalorder %s20, 1
      %p85 = por %p83, %p84
      %p87 = scmp.ne.s32.totalorder %s70, %s86
      %p88 = scmp.eq.s32.totalorder %s20, 0
      %p89 = por %p87, %p88
      %s91 = sadd.s32 %s90, 1
      %p94 = scmp.eq.s32.totalorder %s14, 1
      %p95 = scmp.ne.s32.totalorder %s90, %s92
      %p96 = scmp.eq.s32.totalorder %s14, 0
      %p97 = por %p95, %p96
      %p98 = scmp.ne.s32.totalorder %s90, %s92
      %p99 = scmp.eq.s32.totalorder %s19, 1
      %p100 = por %p98, %p99
      %p101 = scmp.ne.s32.totalorder %s92, %s93
      %p102 = scmp.eq.s32.totalorder %s19, 0
      %p103 = por %p101, %p102
      %p104 = scmp.ne.s32.totalorder %s92, %s93
      %p105 = scmp.eq.s32.totalorder %s20, 1
      %p106 = por %p104, %p105
      %p108 = scmp.ne.s32.totalorder %s93, %s107
      %p109 = scmp.eq.s32.totalorder %s20, 0
      %p110 = por %p108, %p109
      %s112 = sadd.s32 %s111, 1
      %p115 = scmp.eq.s32.totalorder %s14, 1
      %p116 = scmp.ne.s32.totalorder %s111, %s113
      %p117 = scmp.eq.s32.totalorder %s14, 0
      %p118 = por %p116, %p117
      %p119 = scmp.ne.s32.totalorder %s111, %s113
      %p120 = scmp.eq.s32.totalorder %s19, 1
      %p121 = por %p119, %p120
      %p122 = scmp.ne.s32.totalorder %s113, %s114
      %p123 = scmp.eq.s32.totalorder %s19, 0
      %p124 = por %p122, %p123
      %p125 = scmp.ne.s32.totalorder %s113, %s114
      %p126 = scmp.eq.s32.totalorder %s20, 1
      %p127 = por %p125, %p126
      %p129 = scmp.ne.s32.totalorder %s114, %s128
      %p130 = scmp.eq.s32.totalorder %s20, 0
      %p131 = por %p129, %p130
      %s133 = sadd.s32 %s132, 1
      %p136 = scmp.eq.s32.totalorder %s14, 1
      %p137 = scmp.ne.s32.totalorder %s132, %s134
      %p138 = scmp.eq.s32.totalorder %s14, 0
      %p139 = por %p137, %p138
      %p140 = scmp.ne.s32.totalorder %s132, %s134
      %p141 = scmp.eq.s32.totalorder %s19, 1
      %p142 = por %p140, %p141
      %p143 = scmp.ne.s32.totalorder %s134, %s135
      %p144 = scmp.eq.s32.totalorder %s19, 0
      %p145 = por %p143, %p144
      %p146 = scmp.ne.s32.totalorder %s134, %s135
      %p147 = scmp.eq.s32.totalorder %s20, 1
      %p148 = por %p146, %p147
      %p150 = scmp.ne.s32.totalorder %s135, %s149
      %p151 = scmp.eq.s32.totalorder %s20, 0
      %p152 = por %p150, %p151
      %s153 = ssub.s32 %s14, %s21
      %p154 = scmp.eq.s32.totalorder %s153, 0
      %s156 = sadd.s32 %s155, 1
      %s157 = scalar_select %p154, %s155, %s156
      %p160 = pneg %p154
      %p161 = scmp.eq.s32.totalorder %s14, 1
      %p162 = por %p160, %p161
      %p163 = scmp.ne.s32.totalorder %s155, %s158
      %p164 = scmp.eq.s32.totalorder %s14, 0
      %p165 = por %p163, %p164
      %p166 = scmp.ne.s32.totalorder %s155, %s158
      %p167 = scmp.eq.s32.totalorder %s19, 1
      %p168 = por %p166, %p167
      %p169 = scmp.ne.s32.totalorder %s158, %s159
      %p170 = scmp.eq.s32.totalorder %s19, 0
      %p171 = por %p169, %p170
      %p172 = scmp.ne.s32.totalorder %s158, %s159
      %p173 = scmp.eq.s32.totalorder %s20, 1
      %p174 = por %p172, %p173
      %p176 = scmp.ne.s32.totalorder %s159, %s175
      %p177 = scmp.eq.s32.totalorder %s20, 0
      %p178 = por %p176, %p177
      %p179 = scmp.le.s32.totalorder 1, %s14
      %p180 = scmp.lt.s32.totalorder %s14, 3
      %p181 = pnand %p179, %p180
      %p182 = pneg %p181
      // Predicated region
      $region9: #{upsample_forward.3} parent=5 // pred_check
        _
      $region10: #{upsample_forward.3} parent=5 // pred_check_branch
        %184 = sbr.rel (%p181) target = $region12
      $region11: #{upsample_forward.3} parent=5 // pred_region
        %s185 = ssub.s32 %s14, 1
        // Predicated region
        $region13: #{upsample_forward.3} parent=11 // pred_check
          %p186 = pneg %p35
        $region14: #{upsample_forward.3} parent=11 // pred_check_branch
          %188 = sbr.rel (%p186) target = $region16
        $region15: #{upsample_forward.3} parent=11 // pred_region
          %190 = vsyncadd [#allocation5], 0
          %s192 = sshll.u32 %s0, 4
          %s193 = int_to_ptr.vmem [resolvable:$true] %s192
          %195 = dma.vmem_to_smem %s193, 16, [#allocation3], [#allocation5]
        $region16: #{upsample_forward.3} parent=11 // pred_fallthru
          _
        // Predicated region
        $region17: #{upsample_forward.3} parent=11 // pred_check
          %p196 = pneg %p56
        $region18: #{upsample_forward.3} parent=11 // pred_check_branch
          %198 = sbr.rel (%p196) target = $region20
        $region19: #{upsample_forward.3} parent=11 // pred_region
          _
        $region20: #{upsample_forward.3} parent=11 // pred_fallthru
          _
        // Predicated region
        $region21: #{upsample_forward.3} parent=11 // pred_check
          %p199 = pneg %p103
        $region22: #{upsample_forward.3} parent=11 // pred_check_branch
          %201 = sbr.rel (%p199) target = $region24
        $region23: #{upsample_forward.3} parent=11 // pred_region
          %203 = vsyncadd [#allocation4], 0
          %s205 = sshll.u32 %s3, 4
          %s206 = int_to_ptr.hbm [resolvable:$true] %s205
          %s207 = sshll.u32 [#allocation6], 4
          %s208 = int_to_ptr.vmem [resolvable:$true] %s207
          %210 = dma.hbm_to_vmem [thread:$0]  %s206, 64, %s208, [#allocation4]
        $region24: #{upsample_forward.3} parent=11 // pred_fallthru
          _
        // Predicated region
        $region25: #{upsample_forward.3} parent=11 // pred_check
          %p211 = pneg %p124
        $region26: #{upsample_forward.3} parent=11 // pred_check_branch
          %213 = sbr.rel (%p211) target = $region28
        $region27: #{upsample_forward.3} parent=11 // pred_region
          _
        $region28: #{upsample_forward.3} parent=11 // pred_fallthru
          _
        // Predicated region
        $region29: #{upsample_forward.3} parent=11 // pred_check
          %p214 = pneg %p145
        $region30: #{upsample_forward.3} parent=11 // pred_check_branch
          %216 = sbr.rel (%p214) target = $region32
        $region31: #{upsample_forward.3} parent=11 // pred_region
          _
        $region32: #{upsample_forward.3} parent=11 // pred_fallthru
          _
      $region12: #{upsample_forward.3} parent=5 // pred_fallthru
        _
      %p217 = scmp.lt.s32.totalorder %s14, 2
      // Predicated region
      $region33: #{upsample_forward.3} parent=5 // pred_check
        %p218 = pneg %p217
      $region34: #{upsample_forward.3} parent=5 // pred_check_branch
        %220 = sbr.rel (%p218) target = $region36
      $region35: #{upsample_forward.3} parent=5 // pred_region
        // Predicated region
        $region37: #{upsample_forward.3} parent=35 // pred_check
          %p221 = pneg %p76
        $region38: #{upsample_forward.3} parent=35 // pred_check_branch
          %223 = sbr.rel (%p221) target = $region40
        $region39: #{upsample_forward.3} parent=35 // pred_region
          %p224 = scmp.lt.s32.totalorder %s14, 1
          %s225 = scalar_select %p224, %s14, 1
          %s226 = smul.addr %s225, 8
          %s227 = smul.addr %s226, 2
          %s228 = scalar_lea.vmem %s2, %s227
        $region40: #{upsample_forward.3} parent=35 // pred_fallthru
          _
      $region36: #{upsample_forward.3} parent=5 // pred_fallthru
        _
      %p229 = scmp.le.s32.totalorder 1, %s14
      %p230 = scmp.lt.s32.totalorder %s14, 3
      %p231 = pnand %p229, %p230
      %p232 = pneg %p231
      // Predicated region
      $region41: #{upsample_forward.3} parent=5 // pred_check
        _
      $region42: #{upsample_forward.3} parent=5 // pred_check_branch
        %234 = sbr.rel (%p231) target = $region44
      $region43: #{upsample_forward.3} parent=5 // pred_region
        %s235 = ssub.s32 %s14, 1
        // Predicated region
        $region45: #{upsample_forward.3} parent=43 // pred_check
          %p236 = pneg %p35
        $region46: #{upsample_forward.3} parent=43 // pred_check_branch
          %238 = sbr.rel (%p236) target = $region48
        $region47: #{upsample_forward.3} parent=43 // pred_region
          %240 = dma.done [#allocation5], 16
        $region48: #{upsample_forward.3} parent=43 // pred_fallthru
          _
        // Predicated region
        $region49: #{upsample_forward.3} parent=43 // pred_check
          %p241 = pneg %p103
        $region50: #{upsample_forward.3} parent=43 // pred_check_branch
          %243 = sbr.rel (%p241) target = $region52
        $region51: #{upsample_forward.3} parent=43 // pred_region
          %245 = dma.done [#allocation4], 64
        $region52: #{upsample_forward.3} parent=43 // pred_fallthru
          _
        %246 = sfence
        %p247 = pneg %p35
        %p248 = pneg %p32
        %p249 = pneg %p56
        %p250 = pneg %p53
        %p251 = scmp.lt.s32.totalorder %s19, 1
        %s252 = scalar_select %p251, %s19, 1
        %s253 = smul.addr %s252, 8
        %s254 = smul.addr %s253, 2
        %s255 = scalar_lea.vmem %s2, %s254
        %p256 = pneg %p82
        %p257 = pneg %p79
        %p258 = pneg %p103
        %p259 = pneg %p100
        %p260 = pneg %p124
        %p261 = pneg %p121
        %p262 = pneg %p145
        %p263 = pneg %p142
        %p264 = pneg %p171
        %p265 = pneg %p168
        %p266 = scmp.lt.s32.totalorder %s19, 1
        %s267 = scalar_select %p266, %s19, 1
        %s268 = smul.addr %s267, 8
        %s269 = smul.addr %s268, 4
        %s270 = scalar_lea.vmem %s6, %s269
        %p271 = scmp.lt.s32.totalorder %s19, 1
        %s272 = scalar_select %p271, %s19, 1
        %s273 = smul.addr %s272, 8
        %s274 = smul.addr %s273, 2
        %s275 = scalar_lea.vmem %s2, %s274
        %p276 = scmp.lt.s32.totalorder %s19, 1
        %s277 = scalar_select %p276, %s19, 1
        %s278 = smul.addr %s277, 8
        %s279 = smul.addr %s278, 4
        %s280 = scalar_lea.vmem %s6, %s279
        %s281 = sld [smem:[#allocation3]]
        %s282 = sld [smem:[#allocation3 + $0x1]]
        %v283 = vld [vmem:[%s275] sm:$0xff]
        %v284 = vld [vmem:[%s275 + $0x8] sm:$0xff]
        %v285 = vunpack.c.l.bf16 %v283
        %v286 = vunpack.c.h.bf16 %v283
        %v287 = vunpack.c.l.bf16 %v284
        %v288 = vunpack.c.h.bf16 %v284
        %v289 = vld [vmem:[%s1] sm:$0xff]
        %v290 = vld [vmem:[%s1 + $0x8] sm:$0xff]
        %vm291 = vcmp.eq.s32.totalorder %v289, 0
        %vm292 = vcmp.eq.s32.totalorder %v290, 0
        %vm293 = vcmp.eq.s32.totalorder %v289, 31
        %vm294 = vcmp.eq.s32.totalorder %v290, 31
        %v295 = vld [vmem:[#allocation6] sm:$0xf]
        %300 = vst [vmem:[#allocation1] ss:$2 sm:$0xff] %v285
        %s301 = scalar_lea.vmem [#allocation1], 16
        %302 = vst [vmem:[%s301] ss:$2 sm:$0xff] %v286
        %s303 = scalar_lea.vmem [#allocation1], 32
        %304 = vst [vmem:[%s303] ss:$2 sm:$0xff] %v287
        %s305 = scalar_lea.vmem [#allocation1], 48
        %306 = vst [vmem:[%s305] ss:$2 sm:$0xff] %v288
        %v307 = vld.sshfl [vmem:[#allocation1] sm:$0xff pattern:$0x75316420]
        %v308 = vld.sshfl [vmem:[#allocation1 + $0x8] sm:$0xff pattern:$0x75316420]
        %v309 = vld.sshfl [vmem:[#allocation1 + $0x10] sm:$0xff pattern:$0x75316420]
        %v310 = vld.sshfl [vmem:[#allocation1 + $0x18] sm:$0xff pattern:$0x75316420]
        %v311 = vld.sshfl [vmem:[#allocation1 + $0x20] sm:$0xff pattern:$0x75316420]
        %v312 = vld.sshfl [vmem:[#allocation1 + $0x28] sm:$0xff pattern:$0x75316420]
        %v313 = vld.sshfl [vmem:[#allocation1 + $0x30] sm:$0xff pattern:$0x75316420]
        %v314 = vld.sshfl [vmem:[#allocation1 + $0x38] sm:$0xff pattern:$0x75316420]
        %vm315 = vcmask 31744
        %v317 = vsel %vm315, %v295, 0
        %vm319 = vcmask 1043456
        %v320 = vsel %vm319, %v307, 0
        %v322 = vsel %vm319, %v308, 0
        %v324 = vsel %vm319, %v309, 0
        %v326 = vsel %vm319, %v310, 0
        %v328 = vsel %vm319, %v311, 0
        %v330 = vsel %vm319, %v312, 0
        %v332 = vsel %vm319, %v313, 0
        %v334 = vsel %vm319, %v314, 0
        %336 = vmatpush.msra.mxu0 0.0
        %337 = vmatpush.msra.mxu0 0.0
        %338 = vmatpush.msra.mxu0 0.0
        %339 = vmatpush.msra.mxu0 0.0
        %340 = vmatpush.msra.mxu0 0.0
        %341 = vmatpush.msra.mxu0 0.0
        %342 = vmatpush.msra.mxu0 0.0
        %343 = vmatpush.msra.mxu0 0.0
        %344 = vmatpush.msra.mxu0 0.0
        %345 = vmatpush.msra.mxu0 0.0
        %346 = vmatpush.msra.mxu0 0.0
        %347 = vmatpush.msra.mxu0 0.0
        %348 = vmatpush.msra.mxu0 0.0
        %349 = vmatpush.msra.mxu0 0.0
        %350 = vmatpush.msra.mxu0 0.0
        %351 = vmatpush.msra.mxu0 %v320
        %352 = vmatmul.f32.gmra.mxu0 %v317
        %v353 = vpop.f32.mrf.mxu0
        %v354 = vadd.f32 0.0, %v353
        %355 = vdwg.mxu0
        %356 = vmatpush.msra.mxu0 0.0
        %357 = vmatpush.msra.mxu0 0.0
        %358 = vmatpush.msra.mxu0 0.0
        %359 = vmatpush.msra.mxu0 0.0
        %360 = vmatpush.msra.mxu0 0.0
        %361 = vmatpush.msra.mxu0 0.0
        %362 = vmatpush.msra.mxu0 0.0
        %363 = vmatpush.msra.mxu0 0.0
        %364 = vmatpush.msra.mxu0 0.0
        %365 = vmatpush.msra.mxu0 0.0
        %366 = vmatpush.msra.mxu0 0.0
        %367 = vmatpush.msra.mxu0 0.0
        %368 = vmatpush.msra.mxu0 0.0
        %369 = vmatpush.msra.mxu0 0.0
        %370 = vmatpush.msra.mxu0 0.0
        %371 = vmatpush.msra.mxu0 %v322
        %372 = vmatmul.f32.gmra.mxu0 %v317
        %v373 = vpop.f32.mrf.mxu0
        %v374 = vadd.f32 0.0, %v373
        %375 = vdwg.mxu0
        %376 = vmatpush.msra.mxu0 0.0
        %377 = vmatpush.msra.mxu0 0.0
        %378 = vmatpush.msra.mxu0 0.0
        %379 = vmatpush.msra.mxu0 0.0
        %380 = vmatpush.msra.mxu0 0.0
        %381 = vmatpush.msra.mxu0 0.0
        %382 = vmatpush.msra.mxu0 0.0
        %383 = vmatpush.msra.mxu0 0.0
        %384 = vmatpush.msra.mxu0 0.0
        %385 = vmatpush.msra.mxu0 0.0
        %386 = vmatpush.msra.mxu0 0.0
        %387 = vmatpush.msra.mxu0 0.0
        %388 = vmatpush.msra.mxu0 0.0
        %389 = vmatpush.msra.mxu0 0.0
        %390 = vmatpush.msra.mxu0 0.0
        %391 = vmatpush.msra.mxu0 %v324
        %392 = vmatmul.f32.gmra.mxu0 %v317
        %v393 = vpop.f32.mrf.mxu0
        %v394 = vadd.f32 0.0, %v393
        %395 = vdwg.mxu0
        %396 = vmatpush.msra.mxu0 0.0
        %397 = vmatpush.msra.mxu0 0.0
        %398 = vmatpush.msra.mxu0 0.0
        %399 = vmatpush.msra.mxu0 0.0
        %400 = vmatpush.msra.mxu0 0.0
        %401 = vmatpush.msra.mxu0 0.0
        %402 = vmatpush.msra.mxu0 0.0
        %403 = vmatpush.msra.mxu0 0.0
        %404 = vmatpush.msra.mxu0 0.0
        %405 = vmatpush.msra.mxu0 0.0
        %406 = vmatpush.msra.mxu0 0.0
        %407 = vmatpush.msra.mxu0 0.0
        %408 = vmatpush.msra.mxu0 0.0
        %409 = vmatpush.msra.mxu0 0.0
        %410 = vmatpush.msra.mxu0 0.0
        %411 = vmatpush.msra.mxu0 %v326
        %412 = vmatmul.f32.gmra.mxu0 %v317
        %v413 = vpop.f32.mrf.mxu0
        %v414 = vadd.f32 0.0, %v413
        %415 = vdwg.mxu0
        %416 = vmatpush.msra.mxu0 0.0
        %417 = vmatpush.msra.mxu0 0.0
        %418 = vmatpush.msra.mxu0 0.0
        %419 = vmatpush.msra.mxu0 0.0
        %420 = vmatpush.msra.mxu0 0.0
        %421 = vmatpush.msra.mxu0 0.0
        %422 = vmatpush.msra.mxu0 0.0
        %423 = vmatpush.msra.mxu0 0.0
        %424 = vmatpush.msra.mxu0 0.0
        %425 = vmatpush.msra.mxu0 0.0
        %426 = vmatpush.msra.mxu0 0.0
        %427 = vmatpush.msra.mxu0 0.0
        %428 = vmatpush.msra.mxu0 0.0
        %429 = vmatpush.msra.mxu0 0.0
        %430 = vmatpush.msra.mxu0 0.0
        %431 = vmatpush.msra.mxu0 %v328
        %432 = vmatmul.f32.gmra.mxu0 %v317
        %v433 = vpop.f32.mrf.mxu0
        %v434 = vadd.f32 0.0, %v433
        %435 = vdwg.mxu0
        %436 = vmatpush.msra.mxu0 0.0
        %437 = vmatpush.msra.mxu0 0.0
        %438 = vmatpush.msra.mxu0 0.0
        %439 = vmatpush.msra.mxu0 0.0
        %440 = vmatpush.msra.mxu0 0.0
        %441 = vmatpush.msra.mxu0 0.0
        %442 = vmatpush.msra.mxu0 0.0
        %443 = vmatpush.msra.mxu0 0.0
        %444 = vmatpush.msra.mxu0 0.0
        %445 = vmatpush.msra.mxu0 0.0
        %446 = vmatpush.msra.mxu0 0.0
        %447 = vmatpush.msra.mxu0 0.0
        %448 = vmatpush.msra.mxu0 0.0
        %449 = vmatpush.msra.mxu0 0.0
        %450 = vmatpush.msra.mxu0 0.0
        %451 = vmatpush.msra.mxu0 %v330
        %452 = vmatmul.f32.gmra.mxu0 %v317
        %v453 = vpop.f32.mrf.mxu0
        %v454 = vadd.f32 0.0, %v453
        %455 = vdwg.mxu0
        %456 = vmatpush.msra.mxu0 0.0
        %457 = vmatpush.msra.mxu0 0.0
        %458 = vmatpush.msra.mxu0 0.0
        %459 = vmatpush.msra.mxu0 0.0
        %460 = vmatpush.msra.mxu0 0.0
        %461 = vmatpush.msra.mxu0 0.0
        %462 = vmatpush.msra.mxu0 0.0
        %463 = vmatpush.msra.mxu0 0.0
        %464 = vmatpush.msra.mxu0 0.0
        %465 = vmatpush.msra.mxu0 0.0
        %466 = vmatpush.msra.mxu0 0.0
        %467 = vmatpush.msra.mxu0 0.0
        %468 = vmatpush.msra.mxu0 0.0
        %469 = vmatpush.msra.mxu0 0.0
        %470 = vmatpush.msra.mxu0 0.0
        %471 = vmatpush.msra.mxu0 %v332
        %472 = vmatmul.f32.gmra.mxu0 %v317
        %v473 = vpop.f32.mrf.mxu0
        %v474 = vadd.f32 0.0, %v473
        %475 = vdwg.mxu0
        %476 = vmatpush.msra.mxu0 0.0
        %477 = vmatpush.msra.mxu0 0.0
        %478 = vmatpush.msra.mxu0 0.0
        %479 = vmatpush.msra.mxu0 0.0
        %480 = vmatpush.msra.mxu0 0.0
        %481 = vmatpush.msra.mxu0 0.0
        %482 = vmatpush.msra.mxu0 0.0
        %483 = vmatpush.msra.mxu0 0.0
        %484 = vmatpush.msra.mxu0 0.0
        %485 = vmatpush.msra.mxu0 0.0
        %486 = vmatpush.msra.mxu0 0.0
        %487 = vmatpush.msra.mxu0 0.0
        %488 = vmatpush.msra.mxu0 0.0
        %489 = vmatpush.msra.mxu0 0.0
        %490 = vmatpush.msra.mxu0 0.0
        %491 = vmatpush.msra.mxu0 %v334
        %492 = vmatmul.f32.gmra.mxu0 %v317
        %v493 = vpop.f32.mrf.mxu0
        %v494 = vadd.f32 0.0, %v493
        %495 = vdwg.mxu0
        %vm496 = vcmp.gt.f32.partialorder %v354, 0.0
        %vm497 = vcmp.gt.f32.partialorder %v374, 0.0
        %vm498 = vcmp.gt.f32.partialorder %v394, 0.0
        %vm499 = vcmp.gt.f32.partialorder %v414, 0.0
        %vm500 = vcmp.gt.f32.partialorder %v434, 0.0
        %vm501 = vcmp.gt.f32.partialorder %v454, 0.0
        %vm502 = vcmp.gt.f32.partialorder %v474, 0.0
        %vm503 = vcmp.gt.f32.partialorder %v494, 0.0
        %v504 = vstv %s281
        %v505 = vmul.f32 %v504, %v354
        %v506 = vmul.f32 %v504, %v374
        %v507 = vmul.f32 %v504, %v394
        %v508 = vmul.f32 %v504, %v414
        %v509 = vmul.f32 %v504, %v434
        %v510 = vmul.f32 %v504, %v454
        %v511 = vmul.f32 %v504, %v474
        %v512 = vmul.f32 %v504, %v494
        %v513 = vsel %vm496, %v354, %v505
        %v514 = vsel %vm497, %v374, %v506
        %v515 = vsel %vm498, %v394, %v507
        %v516 = vsel %vm499, %v414, %v508
        %v517 = vsel %vm500, %v434, %v509
        %v518 = vsel %vm501, %v454, %v510
        %v519 = vsel %vm502, %v474, %v511
        %v520 = vsel %vm503, %v494, %v512
        %521 = vst [vmem:[#allocation2] sm:$0xf] %v513
        %522 = vst [vmem:[#allocation2 + $0x8] sm:$0xf] %v514
        %523 = vst [vmem:[#allocation2 + $0x10] sm:$0xf] %v515
        %524 = vst [vmem:[#allocation2 + $0x18] sm:$0xf] %v516
        %525 = vst [vmem:[#allocation2 + $0x20] sm:$0xf] %v517
        %526 = vst [vmem:[#allocation2 + $0x28] sm:$0xf] %v518
        %527 = vst [vmem:[#allocation2 + $0x30] sm:$0xf] %v519
        %528 = vst [vmem:[#allocation2 + $0x38] sm:$0xf] %v520
        %529 = vrot.lane.b32.xlu0 %v513, 127
        %v530 = vpop.permute.xlu0 %529
        %531 = vrot.lane.b32.xlu0 %v514, 127
        %v532 = vpop.permute.xlu0 %531
        %533 = vrot.lane.b32.xlu0 %v515, 127
        %v534 = vpop.permute.xlu0 %533
        %535 = vrot.lane.b32.xlu0 %v516, 127
        %v536 = vpop.permute.xlu0 %535
        %537 = vrot.lane.b32.xlu0 %v517, 127
        %v538 = vpop.permute.xlu0 %537
        %539 = vrot.lane.b32.xlu0 %v518, 127
        %v540 = vpop.permute.xlu0 %539
        %541 = vrot.lane.b32.xlu0 %v519, 127
        %v542 = vpop.permute.xlu0 %541
        %543 = vrot.lane.b32.xlu0 %v520, 127
        %v544 = vpop.permute.xlu0 %543
        %v545 = vlaneseq
        %v546 = vand.u32 %v545, 127
        %vm547 = vcmp.lt.s32.totalorder %v546, 127
        %v548 = vsel %vm547, %v542, %v544
        %v549 = vsel %vm547, %v540, %v542
        %v550 = vsel %vm547, %v538, %v540
        %v551 = vsel %vm547, %v536, %v538
        %v552 = vsel %vm547, %v534, %v536
        %v553 = vsel %vm547, %v532, %v534
        %v554 = vsel %vm547, %v530, %v532
        %v555 = vsel %vm547, %v544, %v530
        %v556 = vsel %vm293, 1, 0
        %v557 = vsel %vm294, 1, 0
        %v558 = vperm.slane %v556, 0
        %v559 = vperm.slane %v556, 2
        %v560 = vperm.slane %v556, 4
        %v561 = vperm.slane %v556, 6
        %v562 = vperm.slane %v557, 0
        %v563 = vperm.slane %v557, 2
        %v564 = vperm.slane %v557, 4
        %v565 = vperm.slane %v557, 6
        %v566 = vperm.slane %v558, 0
        %v567 = vperm.slane %v559, 0
        %v568 = vperm.slane %v560, 0
        %v569 = vperm.slane %v561, 0
        %v570 = vperm.slane %v562, 0
        %v571 = vperm.slane %v563, 0
        %v572 = vperm.slane %v564, 0
        %v573 = vperm.slane %v565, 0
        %vm574 = vcmp.eq.s32.totalorder %v566, 1
        %vm575 = vcmp.eq.s32.totalorder %v567, 1
        %vm576 = vcmp.eq.s32.totalorder %v568, 1
        %vm577 = vcmp.eq.s32.totalorder %v569, 1
        %vm578 = vcmp.eq.s32.totalorder %v570, 1
        %vm579 = vcmp.eq.s32.totalorder %v571, 1
        %vm580 = vcmp.eq.s32.totalorder %v572, 1
        %vm581 = vcmp.eq.s32.totalorder %v573, 1
        %v582 = vsel %vm574, 0.0, %v554
        %v583 = vsel %vm575, 0.0, %v553
        %v584 = vsel %vm576, 0.0, %v552
        %v585 = vsel %vm577, 0.0, %v551
        %v586 = vsel %vm578, 0.0, %v550
        %v587 = vsel %vm579, 0.0, %v549
        %v588 = vsel %vm580, 0.0, %v548
        %v589 = vsel %vm581, 0.0, %v555
        %v598 = vrot.slane %v582, 4
        %v599 = vrot.slane %v583, 4
        %v600 = vrot.slane %v584, 4
        %v601 = vrot.slane %v585, 4
        %v602 = vrot.slane %v586, 4
        %v603 = vrot.slane %v587, 4
        %v604 = vrot.slane %v588, 4
        %v605 = vrot.slane %v589, 4
        %614 = vst [vmem:[#allocation2] sm:$0xf0] %v598
        %615 = vst [vmem:[#allocation2 + $0x8] sm:$0xf0] %v599
        %616 = vst [vmem:[#allocation2 + $0x10] sm:$0xf0] %v600
        %617 = vst [vmem:[#allocation2 + $0x18] sm:$0xf0] %v601
        %618 = vst [vmem:[#allocation2 + $0x20] sm:$0xf0] %v602
        %619 = vst [vmem:[#allocation2 + $0x28] sm:$0xf0] %v603
        %620 = vst [vmem:[#allocation2 + $0x30] sm:$0xf0] %v604
        %621 = vst [vmem:[#allocation2 + $0x38] sm:$0xf0] %v605
        %622 = vrot.lane.b32.xlu0 %v513, 96
        %v623 = vpop.permute.xlu0 %622
        %624 = vrot.lane.b32.xlu0 %v514, 96
        %v625 = vpop.permute.xlu0 %624
        %626 = vrot.lane.b32.xlu0 %v515, 96
        %v627 = vpop.permute.xlu0 %626
        %628 = vrot.lane.b32.xlu0 %v516, 96
        %v629 = vpop.permute.xlu0 %628
        %630 = vrot.lane.b32.xlu0 %v517, 96
        %v631 = vpop.permute.xlu0 %630
        %632 = vrot.lane.b32.xlu0 %v518, 96
        %v633 = vpop.permute.xlu0 %632
        %634 = vrot.lane.b32.xlu0 %v519, 96
        %v635 = vpop.permute.xlu0 %634
        %636 = vrot.lane.b32.xlu0 %v520, 96
        %v637 = vpop.permute.xlu0 %636
        %vm638 = vcmp.lt.s32.totalorder %v546, 96
        %v639 = vsel %vm638, %v635, %v637
        %v640 = vsel %vm638, %v633, %v635
        %v641 = vsel %vm638, %v631, %v633
        %v642 = vsel %vm638, %v629, %v631
        %v643 = vsel %vm638, %v627, %v629
        %v644 = vsel %vm638, %v625, %v627
        %v645 = vsel %vm638, %v623, %v625
        %v646 = vsel %vm638, %v637, %v623
        %v647 = vperm.slane %v556, 1
        %v648 = vperm.slane %v556, 3
        %v649 = vperm.slane %v556, 5
        %v650 = vperm.slane %v556, 7
        %v651 = vperm.slane %v557, 1
        %v652 = vperm.slane %v557, 3
        %v653 = vperm.slane %v557, 5
        %v654 = vperm.slane %v557, 7
        %v655 = vperm.slane %v647, 1
        %v656 = vperm.slane %v648, 1
        %v657 = vperm.slane %v649, 1
        %v658 = vperm.slane %v650, 1
        %v659 = vperm.slane %v651, 1
        %v660 = vperm.slane %v652, 1
        %v661 = vperm.slane %v653, 1
        %v662 = vperm.slane %v654, 1
        %vm663 = vcmp.eq.s32.totalorder %v655, 1
        %vm664 = vcmp.eq.s32.totalorder %v656, 1
        %vm665 = vcmp.eq.s32.totalorder %v657, 1
        %vm666 = vcmp.eq.s32.totalorder %v658, 1
        %vm667 = vcmp.eq.s32.totalorder %v659, 1
        %vm668 = vcmp.eq.s32.totalorder %v660, 1
        %vm669 = vcmp.eq.s32.totalorder %v661, 1
        %vm670 = vcmp.eq.s32.totalorder %v662, 1
        %v671 = vsel %vm663, 0.0, %v645
        %v672 = vsel %vm664, 0.0, %v644
        %v673 = vsel %vm665, 0.0, %v643
        %v674 = vsel %vm666, 0.0, %v642
        %v675 = vsel %vm667, 0.0, %v641
        %v676 = vsel %vm668, 0.0, %v640
        %v677 = vsel %vm669, 0.0, %v639
        %v678 = vsel %vm670, 0.0, %v646
        %679 = vst [vmem:[#allocation2 + $0x40] sm:$0xf] %v671
        %680 = vst [vmem:[#allocation2 + $0x48] sm:$0xf] %v672
        %681 = vst [vmem:[#allocation2 + $0x50] sm:$0xf] %v673
        %682 = vst [vmem:[#allocation2 + $0x58] sm:$0xf] %v674
        %683 = vst [vmem:[#allocation2 + $0x60] sm:$0xf] %v675
        %684 = vst [vmem:[#allocation2 + $0x68] sm:$0xf] %v676
        %685 = vst [vmem:[#allocation2 + $0x70] sm:$0xf] %v677
        %686 = vst [vmem:[#allocation2 + $0x78] sm:$0xf] %v678
        %v687 = vrot.slane %v556, 7
        %v688 = vrot.slane %v687, 2
        %v689 = vrot.slane %v557, 7
        %v690 = vrot.slane %v689, 2
        %vm691 = vcmp.ne.s32.totalorder %v688, 0
        %vm692 = vcmp.ne.s32.totalorder %v690, 0
        %vm693 = vmor %vm293, %vm691
        %vm694 = vmor %vm294, %vm692
        %695 = vrot.lane.b32.xlu0 %v513, 95
        %v696 = vpop.permute.xlu0 %695
        %697 = vrot.lane.b32.xlu0 %v514, 95
        %v698 = vpop.permute.xlu0 %697
        %699 = vrot.lane.b32.xlu0 %v515, 95
        %v700 = vpop.permute.xlu0 %699
        %701 = vrot.lane.b32.xlu0 %v516, 95
        %v702 = vpop.permute.xlu0 %701
        %703 = vrot.lane.b32.xlu0 %v517, 95
        %v704 = vpop.permute.xlu0 %703
        %705 = vrot.lane.b32.xlu0 %v518, 95
        %v706 = vpop.permute.xlu0 %705
        %707 = vrot.lane.b32.xlu0 %v519, 95
        %v708 = vpop.permute.xlu0 %707
        %709 = vrot.lane.b32.xlu0 %v520, 95
        %v710 = vpop.permute.xlu0 %709
        %vm711 = vcmp.lt.s32.totalorder %v546, 95
        %v712 = vsel %vm711, %v708, %v710
        %v713 = vsel %vm711, %v706, %v708
        %v714 = vsel %vm711, %v704, %v706
        %v715 = vsel %vm711, %v702, %v704
        %v716 = vsel %vm711, %v700, %v702
        %v717 = vsel %vm711, %v698, %v700
        %v718 = vsel %vm711, %v696, %v698
        %v719 = vsel %vm711, %v710, %v696
        %v720 = vsel %vm693, 1, 0
        %v721 = vsel %vm694, 1, 0
        %v722 = vperm.slane %v720, 0
        %v723 = vperm.slane %v720, 2
        %v724 = vperm.slane %v720, 4
        %v725 = vperm.slane %v720, 6
        %v726 = vperm.slane %v721, 0
        %v727 = vperm.slane %v721, 2
        %v728 = vperm.slane %v721, 4
        %v729 = vperm.slane %v721, 6
        %v730 = vperm.slane %v722, 0
        %v731 = vperm.slane %v723, 0
        %v732 = vperm.slane %v724, 0
        %v733 = vperm.slane %v725, 0
        %v734 = vperm.slane %v726, 0
        %v735 = vperm.slane %v727, 0
        %v736 = vperm.slane %v728, 0
        %v737 = vperm.slane %v729, 0
        %vm738 = vcmp.eq.s32.totalorder %v730, 1
        %vm739 = vcmp.eq.s32.totalorder %v731, 1
        %vm740 = vcmp.eq.s32.totalorder %v732, 1
        %vm741 = vcmp.eq.s32.totalorder %v733, 1
        %vm742 = vcmp.eq.s32.totalorder %v734, 1
        %vm743 = vcmp.eq.s32.totalorder %v735, 1
        %vm744 = vcmp.eq.s32.totalorder %v736, 1
        %vm745 = vcmp.eq.s32.totalorder %v737, 1
        %v746 = vsel %vm738, 0.0, %v718
        %v747 = vsel %vm739, 0.0, %v717
        %v748 = vsel %vm740, 0.0, %v716
        %v749 = vsel %vm741, 0.0, %v715
        %v750 = vsel %vm742, 0.0, %v714
        %v751 = vsel %vm743, 0.0, %v713
        %v752 = vsel %vm744, 0.0, %v712
        %v753 = vsel %vm745, 0.0, %v719
        %v762 = vrot.slane %v746, 4
        %v763 = vrot.slane %v747, 4
        %v764 = vrot.slane %v748, 4
        %v765 = vrot.slane %v749, 4
        %v766 = vrot.slane %v750, 4
        %v767 = vrot.slane %v751, 4
        %v768 = vrot.slane %v752, 4
        %v769 = vrot.slane %v753, 4
        %778 = vst [vmem:[#allocation2 + $0x40] sm:$0xf0] %v762
        %779 = vst [vmem:[#allocation2 + $0x48] sm:$0xf0] %v763
        %780 = vst [vmem:[#allocation2 + $0x50] sm:$0xf0] %v764
        %781 = vst [vmem:[#allocation2 + $0x58] sm:$0xf0] %v765
        %782 = vst [vmem:[#allocation2 + $0x60] sm:$0xf0] %v766
        %783 = vst [vmem:[#allocation2 + $0x68] sm:$0xf0] %v767
        %784 = vst [vmem:[#allocation2 + $0x70] sm:$0xf0] %v768
        %785 = vst [vmem:[#allocation2 + $0x78] sm:$0xf0] %v769
        %v786 = vld [vmem:[%s4] sm:$0xff]
        %v787 = vld [vmem:[%s4 + $0x8] sm:$0xff]
        %v788 = vld [vmem:[#allocation2] sm:$0xff]
        %v789 = vld [vmem:[#allocation2 + $0x8] sm:$0xff]
        %v790 = vld [vmem:[#allocation2 + $0x10] sm:$0xff]
        %v791 = vld [vmem:[#allocation2 + $0x18] sm:$0xff]
        %v792 = vld [vmem:[#allocation2 + $0x20] sm:$0xff]
        %v793 = vld [vmem:[#allocation2 + $0x28] sm:$0xff]
        %v794 = vld [vmem:[#allocation2 + $0x30] sm:$0xff]
        %v795 = vld [vmem:[#allocation2 + $0x38] sm:$0xff]
        %v796 = vld [vmem:[#allocation2 + $0x40] sm:$0xff]
        %v797 = vld [vmem:[#allocation2 + $0x48] sm:$0xff]
        %v798 = vld [vmem:[#allocation2 + $0x50] sm:$0xff]
        %v799 = vld [vmem:[#allocation2 + $0x58] sm:$0xff]
        %v800 = vld [vmem:[#allocation2 + $0x60] sm:$0xff]
        %v801 = vld [vmem:[#allocation2 + $0x68] sm:$0xff]
        %v802 = vld [vmem:[#allocation2 + $0x70] sm:$0xff]
        %v803 = vld [vmem:[#allocation2 + $0x78] sm:$0xff]
        %vm804 = vcmask 130048
        %v806 = vsel %vm804, %v786, 0
        %v809 = vsel %vm804, %v787, 0
        %811 = vmatpush.msra.mxu0 0.0
        %812 = vmatpush.msra.mxu0 0.0
        %813 = vmatpush.msra.mxu0 0.0
        %814 = vmatpush.msra.mxu0 0.0
        %815 = vmatpush.msra.mxu0 0.0
        %816 = vmatpush.msra.mxu0 0.0
        %817 = vmatpush.msra.mxu0 0.0
        %818 = vmatpush.msra.mxu0 0.0
        %819 = vmatpush.msra.mxu0 0.0
        %820 = vmatpush.msra.mxu0 0.0
        %821 = vmatpush.msra.mxu0 0.0
        %822 = vmatpush.msra.mxu0 0.0
        %823 = vmatpush.msra.mxu0 0.0
        %824 = vmatpush.msra.mxu0 0.0
        %825 = vmatpush.msra.mxu0 %v796
        %826 = vmatpush.msra.mxu0 %v788
        %827 = vmatmul.f32.gmra.mxu0 %v806
        %v828 = vpop.f32.mrf.mxu0
        %v829 = vadd.f32 0.0, %v828
        %830 = vmatmul.f32.gmra.mxu0 %v809
        %v831 = vpop.f32.mrf.mxu0
        %v832 = vadd.f32 0.0, %v831
        %833 = vdwg.mxu0
        %834 = vmatpush.msra.mxu0 0.0
        %835 = vmatpush.msra.mxu0 0.0
        %836 = vmatpush.msra.mxu0 0.0
        %837 = vmatpush.msra.mxu0 0.0
        %838 = vmatpush.msra.mxu0 0.0
        %839 = vmatpush.msra.mxu0 0.0
        %840 = vmatpush.msra.mxu0 0.0
        %841 = vmatpush.msra.mxu0 0.0
        %842 = vmatpush.msra.mxu0 0.0
        %843 = vmatpush.msra.mxu0 0.0
        %844 = vmatpush.msra.mxu0 0.0
        %845 = vmatpush.msra.mxu0 0.0
        %846 = vmatpush.msra.mxu0 0.0
        %847 = vmatpush.msra.mxu0 0.0
        %848 = vmatpush.msra.mxu0 %v797
        %849 = vmatpush.msra.mxu0 %v789
        %850 = vmatmul.f32.gmra.mxu0 %v806
        %v851 = vpop.f32.mrf.mxu0
        %v852 = vadd.f32 0.0, %v851
        %853 = vmatmul.f32.gmra.mxu0 %v809
        %v854 = vpop.f32.mrf.mxu0
        %v855 = vadd.f32 0.0, %v854
        %856 = vdwg.mxu0
        %857 = vmatpush.msra.mxu0 0.0
        %858 = vmatpush.msra.mxu0 0.0
        %859 = vmatpush.msra.mxu0 0.0
        %860 = vmatpush.msra.mxu0 0.0
        %861 = vmatpush.msra.mxu0 0.0
        %862 = vmatpush.msra.mxu0 0.0
        %863 = vmatpush.msra.mxu0 0.0
        %864 = vmatpush.msra.mxu0 0.0
        %865 = vmatpush.msra.mxu0 0.0
        %866 = vmatpush.msra.mxu0 0.0
        %867 = vmatpush.msra.mxu0 0.0
        %868 = vmatpush.msra.mxu0 0.0
        %869 = vmatpush.msra.mxu0 0.0
        %870 = vmatpush.msra.mxu0 0.0
        %871 = vmatpush.msra.mxu0 %v798
        %872 = vmatpush.msra.mxu0 %v790
        %873 = vmatmul.f32.gmra.mxu0 %v806
        %v874 = vpop.f32.mrf.mxu0
        %v875 = vadd.f32 0.0, %v874
        %876 = vmatmul.f32.gmra.mxu0 %v809
        %v877 = vpop.f32.mrf.mxu0
        %v878 = vadd.f32 0.0, %v877
        %879 = vdwg.mxu0
        %880 = vmatpush.msra.mxu0 0.0
        %881 = vmatpush.msra.mxu0 0.0
        %882 = vmatpush.msra.mxu0 0.0
        %883 = vmatpush.msra.mxu0 0.0
        %884 = vmatpush.msra.mxu0 0.0
        %885 = vmatpush.msra.mxu0 0.0
        %886 = vmatpush.msra.mxu0 0.0
        %887 = vmatpush.msra.mxu0 0.0
        %888 = vmatpush.msra.mxu0 0.0
        %889 = vmatpush.msra.mxu0 0.0
        %890 = vmatpush.msra.mxu0 0.0
        %891 = vmatpush.msra.mxu0 0.0
        %892 = vmatpush.msra.mxu0 0.0
        %893 = vmatpush.msra.mxu0 0.0
        %894 = vmatpush.msra.mxu0 %v799
        %895 = vmatpush.msra.mxu0 %v791
        %896 = vmatmul.f32.gmra.mxu0 %v806
        %v897 = vpop.f32.mrf.mxu0
        %v898 = vadd.f32 0.0, %v897
        %899 = vmatmul.f32.gmra.mxu0 %v809
        %v900 = vpop.f32.mrf.mxu0
        %v901 = vadd.f32 0.0, %v900
        %902 = vdwg.mxu0
        %903 = vmatpush.msra.mxu0 0.0
        %904 = vmatpush.msra.mxu0 0.0
        %905 = vmatpush.msra.mxu0 0.0
        %906 = vmatpush.msra.mxu0 0.0
        %907 = vmatpush.msra.mxu0 0.0
        %908 = vmatpush.msra.mxu0 0.0
        %909 = vmatpush.msra.mxu0 0.0
        %910 = vmatpush.msra.mxu0 0.0
        %911 = vmatpush.msra.mxu0 0.0
        %912 = vmatpush.msra.mxu0 0.0
        %913 = vmatpush.msra.mxu0 0.0
        %914 = vmatpush.msra.mxu0 0.0
        %915 = vmatpush.msra.mxu0 0.0
        %916 = vmatpush.msra.mxu0 0.0
        %917 = vmatpush.msra.mxu0 %v800
        %918 = vmatpush.msra.mxu0 %v792
        %919 = vmatmul.f32.gmra.mxu0 %v806
        %v920 = vpop.f32.mrf.mxu0
        %v921 = vadd.f32 0.0, %v920
        %922 = vmatmul.f32.gmra.mxu0 %v809
        %v923 = vpop.f32.mrf.mxu0
        %v924 = vadd.f32 0.0, %v923
        %925 = vdwg.mxu0
        %926 = vmatpush.msra.mxu0 0.0
        %927 = vmatpush.msra.mxu0 0.0
        %928 = vmatpush.msra.mxu0 0.0
        %929 = vmatpush.msra.mxu0 0.0
        %930 = vmatpush.msra.mxu0 0.0
        %931 = vmatpush.msra.mxu0 0.0
        %932 = vmatpush.msra.mxu0 0.0
        %933 = vmatpush.msra.mxu0 0.0
        %934 = vmatpush.msra.mxu0 0.0
        %935 = vmatpush.msra.mxu0 0.0
        %936 = vmatpush.msra.mxu0 0.0
        %937 = vmatpush.msra.mxu0 0.0
        %938 = vmatpush.msra.mxu0 0.0
        %939 = vmatpush.msra.mxu0 0.0
        %940 = vmatpush.msra.mxu0 %v801
        %941 = vmatpush.msra.mxu0 %v793
        %942 = vmatmul.f32.gmra.mxu0 %v806
        %v943 = vpop.f32.mrf.mxu0
        %v944 = vadd.f32 0.0, %v943
        %945 = vmatmul.f32.gmra.mxu0 %v809
        %v946 = vpop.f32.mrf.mxu0
        %v947 = vadd.f32 0.0, %v946
        %948 = vdwg.mxu0
        %949 = vmatpush.msra.mxu0 0.0
        %950 = vmatpush.msra.mxu0 0.0
        %951 = vmatpush.msra.mxu0 0.0
        %952 = vmatpush.msra.mxu0 0.0
        %953 = vmatpush.msra.mxu0 0.0
        %954 = vmatpush.msra.mxu0 0.0
        %955 = vmatpush.msra.mxu0 0.0
        %956 = vmatpush.msra.mxu0 0.0
        %957 = vmatpush.msra.mxu0 0.0
        %958 = vmatpush.msra.mxu0 0.0
        %959 = vmatpush.msra.mxu0 0.0
        %960 = vmatpush.msra.mxu0 0.0
        %961 = vmatpush.msra.mxu0 0.0
        %962 = vmatpush.msra.mxu0 0.0
        %963 = vmatpush.msra.mxu0 %v802
        %964 = vmatpush.msra.mxu0 %v794
        %965 = vmatmul.f32.gmra.mxu0 %v806
        %v966 = vpop.f32.mrf.mxu0
        %v967 = vadd.f32 0.0, %v966
        %968 = vmatmul.f32.gmra.mxu0 %v809
        %v969 = vpop.f32.mrf.mxu0
        %v970 = vadd.f32 0.0, %v969
        %971 = vdwg.mxu0
        %972 = vmatpush.msra.mxu0 0.0
        %973 = vmatpush.msra.mxu0 0.0
        %974 = vmatpush.msra.mxu0 0.0
        %975 = vmatpush.msra.mxu0 0.0
        %976 = vmatpush.msra.mxu0 0.0
        %977 = vmatpush.msra.mxu0 0.0
        %978 = vmatpush.msra.mxu0 0.0
        %979 = vmatpush.msra.mxu0 0.0
        %980 = vmatpush.msra.mxu0 0.0
        %981 = vmatpush.msra.mxu0 0.0
        %982 = vmatpush.msra.mxu0 0.0
        %983 = vmatpush.msra.mxu0 0.0
        %984 = vmatpush.msra.mxu0 0.0
        %985 = vmatpush.msra.mxu0 0.0
        %986 = vmatpush.msra.mxu0 %v803
        %987 = vmatpush.msra.mxu0 %v795
        %988 = vmatmul.f32.gmra.mxu0 %v806
        %v989 = vpop.f32.mrf.mxu0
        %v990 = vadd.f32 0.0, %v989
        %991 = vmatmul.f32.gmra.mxu0 %v809
        %v992 = vpop.f32.mrf.mxu0
        %v993 = vadd.f32 0.0, %v992
        %994 = vdwg.mxu0
        %vm995 = vcmp.gt.f32.partialorder %v829, 0.0
        %vm996 = vcmp.gt.f32.partialorder %v852, 0.0
        %vm997 = vcmp.gt.f32.partialorder %v875, 0.0
        %vm998 = vcmp.gt.f32.partialorder %v898, 0.0
        %vm999 = vcmp.gt.f32.partialorder %v921, 0.0
        %vm1000 = vcmp.gt.f32.partialorder %v944, 0.0
        %vm1001 = vcmp.gt.f32.partialorder %v967, 0.0
        %vm1002 = vcmp.gt.f32.partialorder %v990, 0.0
        %vm1003 = vcmp.gt.f32.partialorder %v832, 0.0
        %vm1004 = vcmp.gt.f32.partialorder %v855, 0.0
        %vm1005 = vcmp.gt.f32.partialorder %v878, 0.0
        %vm1006 = vcmp.gt.f32.partialorder %v901, 0.0
        %vm1007 = vcmp.gt.f32.partialorder %v924, 0.0
        %vm1008 = vcmp.gt.f32.partialorder %v947, 0.0
        %vm1009 = vcmp.gt.f32.partialorder %v970, 0.0
        %vm1010 = vcmp.gt.f32.partialorder %v993, 0.0
        %v1011 = vstv %s282
        %v1012 = vmul.f32 %v1011, %v829
        %v1013 = vmul.f32 %v1011, %v852
        %v1014 = vmul.f32 %v1011, %v875
        %v1015 = vmul.f32 %v1011, %v898
        %v1016 = vmul.f32 %v1011, %v921
        %v1017 = vmul.f32 %v1011, %v944
        %v1018 = vmul.f32 %v1011, %v967
        %v1019 = vmul.f32 %v1011, %v990
        %v1020 = vmul.f32 %v1011, %v832
        %v1021 = vmul.f32 %v1011, %v855
        %v1022 = vmul.f32 %v1011, %v878
        %v1023 = vmul.f32 %v1011, %v901
        %v1024 = vmul.f32 %v1011, %v924
        %v1025 = vmul.f32 %v1011, %v947
        %v1026 = vmul.f32 %v1011, %v970
        %v1027 = vmul.f32 %v1011, %v993
        %v1028 = vsel %vm995, %v829, %v1012
        %v1029 = vsel %vm996, %v852, %v1013
        %v1030 = vsel %vm997, %v875, %v1014
        %v1031 = vsel %vm998, %v898, %v1015
        %v1032 = vsel %vm999, %v921, %v1016
        %v1033 = vsel %vm1000, %v944, %v1017
        %v1034 = vsel %vm1001, %v967, %v1018
        %v1035 = vsel %vm1002, %v990, %v1019
        %v1036 = vsel %vm1003, %v832, %v1020
        %v1037 = vsel %vm1004, %v855, %v1021
        %v1038 = vsel %vm1005, %v878, %v1022
        %v1039 = vsel %vm1006, %v901, %v1023
        %v1040 = vsel %vm1007, %v924, %v1024
        %v1041 = vsel %vm1008, %v947, %v1025
        %v1042 = vsel %vm1009, %v970, %v1026
        %v1043 = vsel %vm1010, %v993, %v1027
        %1044 = vst [vmem:[#allocation2] sm:$0xff] %v1028
        %1045 = vst [vmem:[#allocation2 + $0x8] sm:$0xff] %v1029
        %1046 = vst [vmem:[#allocation2 + $0x10] sm:$0xff] %v1030
        %1047 = vst [vmem:[#allocation2 + $0x18] sm:$0xff] %v1031
        %1048 = vst [vmem:[#allocation2 + $0x20] sm:$0xff] %v1032
        %1049 = vst [vmem:[#allocation2 + $0x28] sm:$0xff] %v1033
        %1050 = vst [vmem:[#allocation2 + $0x30] sm:$0xff] %v1034
        %1051 = vst [vmem:[#allocation2 + $0x38] sm:$0xff] %v1035
        %1052 = vst [vmem:[#allocation2 + $0x40] sm:$0xff] %v1036
        %1053 = vst [vmem:[#allocation2 + $0x48] sm:$0xff] %v1037
        %1054 = vst [vmem:[#allocation2 + $0x50] sm:$0xff] %v1038
        %1055 = vst [vmem:[#allocation2 + $0x58] sm:$0xff] %v1039
        %1056 = vst [vmem:[#allocation2 + $0x60] sm:$0xff] %v1040
        %1057 = vst [vmem:[#allocation2 + $0x68] sm:$0xff] %v1041
        %1058 = vst [vmem:[#allocation2 + $0x70] sm:$0xff] %v1042
        %1059 = vst [vmem:[#allocation2 + $0x78] sm:$0xff] %v1043
        %1060 = vst [vmem:[#allocation1] ss:$2 sm:$0xff] %v285
        %s1061 = scalar_lea.vmem [#allocation1], 16
        %1062 = vst [vmem:[%s1061] ss:$2 sm:$0xff] %v286
        %s1063 = scalar_lea.vmem [#allocation1], 32
        %1064 = vst [vmem:[%s1063] ss:$2 sm:$0xff] %v287
        %s1065 = scalar_lea.vmem [#allocation1], 48
        %1066 = vst [vmem:[%s1065] ss:$2 sm:$0xff] %v288
        %v1067 = vld.sshfl [vmem:[#allocation1] sm:$0xff pattern:$0x75316420]
        %v1068 = vld.sshfl [vmem:[#allocation1 + $0x8] sm:$0xff pattern:$0x75316420]
        %v1069 = vld.sshfl [vmem:[#allocation1 + $0x10] sm:$0xff pattern:$0x75316420]
        %v1070 = vld.sshfl [vmem:[#allocation1 + $0x18] sm:$0xff pattern:$0x75316420]
        %v1071 = vld.sshfl [vmem:[#allocation1 + $0x20] sm:$0xff pattern:$0x75316420]
        %v1072 = vld.sshfl [vmem:[#allocation1 + $0x28] sm:$0xff pattern:$0x75316420]
        %v1073 = vld.sshfl [vmem:[#allocation1 + $0x30] sm:$0xff pattern:$0x75316420]
        %v1074 = vld.sshfl [vmem:[#allocation1 + $0x38] sm:$0xff pattern:$0x75316420]
        %1083 = vrot.lane.b32.xlu0 %v1067, 32
        %v1084 = vpop.permute.xlu0 %1083
        %1085 = vrot.lane.b32.xlu0 %v1068, 32
        %v1086 = vpop.permute.xlu0 %1085
        %1087 = vrot.lane.b32.xlu0 %v1069, 32
        %v1088 = vpop.permute.xlu0 %1087
        %1089 = vrot.lane.b32.xlu0 %v1070, 32
        %v1090 = vpop.permute.xlu0 %1089
        %1091 = vrot.lane.b32.xlu0 %v1071, 32
        %v1092 = vpop.permute.xlu0 %1091
        %1093 = vrot.lane.b32.xlu0 %v1072, 32
        %v1094 = vpop.permute.xlu0 %1093
        %1095 = vrot.lane.b32.xlu0 %v1073, 32
        %v1096 = vpop.permute.xlu0 %1095
        %1097 = vrot.lane.b32.xlu0 %v1074, 32
        %v1098 = vpop.permute.xlu0 %1097
        %vm1099 = vcmp.lt.s32.totalorder %v546, 32
        %v1100 = vsel %vm1099, %v1096, %v1098
        %v1101 = vsel %vm1099, %v1094, %v1096
        %v1102 = vsel %vm1099, %v1092, %v1094
        %v1103 = vsel %vm1099, %v1090, %v1092
        %v1104 = vsel %vm1099, %v1088, %v1090
        %v1105 = vsel %vm1099, %v1086, %v1088
        %v1106 = vsel %vm1099, %v1084, %v1086
        %v1107 = vsel %vm1099, %v1098, %v1084
        %v1108 = vsel %vm291, 1, 0
        %v1109 = vsel %vm292, 1, 0
        %v1110 = vperm.slane %v1108, 1
        %v1111 = vperm.slane %v1108, 3
        %v1112 = vperm.slane %v1108, 5
        %v1113 = vperm.slane %v1108, 7
        %v1114 = vperm.slane %v1109, 1
        %v1115 = vperm.slane %v1109, 3
        %v1116 = vperm.slane %v1109, 5
        %v1117 = vperm.slane %v1109, 7
        %v1118 = vperm.slane %v1110, 1
        %v1119 = vperm.slane %v1111, 1
        %v1120 = vperm.slane %v1112, 1
        %v1121 = vperm.slane %v1113, 1
        %v1122 = vperm.slane %v1114, 1
        %v1123 = vperm.slane %v1115, 1
        %v1124 = vperm.slane %v1116, 1
        %v1125 = vperm.slane %v1117, 1
        %vm1126 = vcmp.eq.s32.totalorder %v1118, 1
        %vm1127 = vcmp.eq.s32.totalorder %v1119, 1
        %vm1128 = vcmp.eq.s32.totalorder %v1120, 1
        %vm1129 = vcmp.eq.s32.totalorder %v1121, 1
        %vm1130 = vcmp.eq.s32.totalorder %v1122, 1
        %vm1131 = vcmp.eq.s32.totalorder %v1123, 1
        %vm1132 = vcmp.eq.s32.totalorder %v1124, 1
        %vm1133 = vcmp.eq.s32.totalorder %v1125, 1
        %1134 = vst [vmem:[#allocation1] ss:$2 sm:$0xff] %v285
        %s1135 = scalar_lea.vmem [#allocation1], 16
        %1136 = vst [vmem:[%s1135] ss:$2 sm:$0xff] %v286
        %s1137 = scalar_lea.vmem [#allocation1], 32
        %1138 = vst [vmem:[%s1137] ss:$2 sm:$0xff] %v287
        %s1139 = scalar_lea.vmem [#allocation1], 48
        %1140 = vst [vmem:[%s1139] ss:$2 sm:$0xff] %v288
        %v1141 = vld.sshfl [vmem:[#allocation1] sm:$0xff pattern:$0x75316420]
        %v1142 = vld.sshfl [vmem:[#allocation1 + $0x8] sm:$0xff pattern:$0x75316420]
        %v1143 = vld.sshfl [vmem:[#allocation1 + $0x10] sm:$0xff pattern:$0x75316420]
        %v1144 = vld.sshfl [vmem:[#allocation1 + $0x18] sm:$0xff pattern:$0x75316420]
        %v1145 = vld.sshfl [vmem:[#allocation1 + $0x20] sm:$0xff pattern:$0x75316420]
        %v1146 = vld.sshfl [vmem:[#allocation1 + $0x28] sm:$0xff pattern:$0x75316420]
        %v1147 = vld.sshfl [vmem:[#allocation1 + $0x30] sm:$0xff pattern:$0x75316420]
        %v1148 = vld.sshfl [vmem:[#allocation1 + $0x38] sm:$0xff pattern:$0x75316420]
        %v1157 = vsel %vm1126, %v1141, %v1107
        %v1158 = vsel %vm1127, %v1142, %v1106
        %v1159 = vsel %vm1128, %v1143, %v1105
        %v1160 = vsel %vm1129, %v1144, %v1104
        %v1161 = vsel %vm1130, %v1145, %v1103
        %v1162 = vsel %vm1131, %v1146, %v1102
        %v1163 = vsel %vm1132, %v1147, %v1101
        %v1164 = vsel %vm1133, %v1148, %v1100
        %1165 = vst [vmem:[#allocation1] ss:$2 sm:$0xff] %v285
        %s1166 = scalar_lea.vmem [#allocation1], 16
        %1167 = vst [vmem:[%s1166] ss:$2 sm:$0xff] %v286
        %s1168 = scalar_lea.vmem [#allocation1], 32
        %1169 = vst [vmem:[%s1168] ss:$2 sm:$0xff] %v287
        %s1170 = scalar_lea.vmem [#allocation1], 48
        %1171 = vst [vmem:[%s1170] ss:$2 sm:$0xff] %v288
        %v1172 = vld.sshfl [vmem:[#allocation1] sm:$0xff pattern:$0x75316420]
        %v1173 = vld.sshfl [vmem:[#allocation1 + $0x8] sm:$0xff pattern:$0x75316420]
        %v1174 = vld.sshfl [vmem:[#allocation1 + $0x10] sm:$0xff pattern:$0x75316420]
        %v1175 = vld.sshfl [vmem:[#allocation1 + $0x18] sm:$0xff pattern:$0x75316420]
        %v1176 = vld.sshfl [vmem:[#allocation1 + $0x20] sm:$0xff pattern:$0x75316420]
        %v1177 = vld.sshfl [vmem:[#allocation1 + $0x28] sm:$0xff pattern:$0x75316420]
        %v1178 = vld.sshfl [vmem:[#allocation1 + $0x30] sm:$0xff pattern:$0x75316420]
        %v1179 = vld.sshfl [vmem:[#allocation1 + $0x38] sm:$0xff pattern:$0x75316420]
        %1188 = vrot.lane.b32.xlu0 %v1172, 96
        %v1189 = vpop.permute.xlu0 %1188
        %1190 = vrot.lane.b32.xlu0 %v1173, 96
        %v1191 = vpop.permute.xlu0 %1190
        %1192 = vrot.lane.b32.xlu0 %v1174, 96
        %v1193 = vpop.permute.xlu0 %1192
        %1194 = vrot.lane.b32.xlu0 %v1175, 96
        %v1195 = vpop.permute.xlu0 %1194
        %1196 = vrot.lane.b32.xlu0 %v1176, 96
        %v1197 = vpop.permute.xlu0 %1196
        %1198 = vrot.lane.b32.xlu0 %v1177, 96
        %v1199 = vpop.permute.xlu0 %1198
        %1200 = vrot.lane.b32.xlu0 %v1178, 96
        %v1201 = vpop.permute.xlu0 %1200
        %1202 = vrot.lane.b32.xlu0 %v1179, 96
        %v1203 = vpop.permute.xlu0 %1202
        %v1204 = vsel %vm638, %v1201, %v1203
        %v1205 = vsel %vm638, %v1199, %v1201
        %v1206 = vsel %vm638, %v1197, %v1199
        %v1207 = vsel %vm638, %v1195, %v1197
        %v1208 = vsel %vm638, %v1193, %v1195
        %v1209 = vsel %vm638, %v1191, %v1193
        %v1210 = vsel %vm638, %v1189, %v1191
        %v1211 = vsel %vm638, %v1203, %v1189
        %1212 = vst [vmem:[#allocation1] ss:$2 sm:$0xff] %v285
        %s1213 = scalar_lea.vmem [#allocation1], 16
        %1214 = vst [vmem:[%s1213] ss:$2 sm:$0xff] %v286
        %s1215 = scalar_lea.vmem [#allocation1], 32
        %1216 = vst [vmem:[%s1215] ss:$2 sm:$0xff] %v287
        %s1217 = scalar_lea.vmem [#allocation1], 48
        %1218 = vst [vmem:[%s1217] ss:$2 sm:$0xff] %v288
        %v1219 = vld.sshfl [vmem:[#allocation1] sm:$0xff pattern:$0x75316420]
        %v1220 = vld.sshfl [vmem:[#allocation1 + $0x8] sm:$0xff pattern:$0x75316420]
        %v1221 = vld.sshfl [vmem:[#allocation1 + $0x10] sm:$0xff pattern:$0x75316420]
        %v1222 = vld.sshfl [vmem:[#allocation1 + $0x18] sm:$0xff pattern:$0x75316420]
        %v1223 = vld.sshfl [vmem:[#allocation1 + $0x20] sm:$0xff pattern:$0x75316420]
        %v1224 = vld.sshfl [vmem:[#allocation1 + $0x28] sm:$0xff pattern:$0x75316420]
        %v1225 = vld.sshfl [vmem:[#allocation1 + $0x30] sm:$0xff pattern:$0x75316420]
        %v1226 = vld.sshfl [vmem:[#allocation1 + $0x38] sm:$0xff pattern:$0x75316420]
        %v1235 = vsel %vm663, %v1219, %v1210
        %v1236 = vsel %vm664, %v1220, %v1209
        %v1237 = vsel %vm665, %v1221, %v1208
        %v1238 = vsel %vm666, %v1222, %v1207
        %v1239 = vsel %vm667, %v1223, %v1206
        %v1240 = vsel %vm668, %v1224, %v1205
        %v1241 = vsel %vm669, %v1225, %v1204
        %v1242 = vsel %vm670, %v1226, %v1211
        %1243 = vst [vmem:[#allocation1] ss:$2 sm:$0xff] %v285
        %s1244 = scalar_lea.vmem [#allocation1], 16
        %1245 = vst [vmem:[%s1244] ss:$2 sm:$0xff] %v286
        %s1246 = scalar_lea.vmem [#allocation1], 32
        %1247 = vst [vmem:[%s1246] ss:$2 sm:$0xff] %v287
        %s1248 = scalar_lea.vmem [#allocation1], 48
        %1249 = vst [vmem:[%s1248] ss:$2 sm:$0xff] %v288
        %v1250 = vld.sshfl [vmem:[#allocation1] sm:$0xff pattern:$0x75316420]
        %v1251 = vld.sshfl [vmem:[#allocation1 + $0x8] sm:$0xff pattern:$0x75316420]
        %v1252 = vld.sshfl [vmem:[#allocation1 + $0x10] sm:$0xff pattern:$0x75316420]
        %v1253 = vld.sshfl [vmem:[#allocation1 + $0x18] sm:$0xff pattern:$0x75316420]
        %v1254 = vld.sshfl [vmem:[#allocation1 + $0x20] sm:$0xff pattern:$0x75316420]
        %v1255 = vld.sshfl [vmem:[#allocation1 + $0x28] sm:$0xff pattern:$0x75316420]
        %v1256 = vld.sshfl [vmem:[#allocation1 + $0x30] sm:$0xff pattern:$0x75316420]
        %v1257 = vld.sshfl [vmem:[#allocation1 + $0x38] sm:$0xff pattern:$0x75316420]
        %1266 = vrot.lane.b32.xlu0 %v1250, 1
        %v1267 = vpop.permute.xlu0 %1266
        %1268 = vrot.lane.b32.xlu0 %v1251, 1
        %v1269 = vpop.permute.xlu0 %1268
        %1270 = vrot.lane.b32.xlu0 %v1252, 1
        %v1271 = vpop.permute.xlu0 %1270
        %1272 = vrot.lane.b32.xlu0 %v1253, 1
        %v1273 = vpop.permute.xlu0 %1272
        %1274 = vrot.lane.b32.xlu0 %v1254, 1
        %v1275 = vpop.permute.xlu0 %1274
        %1276 = vrot.lane.b32.xlu0 %v1255, 1
        %v1277 = vpop.permute.xlu0 %1276
        %1278 = vrot.lane.b32.xlu0 %v1256, 1
        %v1279 = vpop.permute.xlu0 %1278
        %1280 = vrot.lane.b32.xlu0 %v1257, 1
        %v1281 = vpop.permute.xlu0 %1280
        %vm1282 = vcmp.lt.s32.totalorder %v546, 1
        %v1283 = vsel %vm1282, %v1279, %v1281
        %v1284 = vsel %vm1282, %v1277, %v1279
        %v1285 = vsel %vm1282, %v1275, %v1277
        %v1286 = vsel %vm1282, %v1273, %v1275
        %v1287 = vsel %vm1282, %v1271, %v1273
        %v1288 = vsel %vm1282, %v1269, %v1271
        %v1289 = vsel %vm1282, %v1267, %v1269
        %v1290 = vsel %vm1282, %v1281, %v1267
        %v1291 = vperm.slane %v1108, 0
        %v1292 = vperm.slane %v1108, 2
        %v1293 = vperm.slane %v1108, 4
        %v1294 = vperm.slane %v1108, 6
        %v1295 = vperm.slane %v1109, 0
        %v1296 = vperm.slane %v1109, 2
        %v1297 = vperm.slane %v1109, 4
        %v1298 = vperm.slane %v1109, 6
        %v1299 = vperm.slane %v1291, 0
        %v1300 = vperm.slane %v1292, 0
        %v1301 = vperm.slane %v1293, 0
        %v1302 = vperm.slane %v1294, 0
        %v1303 = vperm.slane %v1295, 0
        %v1304 = vperm.slane %v1296, 0
        %v1305 = vperm.slane %v1297, 0
        %v1306 = vperm.slane %v1298, 0
        %vm1307 = vcmp.eq.s32.totalorder %v1299, 1
        %vm1308 = vcmp.eq.s32.totalorder %v1300, 1
        %vm1309 = vcmp.eq.s32.totalorder %v1301, 1
        %vm1310 = vcmp.eq.s32.totalorder %v1302, 1
        %vm1311 = vcmp.eq.s32.totalorder %v1303, 1
        %vm1312 = vcmp.eq.s32.totalorder %v1304, 1
        %vm1313 = vcmp.eq.s32.totalorder %v1305, 1
        %vm1314 = vcmp.eq.s32.totalorder %v1306, 1
        %1315 = vst [vmem:[#allocation1] ss:$2 sm:$0xff] %v285
        %s1316 = scalar_lea.vmem [#allocation1], 16
        %1317 = vst [vmem:[%s1316] ss:$2 sm:$0xff] %v286
        %s1318 = scalar_lea.vmem [#allocation1], 32
        %1319 = vst [vmem:[%s1318] ss:$2 sm:$0xff] %v287
        %s1320 = scalar_lea.vmem [#allocation1], 48
        %1321 = vst [vmem:[%s1320] ss:$2 sm:$0xff] %v288
        %v1322 = vld.sshfl [vmem:[#allocation1] sm:$0xff pattern:$0x75316420]
        %v1323 = vld.sshfl [vmem:[#allocation1 + $0x8] sm:$0xff pattern:$0x75316420]
        %v1324 = vld.sshfl [vmem:[#allocation1 + $0x10] sm:$0xff pattern:$0x75316420]
        %v1325 = vld.sshfl [vmem:[#allocation1 + $0x18] sm:$0xff pattern:$0x75316420]
        %v1326 = vld.sshfl [vmem:[#allocation1 + $0x20] sm:$0xff pattern:$0x75316420]
        %v1327 = vld.sshfl [vmem:[#allocation1 + $0x28] sm:$0xff pattern:$0x75316420]
        %v1328 = vld.sshfl [vmem:[#allocation1 + $0x30] sm:$0xff pattern:$0x75316420]
        %v1329 = vld.sshfl [vmem:[#allocation1 + $0x38] sm:$0xff pattern:$0x75316420]
        %v1338 = vsel %vm1307, %v1322, %v1290
        %v1339 = vsel %vm1308, %v1323, %v1289
        %v1340 = vsel %vm1309, %v1324, %v1288
        %v1341 = vsel %vm1310, %v1325, %v1287
        %v1342 = vsel %vm1311, %v1326, %v1286
        %v1343 = vsel %vm1312, %v1327, %v1285
        %v1344 = vsel %vm1313, %v1328, %v1284
        %v1345 = vsel %vm1314, %v1329, %v1283
        %1346 = vst [vmem:[#allocation1] ss:$2 sm:$0xff] %v285
        %s1347 = scalar_lea.vmem [#allocation1], 16
        %1348 = vst [vmem:[%s1347] ss:$2 sm:$0xff] %v286
        %s1349 = scalar_lea.vmem [#allocation1], 32
        %1350 = vst [vmem:[%s1349] ss:$2 sm:$0xff] %v287
        %s1351 = scalar_lea.vmem [#allocation1], 48
        %1352 = vst [vmem:[%s1351] ss:$2 sm:$0xff] %v288
        %v1353 = vld.sshfl [vmem:[#allocation1] sm:$0xff pattern:$0x75316420]
        %v1354 = vld.sshfl [vmem:[#allocation1 + $0x8] sm:$0xff pattern:$0x75316420]
        %v1355 = vld.sshfl [vmem:[#allocation1 + $0x10] sm:$0xff pattern:$0x75316420]
        %v1356 = vld.sshfl [vmem:[#allocation1 + $0x18] sm:$0xff pattern:$0x75316420]
        %v1357 = vld.sshfl [vmem:[#allocation1 + $0x20] sm:$0xff pattern:$0x75316420]
        %v1358 = vld.sshfl [vmem:[#allocation1 + $0x28] sm:$0xff pattern:$0x75316420]
        %v1359 = vld.sshfl [vmem:[#allocation1 + $0x30] sm:$0xff pattern:$0x75316420]
        %v1360 = vld.sshfl [vmem:[#allocation1 + $0x38] sm:$0xff pattern:$0x75316420]
        %1369 = vrot.lane.b32.xlu0 %v1353, 127
        %v1370 = vpop.permute.xlu0 %1369
        %1371 = vrot.lane.b32.xlu0 %v1354, 127
        %v1372 = vpop.permute.xlu0 %1371
        %1373 = vrot.lane.b32.xlu0 %v1355, 127
        %v1374 = vpop.permute.xlu0 %1373
        %1375 = vrot.lane.b32.xlu0 %v1356, 127
        %v1376 = vpop.permute.xlu0 %1375
        %1377 = vrot.lane.b32.xlu0 %v1357, 127
        %v1378 = vpop.permute.xlu0 %1377
        %1379 = vrot.lane.b32.xlu0 %v1358, 127
        %v1380 = vpop.permute.xlu0 %1379
        %1381 = vrot.lane.b32.xlu0 %v1359, 127
        %v1382 = vpop.permute.xlu0 %1381
        %1383 = vrot.lane.b32.xlu0 %v1360, 127
        %v1384 = vpop.permute.xlu0 %1383
        %v1385 = vsel %vm547, %v1382, %v1384
        %v1386 = vsel %vm547, %v1380, %v1382
        %v1387 = vsel %vm547, %v1378, %v1380
        %v1388 = vsel %vm547, %v1376, %v1378
        %v1389 = vsel %vm547, %v1374, %v1376
        %v1390 = vsel %vm547, %v1372, %v1374
        %v1391 = vsel %vm547, %v1370, %v1372
        %v1392 = vsel %vm547, %v1384, %v1370
        %1393 = vst [vmem:[#allocation1] ss:$2 sm:$0xff] %v285
        %s1394 = scalar_lea.vmem [#allocation1], 16
        %1395 = vst [vmem:[%s1394] ss:$2 sm:$0xff] %v286
        %s1396 = scalar_lea.vmem [#allocation1], 32
        %1397 = vst [vmem:[%s1396] ss:$2 sm:$0xff] %v287
        %s1398 = scalar_lea.vmem [#allocation1], 48
        %1399 = vst [vmem:[%s1398] ss:$2 sm:$0xff] %v288
        %v1400 = vld.sshfl [vmem:[#allocation1] sm:$0xff pattern:$0x75316420]
        %v1401 = vld.sshfl [vmem:[#allocation1 + $0x8] sm:$0xff pattern:$0x75316420]
        %v1402 = vld.sshfl [vmem:[#allocation1 + $0x10] sm:$0xff pattern:$0x75316420]
        %v1403 = vld.sshfl [vmem:[#allocation1 + $0x18] sm:$0xff pattern:$0x75316420]
        %v1404 = vld.sshfl [vmem:[#allocation1 + $0x20] sm:$0xff pattern:$0x75316420]
        %v1405 = vld.sshfl [vmem:[#allocation1 + $0x28] sm:$0xff pattern:$0x75316420]
        %v1406 = vld.sshfl [vmem:[#allocation1 + $0x30] sm:$0xff pattern:$0x75316420]
        %v1407 = vld.sshfl [vmem:[#allocation1 + $0x38] sm:$0xff pattern:$0x75316420]
        %v1416 = vsel %vm574, %v1400, %v1391
        %v1417 = vsel %vm575, %v1401, %v1390
        %v1418 = vsel %vm576, %v1402, %v1389
        %v1419 = vsel %vm577, %v1403, %v1388
        %v1420 = vsel %vm578, %v1404, %v1387
        %v1421 = vsel %vm579, %v1405, %v1386
        %v1422 = vsel %vm580, %v1406, %v1385
        %v1423 = vsel %vm581, %v1407, %v1392
        %v1424 = vmul.f32 %v285, 0.5625
        %v1425 = vmul.f32 %v286, 0.5625
        %v1426 = vmul.f32 %v287, 0.5625
        %v1427 = vmul.f32 %v288, 0.5625
        %v1428 = vmul.f32 %v1157, 0.1875
        %v1429 = vmul.f32 %v1158, 0.1875
        %v1430 = vmul.f32 %v1159, 0.1875
        %v1431 = vmul.f32 %v1160, 0.1875
        %v1432 = vmul.f32 %v1161, 0.1875
        %v1433 = vmul.f32 %v1162, 0.1875
        %v1434 = vmul.f32 %v1163, 0.1875
        %v1435 = vmul.f32 %v1164, 0.1875
        %v1444 = vrot.slane %v1429, 4
        %v1445 = vrot.slane %v1431, 4
        %v1446 = vrot.slane %v1433, 4
        %v1447 = vrot.slane %v1435, 4
        %v1448 = vsel %vm319, %v1428, %v1444
        %v1449 = vsel %vm319, %v1430, %v1445
        %v1450 = vsel %vm319, %v1432, %v1446
        %v1451 = vsel %vm319, %v1434, %v1447
        %v1456 = vadd.f32 %v1424, %v1448
        %v1457 = vadd.f32 %v1425, %v1449
        %v1458 = vadd.f32 %v1426, %v1450
        %v1459 = vadd.f32 %v1427, %v1451
        %v1460 = vmul.f32 %v1338, 0.1875
        %v1461 = vmul.f32 %v1339, 0.1875
        %v1462 = vmul.f32 %v1340, 0.1875
        %v1463 = vmul.f32 %v1341, 0.1875
        %v1464 = vmul.f32 %v1342, 0.1875
        %v1465 = vmul.f32 %v1343, 0.1875
        %v1466 = vmul.f32 %v1344, 0.1875
        %v1467 = vmul.f32 %v1345, 0.1875
        %v1476 = vrot.slane %v1461, 4
        %v1477 = vrot.slane %v1463, 4
        %v1478 = vrot.slane %v1465, 4
        %v1479 = vrot.slane %v1467, 4
        %v1480 = vsel %vm319, %v1460, %v1476
        %v1481 = vsel %vm319, %v1462, %v1477
        %v1482 = vsel %vm319, %v1464, %v1478
        %v1483 = vsel %vm319, %v1466, %v1479
        %v1488 = vadd.f32 %v1456, %v1480
        %v1489 = vadd.f32 %v1457, %v1481
        %v1490 = vadd.f32 %v1458, %v1482
        %v1491 = vadd.f32 %v1459, %v1483
        %1492 = vrot.lane.b32.xlu0 %v1157, 1
        %v1493 = vpop.permute.xlu0 %1492
        %1494 = vrot.lane.b32.xlu0 %v1158, 1
        %v1495 = vpop.permute.xlu0 %1494
        %1496 = vrot.lane.b32.xlu0 %v1159, 1
        %v1497 = vpop.permute.xlu0 %1496
        %1498 = vrot.lane.b32.xlu0 %v1160, 1
        %v1499 = vpop.permute.xlu0 %1498
        %1500 = vrot.lane.b32.xlu0 %v1161, 1
        %v1501 = vpop.permute.xlu0 %1500
        %1502 = vrot.lane.b32.xlu0 %v1162, 1
        %v1503 = vpop.permute.xlu0 %1502
        %1504 = vrot.lane.b32.xlu0 %v1163, 1
        %v1505 = vpop.permute.xlu0 %1504
        %1506 = vrot.lane.b32.xlu0 %v1164, 1
        %v1507 = vpop.permute.xlu0 %1506
        %v1508 = vsel %vm1282, %v1505, %v1507
        %v1509 = vsel %vm1282, %v1503, %v1505
        %v1510 = vsel %vm1282, %v1501, %v1503
        %v1511 = vsel %vm1282, %v1499, %v1501
        %v1512 = vsel %vm1282, %v1497, %v1499
        %v1513 = vsel %vm1282, %v1495, %v1497
        %v1514 = vsel %vm1282, %v1493, %v1495
        %v1515 = vsel %vm1282, %v1507, %v1493
        %v1516 = vsel %vm1307, %v1157, %v1515
        %v1517 = vsel %vm1308, %v1158, %v1514
        %v1518 = vsel %vm1309, %v1159, %v1513
        %v1519 = vsel %vm1310, %v1160, %v1512
        %v1520 = vsel %vm1311, %v1161, %v1511
        %v1521 = vsel %vm1312, %v1162, %v1510
        %v1522 = vsel %vm1313, %v1163, %v1509
        %v1523 = vsel %vm1314, %v1164, %v1508
        %v1524 = vmul.f32 %v1516, 0.0625
        %v1525 = vmul.f32 %v1517, 0.0625
        %v1526 = vmul.f32 %v1518, 0.0625
        %v1527 = vmul.f32 %v1519, 0.0625
        %v1528 = vmul.f32 %v1520, 0.0625
        %v1529 = vmul.f32 %v1521, 0.0625
        %v1530 = vmul.f32 %v1522, 0.0625
        %v1531 = vmul.f32 %v1523, 0.0625
        %v1540 = vrot.slane %v1525, 4
        %v1541 = vrot.slane %v1527, 4
        %v1542 = vrot.slane %v1529, 4
        %v1543 = vrot.slane %v1531, 4
        %v1544 = vsel %vm319, %v1524, %v1540
        %v1545 = vsel %vm319, %v1526, %v1541
        %v1546 = vsel %vm319, %v1528, %v1542
        %v1547 = vsel %vm319, %v1530, %v1543
        %v1552 = vadd.f32 %v1488, %v1544
        %v1553 = vadd.f32 %v1489, %v1545
        %v1554 = vadd.f32 %v1490, %v1546
        %v1555 = vadd.f32 %v1491, %v1547
        %1560 = vst [vmem:[#allocation1] ss:$2 sm:$0xff] %v1552
        %s1561 = scalar_lea.vmem [#allocation1], 16
        %1562 = vst [vmem:[%s1561] ss:$2 sm:$0xff] %v1553
        %s1563 = scalar_lea.vmem [#allocation1], 32
        %1564 = vst [vmem:[%s1563] ss:$2 sm:$0xff] %v1554
        %s1565 = scalar_lea.vmem [#allocation1], 48
        %1566 = vst [vmem:[%s1565] ss:$2 sm:$0xff] %v1555
        %v1567 = vld.sshfl [vmem:[#allocation1] sm:$0xff pattern:$0x75316420]
        %v1568 = vld.sshfl [vmem:[#allocation1 + $0x8] sm:$0xff pattern:$0x75316420]
        %v1569 = vld.sshfl [vmem:[#allocation1 + $0x10] sm:$0xff pattern:$0x75316420]
        %v1570 = vld.sshfl [vmem:[#allocation1 + $0x18] sm:$0xff pattern:$0x75316420]
        %v1571 = vld.sshfl [vmem:[#allocation1 + $0x20] sm:$0xff pattern:$0x75316420]
        %v1572 = vld.sshfl [vmem:[#allocation1 + $0x28] sm:$0xff pattern:$0x75316420]
        %v1573 = vld.sshfl [vmem:[#allocation1 + $0x30] sm:$0xff pattern:$0x75316420]
        %v1574 = vld.sshfl [vmem:[#allocation1 + $0x38] sm:$0xff pattern:$0x75316420]
        %1583 = vst [vmem:[#allocation2 + $0x80] sm:$0xf] %v1567
        %1584 = vst [vmem:[#allocation2 + $0x88] sm:$0xf] %v1568
        %1585 = vst [vmem:[#allocation2 + $0x90] sm:$0xf] %v1569
        %1586 = vst [vmem:[#allocation2 + $0x98] sm:$0xf] %v1570
        %1587 = vst [vmem:[#allocation2 + $0xa0] sm:$0xf] %v1571
        %1588 = vst [vmem:[#allocation2 + $0xa8] sm:$0xf] %v1572
        %1589 = vst [vmem:[#allocation2 + $0xb0] sm:$0xf] %v1573
        %1590 = vst [vmem:[#allocation2 + $0xb8] sm:$0xf] %v1574
        %v1591 = vmul.f32 %v1416, 0.1875
        %v1592 = vmul.f32 %v1417, 0.1875
        %v1593 = vmul.f32 %v1418, 0.1875
        %v1594 = vmul.f32 %v1419, 0.1875
        %v1595 = vmul.f32 %v1420, 0.1875
        %v1596 = vmul.f32 %v1421, 0.1875
        %v1597 = vmul.f32 %v1422, 0.1875
        %v1598 = vmul.f32 %v1423, 0.1875
        %v1607 = vrot.slane %v1592, 4
        %v1608 = vrot.slane %v1594, 4
        %v1609 = vrot.slane %v1596, 4
        %v1610 = vrot.slane %v1598, 4
        %v1611 = vsel %vm319, %v1591, %v1607
        %v1612 = vsel %vm319, %v1593, %v1608
        %v1613 = vsel %vm319, %v1595, %v1609
        %v1614 = vsel %vm319, %v1597, %v1610
        %v1619 = vadd.f32 %v1456, %v1611
        %v1620 = vadd.f32 %v1457, %v1612
        %v1621 = vadd.f32 %v1458, %v1613
        %v1622 = vadd.f32 %v1459, %v1614
        %1623 = vrot.lane.b32.xlu0 %v1157, 127
        %v1624 = vpop.permute.xlu0 %1623
        %1625 = vrot.lane.b32.xlu0 %v1158, 127
        %v1626 = vpop.permute.xlu0 %1625
        %1627 = vrot.lane.b32.xlu0 %v1159, 127
        %v1628 = vpop.permute.xlu0 %1627
        %1629 = vrot.lane.b32.xlu0 %v1160, 127
        %v1630 = vpop.permute.xlu0 %1629
        %1631 = vrot.lane.b32.xlu0 %v1161, 127
        %v1632 = vpop.permute.xlu0 %1631
        %1633 = vrot.lane.b32.xlu0 %v1162, 127
        %v1634 = vpop.permute.xlu0 %1633
        %1635 = vrot.lane.b32.xlu0 %v1163, 127
        %v1636 = vpop.permute.xlu0 %1635
        %1637 = vrot.lane.b32.xlu0 %v1164, 127
        %v1638 = vpop.permute.xlu0 %1637
        %v1639 = vsel %vm547, %v1636, %v1638
        %v1640 = vsel %vm547, %v1634, %v1636
        %v1641 = vsel %vm547, %v1632, %v1634
        %v1642 = vsel %vm547, %v1630, %v1632
        %v1643 = vsel %vm547, %v1628, %v1630
        %v1644 = vsel %vm547, %v1626, %v1628
        %v1645 = vsel %vm547, %v1624, %v1626
        %v1646 = vsel %vm547, %v1638, %v1624
        %v1647 = vsel %vm574, %v1157, %v1645
        %v1648 = vsel %vm575, %v1158, %v1644
        %v1649 = vsel %vm576, %v1159, %v1643
        %v1650 = vsel %vm577, %v1160, %v1642
        %v1651 = vsel %vm578, %v1161, %v1641
        %v1652 = vsel %vm579, %v1162, %v1640
        %v1653 = vsel %vm580, %v1163, %v1639
        %v1654 = vsel %vm581, %v1164, %v1646
        %v1655 = vmul.f32 %v1647, 0.0625
        %v1656 = vmul.f32 %v1648, 0.0625
        %v1657 = vmul.f32 %v1649, 0.0625
        %v1658 = vmul.f32 %v1650, 0.0625
        %v1659 = vmul.f32 %v1651, 0.0625
        %v1660 = vmul.f32 %v1652, 0.0625
        %v1661 = vmul.f32 %v1653, 0.0625
        %v1662 = vmul.f32 %v1654, 0.0625
        %v1671 = vrot.slane %v1656, 4
        %v1672 = vrot.slane %v1658, 4
        %v1673 = vrot.slane %v1660, 4
        %v1674 = vrot.slane %v1662, 4
        %v1675 = vsel %vm319, %v1655, %v1671
        %v1676 = vsel %vm319, %v1657, %v1672
        %v1677 = vsel %vm319, %v1659, %v1673
        %v1678 = vsel %vm319, %v1661, %v1674
        %v1683 = vadd.f32 %v1619, %v1675
        %v1684 = vadd.f32 %v1620, %v1676
        %v1685 = vadd.f32 %v1621, %v1677
        %v1686 = vadd.f32 %v1622, %v1678
        %s1691 = scalar_lea.vmem [#allocation1], 1
        %1692 = vst [vmem:[%s1691] ss:$2 sm:$0xff] %v1683
        %s1693 = scalar_lea.vmem [#allocation1], 17
        %1694 = vst [vmem:[%s1693] ss:$2 sm:$0xff] %v1684
        %s1695 = scalar_lea.vmem [#allocation1], 33
        %1696 = vst [vmem:[%s1695] ss:$2 sm:$0xff] %v1685
        %s1697 = scalar_lea.vmem [#allocation1], 49
        %1698 = vst [vmem:[%s1697] ss:$2 sm:$0xff] %v1686
        %v1699 = vld.sshfl [vmem:[#allocation1] sm:$0xff pattern:$0x75316420]
        %v1700 = vld.sshfl [vmem:[#allocation1 + $0x8] sm:$0xff pattern:$0x75316420]
        %v1701 = vld.sshfl [vmem:[#allocation1 + $0x10] sm:$0xff pattern:$0x75316420]
        %v1702 = vld.sshfl [vmem:[#allocation1 + $0x18] sm:$0xff pattern:$0x75316420]
        %v1703 = vld.sshfl [vmem:[#allocation1 + $0x20] sm:$0xff pattern:$0x75316420]
        %v1704 = vld.sshfl [vmem:[#allocation1 + $0x28] sm:$0xff pattern:$0x75316420]
        %v1705 = vld.sshfl [vmem:[#allocation1 + $0x30] sm:$0xff pattern:$0x75316420]
        %v1706 = vld.sshfl [vmem:[#allocation1 + $0x38] sm:$0xff pattern:$0x75316420]
        %1715 = vst [vmem:[#allocation2 + $0x80] sm:$0xf0] %v1699
        %1716 = vst [vmem:[#allocation2 + $0x88] sm:$0xf0] %v1700
        %1717 = vst [vmem:[#allocation2 + $0x90] sm:$0xf0] %v1701
        %1718 = vst [vmem:[#allocation2 + $0x98] sm:$0xf0] %v1702
        %1719 = vst [vmem:[#allocation2 + $0xa0] sm:$0xf0] %v1703
        %1720 = vst [vmem:[#allocation2 + $0xa8] sm:$0xf0] %v1704
        %1721 = vst [vmem:[#allocation2 + $0xb0] sm:$0xf0] %v1705
        %1722 = vst [vmem:[#allocation2 + $0xb8] sm:$0xf0] %v1706
        %v1723 = vmul.f32 %v1235, 0.1875
        %v1724 = vmul.f32 %v1236, 0.1875
        %v1725 = vmul.f32 %v1237, 0.1875
        %v1726 = vmul.f32 %v1238, 0.1875
        %v1727 = vmul.f32 %v1239, 0.1875
        %v1728 = vmul.f32 %v1240, 0.1875
        %v1729 = vmul.f32 %v1241, 0.1875
        %v1730 = vmul.f32 %v1242, 0.1875
        %v1739 = vrot.slane %v1724, 4
        %v1740 = vrot.slane %v1726, 4
        %v1741 = vrot.slane %v1728, 4
        %v1742 = vrot.slane %v1730, 4
        %v1743 = vsel %vm319, %v1723, %v1739
        %v1744 = vsel %vm319, %v1725, %v1740
        %v1745 = vsel %vm319, %v1727, %v1741
        %v1746 = vsel %vm319, %v1729, %v1742
        %v1751 = vadd.f32 %v1424, %v1743
        %v1752 = vadd.f32 %v1425, %v1744
        %v1753 = vadd.f32 %v1426, %v1745
        %v1754 = vadd.f32 %v1427, %v1746
        %v1755 = vadd.f32 %v1751, %v1480
        %v1756 = vadd.f32 %v1752, %v1481
        %v1757 = vadd.f32 %v1753, %v1482
        %v1758 = vadd.f32 %v1754, %v1483
        %1759 = vrot.lane.b32.xlu0 %v1235, 1
        %v1760 = vpop.permute.xlu0 %1759
        %1761 = vrot.lane.b32.xlu0 %v1236, 1
        %v1762 = vpop.permute.xlu0 %1761
        %1763 = vrot.lane.b32.xlu0 %v1237, 1
        %v1764 = vpop.permute.xlu0 %1763
        %1765 = vrot.lane.b32.xlu0 %v1238, 1
        %v1766 = vpop.permute.xlu0 %1765
        %1767 = vrot.lane.b32.xlu0 %v1239, 1
        %v1768 = vpop.permute.xlu0 %1767
        %1769 = vrot.lane.b32.xlu0 %v1240, 1
        %v1770 = vpop.permute.xlu0 %1769
        %1771 = vrot.lane.b32.xlu0 %v1241, 1
        %v1772 = vpop.permute.xlu0 %1771
        %1773 = vrot.lane.b32.xlu0 %v1242, 1
        %v1774 = vpop.permute.xlu0 %1773
        %v1775 = vsel %vm1282, %v1772, %v1774
        %v1776 = vsel %vm1282, %v1770, %v1772
        %v1777 = vsel %vm1282, %v1768, %v1770
        %v1778 = vsel %vm1282, %v1766, %v1768
        %v1779 = vsel %vm1282, %v1764, %v1766
        %v1780 = vsel %vm1282, %v1762, %v1764
        %v1781 = vsel %vm1282, %v1760, %v1762
        %v1782 = vsel %vm1282, %v1774, %v1760
        %v1783 = vsel %vm1307, %v1235, %v1782
        %v1784 = vsel %vm1308, %v1236, %v1781
        %v1785 = vsel %vm1309, %v1237, %v1780
        %v1786 = vsel %vm1310, %v1238, %v1779
        %v1787 = vsel %vm1311, %v1239, %v1778
        %v1788 = vsel %vm1312, %v1240, %v1777
        %v1789 = vsel %vm1313, %v1241, %v1776
        %v1790 = vsel %vm1314, %v1242, %v1775
        %v1791 = vmul.f32 %v1783, 0.0625
        %v1792 = vmul.f32 %v1784, 0.0625
        %v1793 = vmul.f32 %v1785, 0.0625
        %v1794 = vmul.f32 %v1786, 0.0625
        %v1795 = vmul.f32 %v1787, 0.0625
        %v1796 = vmul.f32 %v1788, 0.0625
        %v1797 = vmul.f32 %v1789, 0.0625
        %v1798 = vmul.f32 %v1790, 0.0625
        %v1807 = vrot.slane %v1792, 4
        %v1808 = vrot.slane %v1794, 4
        %v1809 = vrot.slane %v1796, 4
        %v1810 = vrot.slane %v1798, 4
        %v1811 = vsel %vm319, %v1791, %v1807
        %v1812 = vsel %vm319, %v1793, %v1808
        %v1813 = vsel %vm319, %v1795, %v1809
        %v1814 = vsel %vm319, %v1797, %v1810
        %v1819 = vadd.f32 %v1755, %v1811
        %v1820 = vadd.f32 %v1756, %v1812
        %v1821 = vadd.f32 %v1757, %v1813
        %v1822 = vadd.f32 %v1758, %v1814
        %1827 = vst [vmem:[#allocation1] ss:$2 sm:$0xff] %v1819
        %s1828 = scalar_lea.vmem [#allocation1], 16
        %1829 = vst [vmem:[%s1828] ss:$2 sm:$0xff] %v1820
        %s1830 = scalar_lea.vmem [#allocation1], 32
        %1831 = vst [vmem:[%s1830] ss:$2 sm:$0xff] %v1821
        %s1832 = scalar_lea.vmem [#allocation1], 48
        %1833 = vst [vmem:[%s1832] ss:$2 sm:$0xff] %v1822
        %v1834 = vld.sshfl [vmem:[#allocation1] sm:$0xff pattern:$0x75316420]
        %v1835 = vld.sshfl [vmem:[#allocation1 + $0x8] sm:$0xff pattern:$0x75316420]
        %v1836 = vld.sshfl [vmem:[#allocation1 + $0x10] sm:$0xff pattern:$0x75316420]
        %v1837 = vld.sshfl [vmem:[#allocation1 + $0x18] sm:$0xff pattern:$0x75316420]
        %v1838 = vld.sshfl [vmem:[#allocation1 + $0x20] sm:$0xff pattern:$0x75316420]
        %v1839 = vld.sshfl [vmem:[#allocation1 + $0x28] sm:$0xff pattern:$0x75316420]
        %v1840 = vld.sshfl [vmem:[#allocation1 + $0x30] sm:$0xff pattern:$0x75316420]
        %v1841 = vld.sshfl [vmem:[#allocation1 + $0x38] sm:$0xff pattern:$0x75316420]
        %1850 = vst [vmem:[#allocation2 + $0xc0] sm:$0xf] %v1834
        %1851 = vst [vmem:[#allocation2 + $0xc8] sm:$0xf] %v1835
        %1852 = vst [vmem:[#allocation2 + $0xd0] sm:$0xf] %v1836
        %1853 = vst [vmem:[#allocation2 + $0xd8] sm:$0xf] %v1837
        %1854 = vst [vmem:[#allocation2 + $0xe0] sm:$0xf] %v1838
        %1855 = vst [vmem:[#allocation2 + $0xe8] sm:$0xf] %v1839
        %1856 = vst [vmem:[#allocation2 + $0xf0] sm:$0xf] %v1840
        %1857 = vst [vmem:[#allocation2 + $0xf8] sm:$0xf] %v1841
        %v1858 = vadd.f32 %v1751, %v1611
        %v1859 = vadd.f32 %v1752, %v1612
        %v1860 = vadd.f32 %v1753, %v1613
        %v1861 = vadd.f32 %v1754, %v1614
        %1862 = vrot.lane.b32.xlu0 %v1235, 127
        %v1863 = vpop.permute.xlu0 %1862
        %1864 = vrot.lane.b32.xlu0 %v1236, 127
        %v1865 = vpop.permute.xlu0 %1864
        %1866 = vrot.lane.b32.xlu0 %v1237, 127
        %v1867 = vpop.permute.xlu0 %1866
        %1868 = vrot.lane.b32.xlu0 %v1238, 127
        %v1869 = vpop.permute.xlu0 %1868
        %1870 = vrot.lane.b32.xlu0 %v1239, 127
        %v1871 = vpop.permute.xlu0 %1870
        %1872 = vrot.lane.b32.xlu0 %v1240, 127
        %v1873 = vpop.permute.xlu0 %1872
        %1874 = vrot.lane.b32.xlu0 %v1241, 127
        %v1875 = vpop.permute.xlu0 %1874
        %1876 = vrot.lane.b32.xlu0 %v1242, 127
        %v1877 = vpop.permute.xlu0 %1876
        %v1878 = vsel %vm547, %v1875, %v1877
        %v1879 = vsel %vm547, %v1873, %v1875
        %v1880 = vsel %vm547, %v1871, %v1873
        %v1881 = vsel %vm547, %v1869, %v1871
        %v1882 = vsel %vm547, %v1867, %v1869
        %v1883 = vsel %vm547, %v1865, %v1867
        %v1884 = vsel %vm547, %v1863, %v1865
        %v1885 = vsel %vm547, %v1877, %v1863
        %v1886 = vsel %vm574, %v1235, %v1884
        %v1887 = vsel %vm575, %v1236, %v1883
        %v1888 = vsel %vm576, %v1237, %v1882
        %v1889 = vsel %vm577, %v1238, %v1881
        %v1890 = vsel %vm578, %v1239, %v1880
        %v1891 = vsel %vm579, %v1240, %v1879
        %v1892 = vsel %vm580, %v1241, %v1878
        %v1893 = vsel %vm581, %v1242, %v1885
        %v1894 = vmul.f32 %v1886, 0.0625
        %v1895 = vmul.f32 %v1887, 0.0625
        %v1896 = vmul.f32 %v1888, 0.0625
        %v1897 = vmul.f32 %v1889, 0.0625
        %v1898 = vmul.f32 %v1890, 0.0625
        %v1899 = vmul.f32 %v1891, 0.0625
        %v1900 = vmul.f32 %v1892, 0.0625
        %v1901 = vmul.f32 %v1893, 0.0625
        %v1910 = vrot.slane %v1895, 4
        %v1911 = vrot.slane %v1897, 4
        %v1912 = vrot.slane %v1899, 4
        %v1913 = vrot.slane %v1901, 4
        %v1914 = vsel %vm319, %v1894, %v1910
        %v1915 = vsel %vm319, %v1896, %v1911
        %v1916 = vsel %vm319, %v1898, %v1912
        %v1917 = vsel %vm319, %v1900, %v1913
        %v1922 = vadd.f32 %v1858, %v1914
        %v1923 = vadd.f32 %v1859, %v1915
        %v1924 = vadd.f32 %v1860, %v1916
        %v1925 = vadd.f32 %v1861, %v1917
        %s1930 = scalar_lea.vmem [#allocation1], 1
        %1931 = vst [vmem:[%s1930] ss:$2 sm:$0xff] %v1922
        %s1932 = scalar_lea.vmem [#allocation1], 17
        %1933 = vst [vmem:[%s1932] ss:$2 sm:$0xff] %v1923
        %s1934 = scalar_lea.vmem [#allocation1], 33
        %1935 = vst [vmem:[%s1934] ss:$2 sm:$0xff] %v1924
        %s1936 = scalar_lea.vmem [#allocation1], 49
        %1937 = vst [vmem:[%s1936] ss:$2 sm:$0xff] %v1925
        %v1938 = vld.sshfl [vmem:[#allocation1] sm:$0xff pattern:$0x75316420]
        %v1939 = vld.sshfl [vmem:[#allocation1 + $0x8] sm:$0xff pattern:$0x75316420]
        %v1940 = vld.sshfl [vmem:[#allocation1 + $0x10] sm:$0xff pattern:$0x75316420]
        %v1941 = vld.sshfl [vmem:[#allocation1 + $0x18] sm:$0xff pattern:$0x75316420]
        %v1942 = vld.sshfl [vmem:[#allocation1 + $0x20] sm:$0xff pattern:$0x75316420]
        %v1943 = vld.sshfl [vmem:[#allocation1 + $0x28] sm:$0xff pattern:$0x75316420]
        %v1944 = vld.sshfl [vmem:[#allocation1 + $0x30] sm:$0xff pattern:$0x75316420]
        %v1945 = vld.sshfl [vmem:[#allocation1 + $0x38] sm:$0xff pattern:$0x75316420]
        %1954 = vst [vmem:[#allocation2 + $0xc0] sm:$0xf0] %v1938
        %1955 = vst [vmem:[#allocation2 + $0xc8] sm:$0xf0] %v1939
        %1956 = vst [vmem:[#allocation2 + $0xd0] sm:$0xf0] %v1940
        %1957 = vst [vmem:[#allocation2 + $0xd8] sm:$0xf0] %v1941
        %1958 = vst [vmem:[#allocation2 + $0xe0] sm:$0xf0] %v1942
        %1959 = vst [vmem:[#allocation2 + $0xe8] sm:$0xf0] %v1943
        %1960 = vst [vmem:[#allocation2 + $0xf0] sm:$0xf0] %v1944
        %1961 = vst [vmem:[#allocation2 + $0xf8] sm:$0xf0] %v1945
        %v1962 = vld [vmem:[%s5] sm:$0xff]
        %v1963 = vld [vmem:[#allocation2] sm:$0xff]
        %v1964 = vld [vmem:[#allocation2 + $0x8] sm:$0xff]
        %v1965 = vld [vmem:[#allocation2 + $0x10] sm:$0xff]
        %v1966 = vld [vmem:[#allocation2 + $0x18] sm:$0xff]
        %v1967 = vld [vmem:[#allocation2 + $0x20] sm:$0xff]
        %v1968 = vld [vmem:[#allocation2 + $0x28] sm:$0xff]
        %v1969 = vld [vmem:[#allocation2 + $0x30] sm:$0xff]
        %v1970 = vld [vmem:[#allocation2 + $0x38] sm:$0xff]
        %v1971 = vld [vmem:[#allocation2 + $0x40] sm:$0xff]
        %v1972 = vld [vmem:[#allocation2 + $0x48] sm:$0xff]
        %v1973 = vld [vmem:[#allocation2 + $0x50] sm:$0xff]
        %v1974 = vld [vmem:[#allocation2 + $0x58] sm:$0xff]
        %v1975 = vld [vmem:[#allocation2 + $0x60] sm:$0xff]
        %v1976 = vld [vmem:[#allocation2 + $0x68] sm:$0xff]
        %v1977 = vld [vmem:[#allocation2 + $0x70] sm:$0xff]
        %v1978 = vld [vmem:[#allocation2 + $0x78] sm:$0xff]
        %v1979 = vld [vmem:[#allocation2 + $0x80] sm:$0xff]
        %v1980 = vld [vmem:[#allocation2 + $0x88] sm:$0xff]
        %v1981 = vld [vmem:[#allocation2 + $0x90] sm:$0xff]
        %v1982 = vld [vmem:[#allocation2 + $0x98] sm:$0xff]
        %v1983 = vld [vmem:[#allocation2 + $0xa0] sm:$0xff]
        %v1984 = vld [vmem:[#allocation2 + $0xa8] sm:$0xff]
        %v1985 = vld [vmem:[#allocation2 + $0xb0] sm:$0xff]
        %v1986 = vld [vmem:[#allocation2 + $0xb8] sm:$0xff]
        %v1987 = vld [vmem:[#allocation2 + $0xc0] sm:$0xff]
        %v1988 = vld [vmem:[#allocation2 + $0xc8] sm:$0xff]
        %v1989 = vld [vmem:[#allocation2 + $0xd0] sm:$0xff]
        %v1990 = vld [vmem:[#allocation2 + $0xd8] sm:$0xff]
        %v1991 = vld [vmem:[#allocation2 + $0xe0] sm:$0xff]
        %v1992 = vld [vmem:[#allocation2 + $0xe8] sm:$0xff]
        %v1993 = vld [vmem:[#allocation2 + $0xf0] sm:$0xff]
        %v1994 = vld [vmem:[#allocation2 + $0xf8] sm:$0xff]
        %vm1995 = vcmask 261120
        %v1997 = vsel %vm1995, %v1962, 0
        %1999 = vmatpush.msra.mxu0 0.0
        %2000 = vmatpush.msra.mxu0 0.0
        %2001 = vmatpush.msra.mxu0 0.0
        %2002 = vmatpush.msra.mxu0 0.0
        %2003 = vmatpush.msra.mxu0 0.0
        %2004 = vmatpush.msra.mxu0 0.0
        %2005 = vmatpush.msra.mxu0 0.0
        %2006 = vmatpush.msra.mxu0 0.0
        %2007 = vmatpush.msra.mxu0 0.0
        %2008 = vmatpush.msra.mxu0 0.0
        %2009 = vmatpush.msra.mxu0 0.0
        %2010 = vmatpush.msra.mxu0 0.0
        %2011 = vmatpush.msra.mxu0 %v1987
        %2012 = vmatpush.msra.mxu0 %v1979
        %2013 = vmatpush.msra.mxu0 %v1971
        %2014 = vmatpush.msra.mxu0 %v1963
        %2015 = vmatmul.f32.gmra.mxu0 %v1997
        %v2016 = vpop.f32.mrf.mxu0
        %v2017 = vadd.f32 0.0, %v2016
        %2018 = vdwg.mxu0
        %2019 = vmatpush.msra.mxu0 0.0
        %2020 = vmatpush.msra.mxu0 0.0
        %2021 = vmatpush.msra.mxu0 0.0
        %2022 = vmatpush.msra.mxu0 0.0
        %2023 = vmatpush.msra.mxu0 0.0
        %2024 = vmatpush.msra.mxu0 0.0
        %2025 = vmatpush.msra.mxu0 0.0
        %2026 = vmatpush.msra.mxu0 0.0
        %2027 = vmatpush.msra.mxu0 0.0
        %2028 = vmatpush.msra.mxu0 0.0
        %2029 = vmatpush.msra.mxu0 0.0
        %2030 = vmatpush.msra.mxu0 0.0
        %2031 = vmatpush.msra.mxu0 %v1988
        %2032 = vmatpush.msra.mxu0 %v1980
        %2033 = vmatpush.msra.mxu0 %v1972
        %2034 = vmatpush.msra.mxu0 %v1964
        %2035 = vmatmul.f32.gmra.mxu0 %v1997
        %v2036 = vpop.f32.mrf.mxu0
        %v2037 = vadd.f32 0.0, %v2036
        %2038 = vdwg.mxu0
        %2039 = vmatpush.msra.mxu0 0.0
        %2040 = vmatpush.msra.mxu0 0.0
        %2041 = vmatpush.msra.mxu0 0.0
        %2042 = vmatpush.msra.mxu0 0.0
        %2043 = vmatpush.msra.mxu0 0.0
        %2044 = vmatpush.msra.mxu0 0.0
        %2045 = vmatpush.msra.mxu0 0.0
        %2046 = vmatpush.msra.mxu0 0.0
        %2047 = vmatpush.msra.mxu0 0.0
        %2048 = vmatpush.msra.mxu0 0.0
        %2049 = vmatpush.msra.mxu0 0.0
        %2050 = vmatpush.msra.mxu0 0.0
        %2051 = vmatpush.msra.mxu0 %v1989
        %2052 = vmatpush.msra.mxu0 %v1981
        %2053 = vmatpush.msra.mxu0 %v1973
        %2054 = vmatpush.msra.mxu0 %v1965
        %2055 = vmatmul.f32.gmra.mxu0 %v1997
        %v2056 = vpop.f32.mrf.mxu0
        %v2057 = vadd.f32 0.0, %v2056
        %2058 = vdwg.mxu0
        %2059 = vmatpush.msra.mxu0 0.0
        %2060 = vmatpush.msra.mxu0 0.0
        %2061 = vmatpush.msra.mxu0 0.0
        %2062 = vmatpush.msra.mxu0 0.0
        %2063 = vmatpush.msra.mxu0 0.0
        %2064 = vmatpush.msra.mxu0 0.0
        %2065 = vmatpush.msra.mxu0 0.0
        %2066 = vmatpush.msra.mxu0 0.0
        %2067 = vmatpush.msra.mxu0 0.0
        %2068 = vmatpush.msra.mxu0 0.0
        %2069 = vmatpush.msra.mxu0 0.0
        %2070 = vmatpush.msra.mxu0 0.0
        %2071 = vmatpush.msra.mxu0 %v1990
        %2072 = vmatpush.msra.mxu0 %v1982
        %2073 = vmatpush.msra.mxu0 %v1974
        %2074 = vmatpush.msra.mxu0 %v1966
        %2075 = vmatmul.f32.gmra.mxu0 %v1997
        %v2076 = vpop.f32.mrf.mxu0
        %v2077 = vadd.f32 0.0, %v2076
        %2078 = vdwg.mxu0
        %2079 = vmatpush.msra.mxu0 0.0
        %2080 = vmatpush.msra.mxu0 0.0
        %2081 = vmatpush.msra.mxu0 0.0
        %2082 = vmatpush.msra.mxu0 0.0
        %2083 = vmatpush.msra.mxu0 0.0
        %2084 = vmatpush.msra.mxu0 0.0
        %2085 = vmatpush.msra.mxu0 0.0
        %2086 = vmatpush.msra.mxu0 0.0
        %2087 = vmatpush.msra.mxu0 0.0
        %2088 = vmatpush.msra.mxu0 0.0
        %2089 = vmatpush.msra.mxu0 0.0
        %2090 = vmatpush.msra.mxu0 0.0
        %2091 = vmatpush.msra.mxu0 %v1991
        %2092 = vmatpush.msra.mxu0 %v1983
        %2093 = vmatpush.msra.mxu0 %v1975
        %2094 = vmatpush.msra.mxu0 %v1967
        %2095 = vmatmul.f32.gmra.mxu0 %v1997
        %v2096 = vpop.f32.mrf.mxu0
        %v2097 = vadd.f32 0.0, %v2096
        %2098 = vdwg.mxu0
        %2099 = vmatpush.msra.mxu0 0.0
        %2100 = vmatpush.msra.mxu0 0.0
        %2101 = vmatpush.msra.mxu0 0.0
        %2102 = vmatpush.msra.mxu0 0.0
        %2103 = vmatpush.msra.mxu0 0.0
        %2104 = vmatpush.msra.mxu0 0.0
        %2105 = vmatpush.msra.mxu0 0.0
        %2106 = vmatpush.msra.mxu0 0.0
        %2107 = vmatpush.msra.mxu0 0.0
        %2108 = vmatpush.msra.mxu0 0.0
        %2109 = vmatpush.msra.mxu0 0.0
        %2110 = vmatpush.msra.mxu0 0.0
        %2111 = vmatpush.msra.mxu0 %v1992
        %2112 = vmatpush.msra.mxu0 %v1984
        %2113 = vmatpush.msra.mxu0 %v1976
        %2114 = vmatpush.msra.mxu0 %v1968
        %2115 = vmatmul.f32.gmra.mxu0 %v1997
        %v2116 = vpop.f32.mrf.mxu0
        %v2117 = vadd.f32 0.0, %v2116
        %2118 = vdwg.mxu0
        %2119 = vmatpush.msra.mxu0 0.0
        %2120 = vmatpush.msra.mxu0 0.0
        %2121 = vmatpush.msra.mxu0 0.0
        %2122 = vmatpush.msra.mxu0 0.0
        %2123 = vmatpush.msra.mxu0 0.0
        %2124 = vmatpush.msra.mxu0 0.0
        %2125 = vmatpush.msra.mxu0 0.0
        %2126 = vmatpush.msra.mxu0 0.0
        %2127 = vmatpush.msra.mxu0 0.0
        %2128 = vmatpush.msra.mxu0 0.0
        %2129 = vmatpush.msra.mxu0 0.0
        %2130 = vmatpush.msra.mxu0 0.0
        %2131 = vmatpush.msra.mxu0 %v1993
        %2132 = vmatpush.msra.mxu0 %v1985
        %2133 = vmatpush.msra.mxu0 %v1977
        %2134 = vmatpush.msra.mxu0 %v1969
        %2135 = vmatmul.f32.gmra.mxu0 %v1997
        %v2136 = vpop.f32.mrf.mxu0
        %v2137 = vadd.f32 0.0, %v2136
        %2138 = vdwg.mxu0
        %2139 = vmatpush.msra.mxu0 0.0
        %2140 = vmatpush.msra.mxu0 0.0
        %2141 = vmatpush.msra.mxu0 0.0
        %2142 = vmatpush.msra.mxu0 0.0
        %2143 = vmatpush.msra.mxu0 0.0
        %2144 = vmatpush.msra.mxu0 0.0
        %2145 = vmatpush.msra.mxu0 0.0
        %2146 = vmatpush.msra.mxu0 0.0
        %2147 = vmatpush.msra.mxu0 0.0
        %2148 = vmatpush.msra.mxu0 0.0
        %2149 = vmatpush.msra.mxu0 0.0
        %2150 = vmatpush.msra.mxu0 0.0
        %2151 = vmatpush.msra.mxu0 %v1994
        %2152 = vmatpush.msra.mxu0 %v1986
        %2153 = vmatpush.msra.mxu0 %v1978
        %2154 = vmatpush.msra.mxu0 %v1970
        %2155 = vmatmul.f32.gmra.mxu0 %v1997
        %v2156 = vpop.f32.mrf.mxu0
        %v2157 = vadd.f32 0.0, %v2156
        %2158 = vdwg.mxu0
        %v2159 = vpack.c.bf16 %v2037, %v2017
        %v2160 = vpack.c.bf16 %v2077, %v2057
        %v2161 = vpack.c.bf16 %v2117, %v2097
        %v2162 = vpack.c.bf16 %v2157, %v2137
        %2163 = vst [vmem:[%s280] sm:$0xff] %v2159
        %2164 = vst [vmem:[%s280 + $0x8] sm:$0xff] %v2160
        %2165 = vst [vmem:[%s280 + $0x10] sm:$0xff] %v2161
        %2166 = vst [vmem:[%s280 + $0x18] sm:$0xff] %v2162
        %p2167 = scmp.lt.s32.totalorder %s19, 1
        %s2168 = scalar_select %p2167, %s19, 1
        %s2169 = smul.addr %s2168, 8
        %s2170 = smul.addr %s2169, 4
        %s2171 = scalar_lea.vmem %s6, %s2170
        // Predicated region
        $region53: #{upsample_forward.3} parent=43 // pred_check
          %p2172 = pneg %p168
        $region54: #{upsample_forward.3} parent=43 // pred_check_branch
          %2174 = sbr.rel (%p2172) target = $region56
        $region55: #{upsample_forward.3} parent=43 // pred_region
          _
        $region56: #{upsample_forward.3} parent=43 // pred_fallthru
          _
      $region44: #{upsample_forward.3} parent=5 // pred_fallthru
        _
      %p2175 = scmp.le.s32.totalorder 2, %s14
      // Predicated region
      $region57: #{upsample_forward.3} parent=5 // pred_check
        %p2176 = pneg %p2175
      $region58: #{upsample_forward.3} parent=5 // pred_check_branch
        %2178 = sbr.rel (%p2176) target = $region60
      $region59: #{upsample_forward.3} parent=5 // pred_region
        %s2179 = ssub.s32 %s14, 2
        // Predicated region
        $region61: #{upsample_forward.3} parent=59 // pred_check
          %p2180 = pneg %p174
        $region62: #{upsample_forward.3} parent=59 // pred_check_branch
          %2182 = sbr.rel (%p2180) target = $region64
        $region63: #{upsample_forward.3} parent=59 // pred_region
          %p2183 = scmp.lt.s32.totalorder %s20, 1
          %s2184 = scalar_select %p2183, %s20, 1
          %s2185 = smul.addr %s2184, 8
          %s2186 = smul.addr %s2185, 4
          %s2187 = scalar_lea.vmem %s6, %s2186
        $region64: #{upsample_forward.3} parent=59 // pred_fallthru
          _
      $region60: #{upsample_forward.3} parent=5 // pred_fallthru
        _
    $region6: #{upsample_forward.3} parent=1 // loop_footer
      %s18 = sadd.s32 1, %s14
    $region7: #{upsample_forward.3} parent=1 // loop_footer_branch
      %13 = sbr.rel target = $region3
    $region8: #{upsample_forward.3} parent=1 // loop_exit
      _
    %2188 = vsyncpa [#allocation4], 1
    %s2189 = scalar_lea.sflag [#allocation4], 1
    %2190 = vsyncpa %s2189, 1
    %2191 = vsyncpa [#allocation5], 1
    %s2192 = scalar_lea.sflag [#allocation5], 1
    %2193 = vsyncpa %s2192, 1

</llo_original>
